<compile_context>
chip_gen: v7x
topology: tpu7x:2x2x1
jax: 0.10.0
libtpu: 0.0.40
codegen_flags: <defaults>
</compile_context>

<pallas_src>
import numpy as np
import jax
import jax.numpy as jnp
from jax.experimental import pallas as pl
from jax.experimental.pallas import tpu as pltpu


def _round_up(x, m):
    return ((x + m - 1) // m) * m


# ---------------------------------------------------------------------------
# Parameter construction (mirrors Residual.__init__ / initialize_NN / masks)
# ---------------------------------------------------------------------------
def build_residual_params(layers_in, key):
    """Returns stacked (Ws, bs, Ms), each with leading dim = num_Layers - 1."""
    Layers = list(layers_in)
    Layers.insert(0, layers_in[0])               # self.Layers.insert(0, Layers[0])
    num_Layers = len(Layers)
    width = [Layers[0]] + [int(2 ** (i - 1) * Layers[i]) for i in range(1, num_Layers)]
    D = Layers[0]
    assert all(w == D for w in width), "widths must stay constant for the residual add"

    def xavier(k, shape):
        fan_in, fan_out = shape
        bound = np.sqrt(6.0 / (fan_in + fan_out))
        return jax.random.uniform(k, shape, jnp.float32, -bound, bound)

    keys = jax.random.split(key, 64)
    kidx = 0

    weights, biases = [], []

    # layer 0: dense xavier (Layers[0], width[1])
    w0 = xavier(keys[kidx], (Layers[0], width[1])); kidx += 1
    weights.append(np.asarray(w0))
    biases.append(np.zeros((width[1],), np.float32))

    # layers 1 .. num_Layers-2: block-structured weights
    for l in range(1, num_Layers - 1):
        tempw = np.zeros((width[l], width[l + 1]), np.float32)
        for i in range(int(2 ** l)):
            w2 = np.asarray(xavier(keys[kidx], (Layers[l], Layers[l + 1]))); kidx += 1
            row = i // 2
            tempw[row * Layers[l]:(row + 1) * Layers[l],
                  i * Layers[l + 1]:(i + 1) * Layers[l + 1]] = w2
        weights.append(tempw)
        biases.append(np.zeros((width[l + 1],), np.float32))

    # masks for l in [2, num_Layers-2]  (block-diagonal ones)
    masks_by_layer = {}
    for l in range(2, num_Layers - 1):
        num_blocks = int(2 ** (l - 1))
        b1 = width[l] // num_blocks
        b2 = 2 * Layers[l + 1]
        m = np.zeros((width[l], width[l + 1]), np.float32)
        for i in range(num_blocks):
            m[i * b1:(i + 1) * b1, i * b2:(i + 1) * b2] = 1.0
        masks_by_layer[l] = m

    # full per-layer mask array (ones where no mask is applied in forward)
    masks = []
    for l in range(num_Layers - 1):
        masks.append(masks_by_layer.get(l, np.ones((width[l], width[l + 1]), np.float32)))

    Ws = jnp.asarray(np.stack(weights, axis=0))   # (nL, D, D)
    bs = jnp.asarray(np.stack(biases, axis=0))    # (nL, D)
    Ms = jnp.asarray(np.stack(masks, axis=0))     # (nL, D, D)
    return Ws, bs, Ms


# ---------------------------------------------------------------------------
# Pallas kernel: full MLP + residual for one (tm_p, 128) packed batch tile.
# ---------------------------------------------------------------------------
def residual_kernel(x_ref, w_ref, b_ref, o_ref):
    # x_ref: (tm_p, 128) packed batch tile (8 samples of width D=16 per row).
    # w_ref: (nL, 128, 128) block-diagonal kron(I_8, W_l * M_l), grid-invariant.
    # b_ref: (nL, 1, 128) biases tiled 8x, grid-invariant.
    X = x_ref[...]
    nL = w_ref.shape[0]                      # static: num_Layers - 1

    H = X
    for l in range(nL):                      # small, unrolled at trace time (keep it so)
        # Static per-layer ref indexing: only one 128x128 slab live at a time.
        H = jnp.dot(H, w_ref[l], preferred_element_type=jnp.float32) + b_ref[l]
        if (l < 2) or (l != nL - 1):         # exact PyTorch sin placement
            H = jnp.sin(H)
    o_ref[...] = jnp.sin(H + X).astype(o_ref.dtype)   # residual + final sin


def residual_forward(X, Ws, bs, Ms, *, max_tile_rows=4096):
    """Fused BsPINN Residual forward with lane-dense (packed) layout."""
    N, D = X.shape
    nL = Ws.shape[0]
    pack = max(1, 128 // D)              # samples packed per vreg row (8 for D=16)
    Dp = pack * D                        # lane-dense width (128 for D=16)

    # --- wrapper-side (grid-invariant) preprocessing -----------------------
    Wf = Ws * Ms                                            # fuse mask once
    eye = jnp.eye(pack, dtype=Wf.dtype)
    Wblk = jnp.stack([jnp.kron(eye, Wf[l]) for l in range(nL)], axis=0)  # (nL,Dp,Dp)
    bblk = jnp.tile(bs, (1, pack)).reshape(nL, 1, Dp)                    # (nL,1,Dp)

    # --- adaptive batch tiling over packed rows -----------------------------
    rows = pl.cdiv(N, pack)              # packed rows needed
    # Aim for ~2 fat grid steps (so both v7x TensorCores get work), tile capped
    # at max_tile_rows (4096 rows * 128 lanes * 4 B = 2 MiB per tile).
    tm_p = min(max_tile_rows, max(8, _round_up(pl.cdiv(rows, 2), 8)))
    num_tiles = pl.cdiv(rows, tm_p)
    rows_p = num_tiles * tm_p
    Np = rows_p * pack

    Xp = X if Np == N else jnp.pad(X, ((0, Np - N), (0, 0)))
    Xr = Xp.reshape(rows_p, Dp)          # zero-copy packed (row-major) view

    # --- VMEM budget from the real post-layout footprint -------------------
    itemsize = 4
    tile_bytes = tm_p * Dp * itemsize
    param_bytes = nL * (Dp * Dp + Dp) * itemsize
    footprint = 2 * 2 * tile_bytes + 2 * param_bytes   # dbl-buffered in/out + params
    vmem_limit = int(min(max(2 * footprint + (4 << 20), 8 << 20), 32 << 20))

    out = pl.pallas_call(
        residual_kernel,
        out_shape=jax.ShapeDtypeStruct((rows_p, Dp), X.dtype),
        grid_spec=pltpu.PrefetchScalarGridSpec(
            num_scalar_prefetch=0,
            grid=(num_tiles,),
            in_specs=[
                pl.BlockSpec((tm_p, Dp), lambda i: (i, 0)),        # packed X tile
                pl.BlockSpec((nL, Dp, Dp), lambda i: (0, 0, 0)),   # block-diag weights (invariant)
                pl.BlockSpec((nL, 1, Dp), lambda i: (0, 0, 0)),    # tiled biases (invariant)
            ],
            out_specs=pl.BlockSpec((tm_p, Dp), lambda i: (i, 0)),  # lane-dense stores
        ),
        compiler_params=pltpu.CompilerParams(
            dimension_semantics=("parallel",),     # megacore-shardable batch axis
            vmem_limit_bytes=vmem_limit),
    )(Xr, Wblk, bblk)

    out = out.reshape(Np, D)
    return out[:N] if Np != N else out


# ---------------------------------------------------------------------------
# Pure-JAX reference (mirrors Residual.forward exactly, incl. sin placement)
# ---------------------------------------------------------------------------
def residual_forward_ref(X, Ws, bs, Ms):
    H = X
    nL = Ws.shape[0]
    for l in range(nL):
        H = jnp.dot(H, Ws[l] * Ms[l],
                    precision=jax.lax.Precision.HIGHEST) + bs[l][None, :]
        if (l < 2) or (l != nL - 1):
            H = jnp.sin(H)
    return jnp.sin(H + X)


if __name__ == "__main__":
    # BsPINN-style layer list: widths halve so the binary-block width stays = 16
    Layers = [16, 8, 4, 2]
    D = Layers[0]

    key = jax.random.PRNGKey(0)
    kx, kp = jax.random.split(key)
    Ws, bs, Ms = build_residual_params(Layers, kp)

    # Case 1: N a multiple of 8 (clean zero-copy packed reshape, 2 grid steps)
    N = 1024
    X = jax.random.normal(kx, (N, D), jnp.float32)
    out = jax.block_until_ready(residual_forward(X, Ws, bs, Ms))
    ref = residual_forward_ref(X, Ws, bs, Ms)
    assert out.shape == (N, D) and out.dtype == jnp.float32
    np.testing.assert_allclose(np.asarray(out), np.asarray(ref), atol=1e-4, rtol=1e-4)

    # Case 2: ragged batch NOT a multiple of 8 (exercises pad + packed slice path)
    N2 = 1003
    X2 = X[:N2]
    out2 = jax.block_until_ready(residual_forward(X2, Ws, bs, Ms))
    ref2 = residual_forward_ref(X2, Ws, bs, Ms)
    assert out2.shape == (N2, D)
    np.testing.assert_allclose(np.asarray(out2), np.asarray(ref2), atol=1e-4, rtol=1e-4)

    print("KERNEL_OK")
</pallas_src>

<mosaic_0001>
module attributes {stable_mosaic.version = 11 : i64} {
  func.func @residual_kernel(%arg0: i32, %arg1: memref<64x128xf32, #tpu.memory_space<vmem>>, %arg2: memref<4x128x128xf32, #tpu.memory_space<vmem>>, %arg3: memref<4x1x128xf32, #tpu.memory_space<vmem>>, %arg4: memref<64x128xf32, #tpu.memory_space<vmem>>) attributes {dimension_semantics = [#tpu.dimension_semantics<parallel>], iteration_bounds = array<i64: 2>, scalar_prefetch = 0 : i64, scratch_operands = 0 : i64, tpu.core_type = #tpu.core_type<tc>, window_params = [{transform_indices = @transform_0, window_bounds = array<i64: 64, 128>}, {pipeline_mode = #tpu.pipeline_mode<synchronous>, transform_indices = @transform_1, window_bounds = array<i64: 4, 128, 128>}, {pipeline_mode = #tpu.pipeline_mode<synchronous>, transform_indices = @transform_2, window_bounds = array<i64: 4, 1, 128>}, {transform_indices = @transform_3, window_bounds = array<i64: 64, 128>}]} {
    %c0 = arith.constant 0 : index
    %c0_0 = arith.constant 0 : index
    %0 = vector.load %arg1[%c0, %c0_0] : memref<64x128xf32, #tpu.memory_space<vmem>>, vector<64x128xf32>
    %c0_1 = arith.constant 0 : index
    %c0_2 = arith.constant 0 : index
    %c0_3 = arith.constant 0 : index
    %1 = vector.load %arg2[%c0_1, %c0_2, %c0_3] : memref<4x128x128xf32, #tpu.memory_space<vmem>>, vector<1x128x128xf32>
    %2 = vector.shape_cast %1 : vector<1x128x128xf32> to vector<128x128xf32>
    %cst = arith.constant dense<0.000000e+00> : vector<64x128xf32>
    %3 = tpu.matmul %0, %2, %cst {dimension_numbers = #tpu.dot_dimension_numbers<[1], [0], [0], [1], [0, 0, 1, 1], [], []>} : vector<64x128xf32>, vector<128x128xf32>, vector<64x128xf32> -> vector<64x128xf32>
    %c0_4 = arith.constant 0 : index
    %c0_5 = arith.constant 0 : index
    %c0_6 = arith.constant 0 : index
    %4 = vector.load %arg3[%c0_4, %c0_5, %c0_6] : memref<4x1x128xf32, #tpu.memory_space<vmem>>, vector<1x1x128xf32>
    %5 = vector.shape_cast %4 : vector<1x1x128xf32> to vector<1x128xf32>
    %6 = vector.broadcast %5 : vector<1x128xf32> to vector<64x128xf32>
    %7 = arith.addf %3, %6 : vector<64x128xf32>
    %8 = math.sin %7 : vector<64x128xf32>
    %c1 = arith.constant 1 : index
    %c0_7 = arith.constant 0 : index
    %c0_8 = arith.constant 0 : index
    %9 = vector.load %arg2[%c1, %c0_7, %c0_8] : memref<4x128x128xf32, #tpu.memory_space<vmem>>, vector<1x128x128xf32>
    %10 = vector.shape_cast %9 : vector<1x128x128xf32> to vector<128x128xf32>
    %cst_9 = arith.constant dense<0.000000e+00> : vector<64x128xf32>
    %11 = tpu.matmul %8, %10, %cst_9 {dimension_numbers = #tpu.dot_dimension_numbers<[1], [0], [0], [1], [0, 0, 1, 1], [], []>} : vector<64x128xf32>, vector<128x128xf32>, vector<64x128xf32> -> vector<64x128xf32>
    %c1_10 = arith.constant 1 : index
    %c0_11 = arith.constant 0 : index
    %c0_12 = arith.constant 0 : index
    %12 = vector.load %arg3[%c1_10, %c0_11, %c0_12] : memref<4x1x128xf32, #tpu.memory_space<vmem>>, vector<1x1x128xf32>
    %13 = vector.shape_cast %12 : vector<1x1x128xf32> to vector<1x128xf32>
    %14 = vector.broadcast %13 : vector<1x128xf32> to vector<64x128xf32>
    %15 = arith.addf %11, %14 : vector<64x128xf32>
    %16 = math.sin %15 : vector<64x128xf32>
    %c2 = arith.constant 2 : index
    %c0_13 = arith.constant 0 : index
    %c0_14 = arith.constant 0 : index
    %17 = vector.load %arg2[%c2, %c0_13, %c0_14] : memref<4x128x128xf32, #tpu.memory_space<vmem>>, vector<1x128x128xf32>
    %18 = vector.shape_cast %17 : vector<1x128x128xf32> to vector<128x128xf32>
    %cst_15 = arith.constant dense<0.000000e+00> : vector<64x128xf32>
    %19 = tpu.matmul %16, %18, %cst_15 {dimension_numbers = #tpu.dot_dimension_numbers<[1], [0], [0], [1], [0, 0, 1, 1], [], []>} : vector<64x128xf32>, vector<128x128xf32>, vector<64x128xf32> -> vector<64x128xf32>
    %c2_16 = arith.constant 2 : index
    %c0_17 = arith.constant 0 : index
    %c0_18 = arith.constant 0 : index
    %20 = vector.load %arg3[%c2_16, %c0_17, %c0_18] : memref<4x1x128xf32, #tpu.memory_space<vmem>>, vector<1x1x128xf32>
    %21 = vector.shape_cast %20 : vector<1x1x128xf32> to vector<1x128xf32>
    %22 = vector.broadcast %21 : vector<1x128xf32> to vector<64x128xf32>
    %23 = arith.addf %19, %22 : vector<64x128xf32>
    %24 = math.sin %23 : vector<64x128xf32>
    %c3 = arith.constant 3 : index
    %c0_19 = arith.constant 0 : index
    %c0_20 = arith.constant 0 : index
    %25 = vector.load %arg2[%c3, %c0_19, %c0_20] : memref<4x128x128xf32, #tpu.memory_space<vmem>>, vector<1x128x128xf32>
    %26 = vector.shape_cast %25 : vector<1x128x128xf32> to vector<128x128xf32>
    %cst_21 = arith.constant dense<0.000000e+00> : vector<64x128xf32>
    %27 = tpu.matmul %24, %26, %cst_21 {dimension_numbers = #tpu.dot_dimension_numbers<[1], [0], [0], [1], [0, 0, 1, 1], [], []>} : vector<64x128xf32>, vector<128x128xf32>, vector<64x128xf32> -> vector<64x128xf32>
    %c3_22 = arith.constant 3 : index
    %c0_23 = arith.constant 0 : index
    %c0_24 = arith.constant 0 : index
    %28 = vector.load %arg3[%c3_22, %c0_23, %c0_24] : memref<4x1x128xf32, #tpu.memory_space<vmem>>, vector<1x1x128xf32>
    %29 = vector.shape_cast %28 : vector<1x1x128xf32> to vector<1x128xf32>
    %30 = vector.broadcast %29 : vector<1x128xf32> to vector<64x128xf32>
    %31 = arith.addf %27, %30 : vector<64x128xf32>
    %32 = arith.addf %31, %0 : vector<64x128xf32>
    %33 = math.sin %32 : vector<64x128xf32>
    %c0_25 = arith.constant 0 : index
    %c0_26 = arith.constant 0 : index
    %34 = vector.load %arg4[%c0_25, %c0_26] : memref<64x128xf32, #tpu.memory_space<vmem>>, vector<64x128xf32>
    tpu.vector_store %arg4[%c0_25, %c0_26], %33 {strides = array<i32>} : memref<64x128xf32, #tpu.memory_space<vmem>>, vector<64x128xf32>,
    return
  }
  func.func @transform_0(%arg0: i32) -> (i32, i32) {
    %c0_i32 = arith.constant 0 : i32
    %c0_i32_0 = arith.constant 0 : i32
    return %arg0, %c0_i32 : i32, i32
  }
  func.func @transform_1(%arg0: i32) -> (i32, i32, i32) {
    %c0_i32 = arith.constant 0 : i32
    %c0_i32_0 = arith.constant 0 : i32
    %c0_i32_1 = arith.constant 0 : i32
    %c0_i32_2 = arith.constant 0 : i32
    return %c0_i32, %c0_i32_0, %c0_i32_1 : i32, i32, i32
  }
  func.func @transform_2(%arg0: i32) -> (i32, i32, i32) {
    %c0_i32 = arith.constant 0 : i32
    %c0_i32_0 = arith.constant 0 : i32
    %c0_i32_1 = arith.constant 0 : i32
    %c0_i32_2 = arith.constant 0 : i32
    return %c0_i32, %c0_i32_0, %c0_i32_1 : i32, i32, i32
  }
  func.func @transform_3(%arg0: i32) -> (i32, i32) {
    %c0_i32 = arith.constant 0 : i32
    %c0_i32_0 = arith.constant 0 : i32
    return %arg0, %c0_i32 : i32, i32
  }
}

</mosaic_0001>

<llo_original>
// kernel: tpu_custom_call.1
$region0: #{tpu_custom_call.1}
  #allocation0 [shape = 'u32[]', space=smem, size = 0x4, offset = 0x4, fixed_abs, tag = 'smem constant byte address 0x4 - core index']
  #allocation1 [shape = 'u32[144,128]{1,0:T(1,128)}', space=vmem, size = 0x12000, scoped, tag = 'internal scratch']
  %s0 = inlined_call_operand.hbm [shape: f32[128,128], index: 0, kind: input, shape index: {}]
  %s1 = inlined_call_operand.hbm [shape: f32[4,128,128], index: 1, kind: input, shape index: {}]
  %s2 = inlined_call_operand.vmem [shape: f32[4,1,128], index: 2, kind: input, shape index: {}]
  %s3 = inlined_call_operand.hbm [shape: f32[128,128], index: 3, kind: output, shape index: {}]
  %s4 = sld [smem:[#allocation0]]
  $region53: #{tpu_custom_call.1} parent=0
    _
  %s6 = ssub.s32 1, %s4
  %s7 = scalar_select 0, %s6, %s4
  $region1: #{tpu_custom_call.1} parent=0
    #allocation2 [shape = 'u8[65536]{0}', space=vmem, size = 0x10000, scoped, tag = 'input window, operand 0']
    #allocation3 [shape = 's32[2]{0}', space=sflag, size = 0x8, scoped, tag = 'scoped memory for tpu_custom_call.1']
    #allocation4 [shape = 's32[2]{0}', space=sflag, size = 0x8, scoped, tag = 'scoped memory for tpu_custom_call.1']
    #allocation5 [shape = 'u8[262144]{0}', space=vmem, size = 0x40000, scoped, tag = 'input window, operand 1, single buffered']
    #allocation6 [shape = 's32[1]{0}', space=sflag, size = 0x4, scoped, tag = 'scoped memory for tpu_custom_call.1']
    #allocation7 [shape = 'u8[65536]{0}', space=vmem, size = 0x10000, scoped, tag = 'output window, operand 0']
    %8 = vsyncpa [#allocation3], 0
    %s9 = scalar_lea.sflag [#allocation3], 1
    %10 = vsyncpa %s9, 0
    %11 = vsyncpa [#allocation6], 0
    %12 = vsyncpa [#allocation4], 0
    %s13 = scalar_lea.sflag [#allocation4], 1
    %14 = vsyncpa %s13, 0
    loop: start=0, step=1, limit=4
    $region2: #{tpu_custom_call.1} parent=1 // loop_pre_header
      _
    $region3: #{tpu_custom_call.1} parent=1 // loop_header
      %s16 = sphi 0, %s20
      %p17 = scmp.ge.s32.totalorder %s16, 4
      %s26 = sphi 0, %s28
      %s29 = sphi 0, %s26
      %s30 = sphi 0, %s29
      %s46 = sphi 0, %s30
      %s50 = sphi 0, %s50
      %s52 = sphi 0, %s50
      %s53 = sphi 0, %s52
      %s67 = sphi 0, %s53
      %s71 = sphi 0, %s71
      %s73 = sphi 0, %s71
      %s74 = sphi 0, %s73
      %s88 = sphi 0, %s74
      %s94 = sphi 0, %s96
      %s97 = sphi 0, %s94
      %s98 = sphi 0, %s97
      %s114 = sphi 0, %s98
    $region4: #{tpu_custom_call.1} parent=1 // loop_header_branch
      %19 = sbr.rel (%p17) target = $region8
    $region5: #{tpu_custom_call.1} parent=1 // loop_body
      %s21 = ssub.s32 %s16, 1
      %s22 = ssub.s32 %s16, 2
      %s23 = sadd.s32 %s16, 1
      %s24 = ssub.s32 %s16, %s23
      %p25 = scmp.eq.s32.totalorder %s24, 0
      %s27 = sadd.s32 %s26, 1
      %s28 = scalar_select %p25, %s26, %s27
      %p31 = pneg %p25
      %p32 = scmp.eq.s32.totalorder %s16, 1
      %p33 = por %p31, %p32
      %p34 = scmp.ne.s32.totalorder %s26, %s29
      %p35 = scmp.eq.s32.totalorder %s16, 0
      %p36 = por %p34, %p35
      %p37 = scmp.ne.s32.totalorder %s26, %s29
      %p38 = scmp.eq.s32.totalorder %s21, 1
      %p39 = por %p37, %p38
      %p40 = scmp.ne.s32.totalorder %s29, %s30
      %p41 = scmp.eq.s32.totalorder %s21, 0
      %p42 = por %p40, %p41
      %p43 = scmp.ne.s32.totalorder %s29, %s30
      %p44 = scmp.eq.s32.totalorder %s22, 1
      %p45 = por %p43, %p44
      %p47 = scmp.ne.s32.totalorder %s30, %s46
      %p48 = scmp.eq.s32.totalorder %s22, 0
      %p49 = por %p47, %p48
      %s51 = sadd.s32 %s50, 1
      %p54 = scmp.eq.s32.totalorder %s16, 1
      %p55 = scmp.ne.s32.totalorder %s50, %s52
      %p56 = scmp.eq.s32.totalorder %s16, 0
      %p57 = por %p55, %p56
      %p58 = scmp.ne.s32.totalorder %s50, %s52
      %p59 = scmp.eq.s32.totalorder %s21, 1
      %p60 = por %p58, %p59
      %p61 = scmp.ne.s32.totalorder %s52, %s53
      %p62 = scmp.eq.s32.totalorder %s21, 0
      %p63 = por %p61, %p62
      %p64 = scmp.ne.s32.totalorder %s52, %s53
      %p65 = scmp.eq.s32.totalorder %s22, 1
      %p66 = por %p64, %p65
      %p68 = scmp.ne.s32.totalorder %s53, %s67
      %p69 = scmp.eq.s32.totalorder %s22, 0
      %p70 = por %p68, %p69
      %s72 = sadd.s32 %s71, 1
      %p75 = scmp.eq.s32.totalorder %s16, 1
      %p76 = scmp.ne.s32.totalorder %s71, %s73
      %p77 = scmp.eq.s32.totalorder %s16, 0
      %p78 = por %p76, %p77
      %p79 = scmp.ne.s32.totalorder %s71, %s73
      %p80 = scmp.eq.s32.totalorder %s21, 1
      %p81 = por %p79, %p80
      %p82 = scmp.ne.s32.totalorder %s73, %s74
      %p83 = scmp.eq.s32.totalorder %s21, 0
      %p84 = por %p82, %p83
      %p85 = scmp.ne.s32.totalorder %s73, %s74
      %p86 = scmp.eq.s32.totalorder %s22, 1
      %p87 = por %p85, %p86
      %p89 = scmp.ne.s32.totalorder %s74, %s88
      %p90 = scmp.eq.s32.totalorder %s22, 0
      %p91 = por %p89, %p90
      %s92 = ssub.s32 %s16, %s23
      %p93 = scmp.eq.s32.totalorder %s92, 0
      %s95 = sadd.s32 %s94, 1
      %s96 = scalar_select %p93, %s94, %s95
      %p99 = pneg %p93
      %p100 = scmp.eq.s32.totalorder %s16, 1
      %p101 = por %p99, %p100
      %p102 = scmp.ne.s32.totalorder %s94, %s97
      %p103 = scmp.eq.s32.totalorder %s16, 0
      %p104 = por %p102, %p103
      %p105 = scmp.ne.s32.totalorder %s94, %s97
      %p106 = scmp.eq.s32.totalorder %s21, 1
      %p107 = por %p105, %p106
      %p108 = scmp.ne.s32.totalorder %s97, %s98
      %p109 = scmp.eq.s32.totalorder %s21, 0
      %p110 = por %p108, %p109
      %p111 = scmp.ne.s32.totalorder %s97, %s98
      %p112 = scmp.eq.s32.totalorder %s22, 1
      %p113 = por %p111, %p112
      %p115 = scmp.ne.s32.totalorder %s98, %s114
      %p116 = scmp.eq.s32.totalorder %s22, 0
      %p117 = por %p115, %p116
      %p118 = scmp.le.s32.totalorder 1, %s16
      %p119 = scmp.lt.s32.totalorder %s16, 3
      %p120 = pnand %p118, %p119
      %p121 = pneg %p120
      // Predicated region
      $region9: #{tpu_custom_call.1} parent=5 // pred_check
        _
      $region10: #{tpu_custom_call.1} parent=5 // pred_check_branch
        %123 = sbr.rel (%p120) target = $region12
      $region11: #{tpu_custom_call.1} parent=5 // pred_region
        %s124 = ssub.s32 %s16, 1
        // Predicated region
        $region13: #{tpu_custom_call.1} parent=11 // pred_check
          %p125 = pneg %p63
        $region14: #{tpu_custom_call.1} parent=11 // pred_check_branch
          %127 = sbr.rel (%p125) target = $region16
        $region15: #{tpu_custom_call.1} parent=11 // pred_region
          %s129 = ssub.s32 8192, 8192
          %130 = vsyncadd [#allocation6], %s129
          %s131 = sshll.u32 [#allocation5], 4
          %s132 = int_to_ptr.vmem [resolvable:$true] %s131
          %137 = dma.hbm_to_vmem [thread:$0]  %s1, 8192, %s132, [#allocation6], 128, 128, 8
        $region16: #{tpu_custom_call.1} parent=11 // pred_fallthru
          _
        // Predicated region
        $region17: #{tpu_custom_call.1} parent=11 // pred_check
          %p138 = pneg %p84
        $region18: #{tpu_custom_call.1} parent=11 // pred_check_branch
          %140 = sbr.rel (%p138) target = $region20
        $region19: #{tpu_custom_call.1} parent=11 // pred_region
          _
        $region20: #{tpu_custom_call.1} parent=11 // pred_fallthru
          _
      $region12: #{tpu_custom_call.1} parent=5 // pred_fallthru
        _
      %p141 = scmp.lt.s32.totalorder %s16, 2
      // Predicated region
      $region21: #{tpu_custom_call.1} parent=5 // pred_check
        %p142 = pneg %p141
      $region22: #{tpu_custom_call.1} parent=5 // pred_check_branch
        %144 = sbr.rel (%p142) target = $region24
      $region23: #{tpu_custom_call.1} parent=5 // pred_region
        // Predicated region
        $region25: #{tpu_custom_call.1} parent=23 // pred_check
          %p145 = pneg %p36
        $region26: #{tpu_custom_call.1} parent=23 // pred_check_branch
          %147 = sbr.rel (%p145) target = $region28
        $region27: #{tpu_custom_call.1} parent=23 // pred_region
          %s148 = sand.u32 %s26, 1
          %s149 = scalar_lea.sflag [#allocation3], %s148
          %s150 = sand.u32 %s26, 1
          %s151 = smul.addr %s150, 64
          %s152 = scalar_lea.vmem [#allocation2], %s151
          %s153 = smul.u32 8, %s16
          %s155 = ssub.s32 1024, 1024
          %156 = vsyncadd %s149, %s155
          %s157 = smul.addr %s153, 128
          %s158 = scalar_lea.hbm %s0, %s157
          %s159 = sshll.u32 %s152, 4
          %s160 = int_to_ptr.vmem [resolvable:$true] %s159
          %165 = dma.hbm_to_vmem [thread:$0]  %s158, 1024, %s160, %s149, 128, 128, 8
        $region28: #{tpu_custom_call.1} parent=23 // pred_fallthru
          _
      $region24: #{tpu_custom_call.1} parent=5 // pred_fallthru
        _
      %p166 = scmp.le.s32.totalorder 1, %s16
      %p167 = scmp.lt.s32.totalorder %s16, 3
      %p168 = pnand %p166, %p167
      %p169 = pneg %p168
      // Predicated region
      $region29: #{tpu_custom_call.1} parent=5 // pred_check
        _
      $region30: #{tpu_custom_call.1} parent=5 // pred_check_branch
        %171 = sbr.rel (%p168) target = $region32
      $region31: #{tpu_custom_call.1} parent=5 // pred_region
        %s172 = ssub.s32 %s16, 1
        %s173 = sand.u32 %s29, 1
        %s174 = scalar_lea.sflag [#allocation3], %s173
        %s175 = sand.u32 %s29, 1
        %s176 = smul.addr %s175, 64
        %s177 = scalar_lea.vmem [#allocation2], %s176
        // Predicated region
        $region33: #{tpu_custom_call.1} parent=31 // pred_check
          %p178 = pneg %p42
        $region34: #{tpu_custom_call.1} parent=31 // pred_check_branch
          %180 = sbr.rel (%p178) target = $region36
        $region35: #{tpu_custom_call.1} parent=31 // pred_region
          %181 = dma.done %s174, 1024
        $region36: #{tpu_custom_call.1} parent=31 // pred_fallthru
          _
        // Predicated region
        $region37: #{tpu_custom_call.1} parent=31 // pred_check
          %p182 = pneg %p63
        $region38: #{tpu_custom_call.1} parent=31 // pred_check_branch
          %184 = sbr.rel (%p182) target = $region40
        $region39: #{tpu_custom_call.1} parent=31 // pred_region
          %185 = dma.done [#allocation6], 8192
        $region40: #{tpu_custom_call.1} parent=31 // pred_fallthru
          _
        %s186 = sand.u32 %s29, 1
        %s187 = scalar_lea.sflag [#allocation3], %s186
        %s188 = sand.u32 %s29, 1
        %s189 = smul.addr %s188, 64
        %s190 = scalar_lea.vmem [#allocation2], %s189
        %p191 = pneg %p42
        %p192 = pneg %p39
        %p193 = pneg %p63
        %p194 = pneg %p60
        %p195 = pneg %p84
        %p196 = pneg %p81
        %p197 = pneg %p110
        %p198 = pneg %p107
        %s199 = sand.u32 %s97, 1
        %s200 = scalar_lea.sflag [#allocation4], %s199
        %s201 = sand.u32 %s97, 1
        %s202 = smul.addr %s201, 64
        %s203 = scalar_lea.vmem [#allocation7], %s202
        %s204 = smul.u32 8, %s21
        %s205 = smul.u32 8, %s21
        %v206 = vld [vmem:[%s177] sm:$0xff]
        %v207 = vld [vmem:[%s177 + $0x8] sm:$0xff]
        %v208 = vld [vmem:[%s177 + $0x10] sm:$0xff]
        %v209 = vld [vmem:[%s177 + $0x18] sm:$0xff]
        %v210 = vld [vmem:[%s177 + $0x20] sm:$0xff]
        %v211 = vld [vmem:[%s177 + $0x28] sm:$0xff]
        %v212 = vld [vmem:[%s177 + $0x30] sm:$0xff]
        %v213 = vld [vmem:[%s177 + $0x38] sm:$0xff]
        %v214 = vld [vmem:[#allocation5] sm:$0xff]
        %v215 = vld [vmem:[#allocation5 + $0x8] sm:$0xff]
        %v216 = vld [vmem:[#allocation5 + $0x10] sm:$0xff]
        %v217 = vld [vmem:[#allocation5 + $0x18] sm:$0xff]
        %v218 = vld [vmem:[#allocation5 + $0x20] sm:$0xff]
        %v219 = vld [vmem:[#allocation5 + $0x28] sm:$0xff]
        %v220 = vld [vmem:[#allocation5 + $0x30] sm:$0xff]
        %v221 = vld [vmem:[#allocation5 + $0x38] sm:$0xff]
        %v222 = vld [vmem:[#allocation5 + $0x40] sm:$0xff]
        %v223 = vld [vmem:[#allocation5 + $0x48] sm:$0xff]
        %v224 = vld [vmem:[#allocation5 + $0x50] sm:$0xff]
        %v225 = vld [vmem:[#allocation5 + $0x58] sm:$0xff]
        %v226 = vld [vmem:[#allocation5 + $0x60] sm:$0xff]
        %v227 = vld [vmem:[#allocation5 + $0x68] sm:$0xff]
        %v228 = vld [vmem:[#allocation5 + $0x70] sm:$0xff]
        %v229 = vld [vmem:[#allocation5 + $0x78] sm:$0xff]
        %v230 = vld [vmem:[%s2] sm:$0x1]
        %v232 = vlaneseq
        %v233 = vshrl.u32 %v232, 7
        %v234 = vsub.s32 0, %v233
        %v235 = vrot.slane %v230, %v234
        %237 = vmatprep.subr.mxu0 0.0
        %238 = vmatpush1.msra.mxu0 %v214
        %239 = vmatprep.subr.mxu0 0.0
        %240 = vmatpush1.msra.mxu0 %v215
        %241 = vmatprep.subr.mxu0 0.0
        %242 = vmatpush1.msra.mxu0 %v216
        %243 = vmatprep.subr.mxu0 0.0
        %244 = vmatpush1.msra.mxu0 %v217
        %245 = vmatprep.subr.mxu0 0.0
        %246 = vmatpush1.msra.mxu0 %v218
        %247 = vmatprep.subr.mxu0 0.0
        %248 = vmatpush1.msra.mxu0 %v219
        %249 = vmatprep.subr.mxu0 0.0
        %250 = vmatpush1.msra.mxu0 %v220
        %251 = vmatprep.subr.mxu0 0.0
        %252 = vmatpush1.msra.mxu0 %v221
        %253 = vmatprep.subr.mxu0 0.0
        %254 = vmatpush1.msra.mxu0 %v222
        %255 = vmatprep.subr.mxu0 0.0
        %256 = vmatpush1.msra.mxu0 %v223
        %257 = vmatprep.subr.mxu0 0.0
        %258 = vmatpush1.msra.mxu0 %v224
        %259 = vmatprep.subr.mxu0 0.0
        %260 = vmatpush1.msra.mxu0 %v225
        %261 = vmatprep.subr.mxu0 0.0
        %262 = vmatpush1.msra.mxu0 %v226
        %263 = vmatprep.subr.mxu0 0.0
        %264 = vmatpush1.msra.mxu0 %v227
        %265 = vmatprep.subr.mxu0 0.0
        %266 = vmatpush1.msra.mxu0 %v228
        %267 = vmatprep.subr.mxu0 0.0
        %268 = vmatpush1.msra.mxu0 %v229
        %269 = vmatprep.subr.mxu0 0.0
        %270 = vmatpush1.msra.mxu0 0.0
        %271 = vmatprep.subr.mxu0 0.0
        %272 = vmatpush1.msra.mxu0 0.0
        %273 = vmatprep.subr.mxu0 0.0
        %274 = vmatpush1.msra.mxu0 0.0
        %275 = vmatprep.subr.mxu0 0.0
        %276 = vmatpush1.msra.mxu0 0.0
        %277 = vmatprep.subr.mxu0 0.0
        %278 = vmatpush1.msra.mxu0 0.0
        %279 = vmatprep.subr.mxu0 0.0
        %280 = vmatpush1.msra.mxu0 0.0
        %281 = vmatprep.subr.mxu0 0.0
        %282 = vmatpush1.msra.mxu0 0.0
        %283 = vmatprep.subr.mxu0 0.0
        %284 = vmatpush1.msra.mxu0 0.0
        %285 = vmatprep.subr.mxu0 0.0
        %286 = vmatpush1.msra.mxu0 0.0
        %287 = vmatprep.subr.mxu0 0.0
        %288 = vmatpush1.msra.mxu0 0.0
        %289 = vmatprep.subr.mxu0 0.0
        %290 = vmatpush1.msra.mxu0 0.0
        %291 = vmatprep.subr.mxu0 0.0
        %292 = vmatpush1.msra.mxu0 0.0
        %293 = vmatprep.subr.mxu0 0.0
        %294 = vmatpush1.msra.mxu0 0.0
        %295 = vmatprep.subr.mxu0 0.0
        %296 = vmatpush1.msra.mxu0 0.0
        %297 = vmatprep.subr.mxu0 0.0
        %298 = vmatpush1.msra.mxu0 0.0
        %299 = vmatprep.subr.mxu0 0.0
        %300 = vmatpush1.msra.mxu0 0.0
        %301 = vmatprep.mubr.f32.mxu0 0.0
        %302 = vmatmul.mubr.f32.gmra.mrb[0].mxu0 %v206
        %v303 = vpop.f32.mrb[0].mxu0
        %v304 = vadd.f32 %v235, %v303
        %v305 = vpop.f32.mrb[0].mxu0
        %306 = vmatprep.mubr.f32.mxu0 0.0
        %307 = vmatmul.mubr.f32.gmra.mrb[0].mxu0 %v207
        %v308 = vpop.f32.mrb[0].mxu0
        %v309 = vadd.f32 %v235, %v308
        %v310 = vpop.f32.mrb[0].mxu0
        %311 = vmatprep.mubr.f32.mxu0 0.0
        %312 = vmatmul.mubr.f32.gmra.mrb[0].mxu0 %v208
        %v313 = vpop.f32.mrb[0].mxu0
        %v314 = vadd.f32 %v235, %v313
        %v315 = vpop.f32.mrb[0].mxu0
        %316 = vmatprep.mubr.f32.mxu0 0.0
        %317 = vmatmul.mubr.f32.gmra.mrb[0].mxu0 %v209
        %v318 = vpop.f32.mrb[0].mxu0
        %v319 = vadd.f32 %v235, %v318
        %v320 = vpop.f32.mrb[0].mxu0
        %321 = vmatprep.mubr.f32.mxu0 0.0
        %322 = vmatmul.mubr.f32.gmra.mrb[0].mxu0 %v210
        %v323 = vpop.f32.mrb[0].mxu0
        %v324 = vadd.f32 %v235, %v323
        %v325 = vpop.f32.mrb[0].mxu0
        %326 = vmatprep.mubr.f32.mxu0 0.0
        %327 = vmatmul.mubr.f32.gmra.mrb[0].mxu0 %v211
        %v328 = vpop.f32.mrb[0].mxu0
        %v329 = vadd.f32 %v235, %v328
        %v330 = vpop.f32.mrb[0].mxu0
        %331 = vmatprep.mubr.f32.mxu0 0.0
        %332 = vmatmul.mubr.f32.gmra.mrb[0].mxu0 %v212
        %v333 = vpop.f32.mrb[0].mxu0
        %v334 = vadd.f32 %v235, %v333
        %v335 = vpop.f32.mrb[0].mxu0
        %336 = vmatprep.mubr.f32.mxu0 0.0
        %337 = vmatmul.mubr.f32.gmra.mrb[0].mxu0 %v213
        %v338 = vpop.f32.mrb[0].mxu0
        %v339 = vadd.f32 %v235, %v338
        %v340 = vpop.f32.mrb[0].mxu0
        %341 = vdwg.mxu0
        %v342 = vand.u32 2147483647, %v304
        %vm343 = vcmp.le.f32.partialorder %v342, 0.7853982
        %vm344 = vcmp.lt.s32.totalorder %v304, 0
        %v345 = vand.u32 %v304, 2139095040
        %v346 = vshrl.u32 %v345, 23
        %v347 = vsub.s32 %v346, 127
        %v348 = vand.u32 2147483647, %v304
        %v349 = vand.u32 %v348, 8388607
        %v350 = vor.u32 %v349, 8388608
        %v351 = vsub.s32 0, %v350
        %v352 = vadd.s32 %v347, 1
        %vm353 = vcmp.gt.s32.totalorder %v352, 0
        %v354 = vsel %vm353, %v352, 0
        %v355 = vshrl.u32 %v354, 5
        %v356 = vand.u32 %v354, 31
        %v357 = vsub.s32 32, %v356
        %v358 = vshrl.u32 683565275, %v357
        %v359 = vshll.u32 683565275, %v356
        %v360 = vshrl.u32 2475754826, %v357
        %v361 = vor.u32 %v359, %v360
        %v362 = vshll.u32 2475754826, %v356
        %v363 = vshrl.u32 2131351028, %v357
        %v364 = vor.u32 %v362, %v363
        %v365 = vshll.u32 2131351028, %v356
        %v366 = vshrl.u32 2102212464, %v357
        %v367 = vor.u32 %v365, %v366
        %v368 = vshll.u32 2102212464, %v356
        %v369 = vshrl.u32 920167782, %v357
        %v370 = vor.u32 %v368, %v369
        %v371 = vshll.u32 920167782, %v356
        %v372 = vshrl.u32 1326507024, %v357
        %v373 = vor.u32 %v371, %v372
        %vm374 = vcmp.lt.s32.totalorder %v355, 1
        %vm375 = vcmp.lt.s32.totalorder %v355, 2
        %vm376 = vcmp.lt.s32.totalorder %v355, 3
        %vm377 = vcmp.lt.s32.totalorder %v355, 4
        %v378 = vsel %vm374, %v358, %v361
        %v379 = vsel %vm377, %v367, 2102212464
        %v380 = vsel %vm376, %v364, %v379
        %v381 = vsel %vm375, %v378, %v380
        %v382 = vsel %vm374, %v361, %v364
        %v383 = vsel %vm377, %v370, 920167782
        %v384 = vsel %vm376, %v367, %v383
        %v385 = vsel %vm375, %v382, %v384
        %v386 = vsel %vm374, %v364, %v367
        %v387 = vsel %vm377, %v373, 1326507024
        %v388 = vsel %vm376, %v370, %v387
        %v389 = vsel %vm375, %v386, %v388
        %v390 = vshll.u32 %v350, 8
        %v391 = vmul.u32.u64.compose %v390, %v389
        %v392 = vextract.low.u32 %v391
        %v393 = vextract.high.u32 %v391
        %v394 = vmul.u32.u64.compose %v390, %v385
        %v395 = vextract.low.u32 %v394
        %v396 = vextract.high.u32 %v394
        %v397 = vmul.u32 %v390, %v381
        %v398 = vadd.s32 %v393, %v395
        %vm399 = vc.u32 %v393, %v395
        %v400 = vadd.s32 %v396, 1
        %v401 = vsel %vm399, %v400, %v396
        %v402 = vadd.s32 %v397, %v401
        %v403 = vadd.s32 %v402, 536870912
        %v404 = vshrl.u32 %v403, 30
        %v405 = vshll.u32 %v404, 30
        %v406 = vsub.s32 %v402, %v405
        %vm407 = vcmp.lt.s32.totalorder %v406, 0
        %v408 = vsub.s32 0, %v406
        %v409 = vsel %vm407, %v408, %v406
        %v410 = vclz %v409
        %v411 = vsub.s32 %v410, 2
        %vm412 = vcmp.gt.s32.totalorder 0, %v411
        %v413 = vsel %vm412, 0, %v411
        %v414 = vsub.s32 32, %v413
        %v415 = vshll.u32 %v406, %v413
        %v416 = vshrl.u32 %v398, %v414
        %v417 = vor.u32 %v415, %v416
        %v418 = vsub.s32 4294967266, %v413
        %v419 = vadd.s32 %v418, 127
        %v420 = vshll.u32 %v419, 23
        %v421 = vor.u32 4788187, %v420
        %v422 = vand.u32 2147483647, %v421
        %v424 = vcvt.s32.f32 %v417
        %v425 = vmul.f32 %v424, %v422
        %v426 = vxor.u32 %v425, 2147483648
        %v427 = vsel %vm344, %v426, %v425
        %v428 = vsub.s32 4, %v404
        %v429 = vsel %vm344, %v428, %v404
        %v430 = vsel %vm343, %v304, %v427
        %v431 = vsel %vm343, 0, %v429
        %v432 = vcosq.f32.pop %v430
        %v433 = vsinq.f32.pop %v430
        %vm434 = vweird.f32 %v304
        %v435 = vadd.s32 %v431, 3
        %v436 = vand.u32 %v435, 3
        %vm437 = vcmp.lt.s32.totalorder %v436, 2
        %vm438 = vcmp.eq.s32.totalorder %v436, 0
        %v439 = vxor.u32 %v433, 2147483648
        %v440 = vsel %vm438, %v432, %v439
        %vm441 = vcmp.eq.s32.totalorder %v436, 2
        %v442 = vxor.u32 %v432, 2147483648
        %v443 = vsel %vm441, %v442, %v433
        %v444 = vsel %vm437, %v440, %v443
        %v445 = vsel %vm434, nan, %v444
        %v446 = vand.u32 2147483647, %v309
        %vm447 = vcmp.le.f32.partialorder %v446, 0.7853982
        %vm448 = vcmp.lt.s32.totalorder %v309, 0
        %v449 = vand.u32 %v309, 2139095040
        %v450 = vshrl.u32 %v449, 23
        %v451 = vsub.s32 %v450, 127
        %v452 = vand.u32 2147483647, %v309
        %v453 = vand.u32 %v452, 8388607
        %v454 = vor.u32 %v453, 8388608
        %v455 = vsub.s32 0, %v454
        %v456 = vadd.s32 %v451, 1
        %vm457 = vcmp.gt.s32.totalorder %v456, 0
        %v458 = vsel %vm457, %v456, 0
        %v459 = vshrl.u32 %v458, 5
        %v460 = vand.u32 %v458, 31
        %v461 = vsub.s32 32, %v460
        %v462 = vshrl.u32 683565275, %v461
        %v463 = vshll.u32 683565275, %v460
        %v464 = vshrl.u32 2475754826, %v461
        %v465 = vor.u32 %v463, %v464
        %v466 = vshll.u32 2475754826, %v460
        %v467 = vshrl.u32 2131351028, %v461
        %v468 = vor.u32 %v466, %v467
        %v469 = vshll.u32 2131351028, %v460
        %v470 = vshrl.u32 2102212464, %v461
        %v471 = vor.u32 %v469, %v470
        %v472 = vshll.u32 2102212464, %v460
        %v473 = vshrl.u32 920167782, %v461
        %v474 = vor.u32 %v472, %v473
        %v475 = vshll.u32 920167782, %v460
        %v476 = vshrl.u32 1326507024, %v461
        %v477 = vor.u32 %v475, %v476
        %vm478 = vcmp.lt.s32.totalorder %v459, 1
        %vm479 = vcmp.lt.s32.totalorder %v459, 2
        %vm480 = vcmp.lt.s32.totalorder %v459, 3
        %vm481 = vcmp.lt.s32.totalorder %v459, 4
        %v482 = vsel %vm478, %v462, %v465
        %v483 = vsel %vm481, %v471, 2102212464
        %v484 = vsel %vm480, %v468, %v483
        %v485 = vsel %vm479, %v482, %v484
        %v486 = vsel %vm478, %v465, %v468
        %v487 = vsel %vm481, %v474, 920167782
        %v488 = vsel %vm480, %v471, %v487
        %v489 = vsel %vm479, %v486, %v488
        %v490 = vsel %vm478, %v468, %v471
        %v491 = vsel %vm481, %v477, 1326507024
        %v492 = vsel %vm480, %v474, %v491
        %v493 = vsel %vm479, %v490, %v492
        %v494 = vshll.u32 %v454, 8
        %v495 = vmul.u32.u64.compose %v494, %v493
        %v496 = vextract.low.u32 %v495
        %v497 = vextract.high.u32 %v495
        %v498 = vmul.u32.u64.compose %v494, %v489
        %v499 = vextract.low.u32 %v498
        %v500 = vextract.high.u32 %v498
        %v501 = vmul.u32 %v494, %v485
        %v502 = vadd.s32 %v497, %v499
        %vm503 = vc.u32 %v497, %v499
        %v504 = vadd.s32 %v500, 1
        %v505 = vsel %vm503, %v504, %v500
        %v506 = vadd.s32 %v501, %v505
        %v507 = vadd.s32 %v506, 536870912
        %v508 = vshrl.u32 %v507, 30
        %v509 = vshll.u32 %v508, 30
        %v510 = vsub.s32 %v506, %v509
        %vm511 = vcmp.lt.s32.totalorder %v510, 0
        %v512 = vsub.s32 0, %v510
        %v513 = vsel %vm511, %v512, %v510
        %v514 = vclz %v513
        %v515 = vsub.s32 %v514, 2
        %vm516 = vcmp.gt.s32.totalorder 0, %v515
        %v517 = vsel %vm516, 0, %v515
        %v518 = vsub.s32 32, %v517
        %v519 = vshll.u32 %v510, %v517
        %v520 = vshrl.u32 %v502, %v518
        %v521 = vor.u32 %v519, %v520
        %v522 = vsub.s32 4294967266, %v517
        %v523 = vadd.s32 %v522, 127
        %v524 = vshll.u32 %v523, 23
        %v525 = vor.u32 4788187, %v524
        %v526 = vand.u32 2147483647, %v525
        %v528 = vcvt.s32.f32 %v521
        %v529 = vmul.f32 %v528, %v526
        %v530 = vxor.u32 %v529, 2147483648
        %v531 = vsel %vm448, %v530, %v529
        %v532 = vsub.s32 4, %v508
        %v533 = vsel %vm448, %v532, %v508
        %v534 = vsel %vm447, %v309, %v531
        %v535 = vsel %vm447, 0, %v533
        %v536 = vcosq.f32.pop %v534
        %v537 = vsinq.f32.pop %v534
        %vm538 = vweird.f32 %v309
        %v539 = vadd.s32 %v535, 3
        %v540 = vand.u32 %v539, 3
        %vm541 = vcmp.lt.s32.totalorder %v540, 2
        %vm542 = vcmp.eq.s32.totalorder %v540, 0
        %v543 = vxor.u32 %v537, 2147483648
        %v544 = vsel %vm542, %v536, %v543
        %vm545 = vcmp.eq.s32.totalorder %v540, 2
        %v546 = vxor.u32 %v536, 2147483648
        %v547 = vsel %vm545, %v546, %v537
        %v548 = vsel %vm541, %v544, %v547
        %v549 = vsel %vm538, nan, %v548
        %v550 = vand.u32 2147483647, %v314
        %vm551 = vcmp.le.f32.partialorder %v550, 0.7853982
        %vm552 = vcmp.lt.s32.totalorder %v314, 0
        %v553 = vand.u32 %v314, 2139095040
        %v554 = vshrl.u32 %v553, 23
        %v555 = vsub.s32 %v554, 127
        %v556 = vand.u32 2147483647, %v314
        %v557 = vand.u32 %v556, 8388607
        %v558 = vor.u32 %v557, 8388608
        %v559 = vsub.s32 0, %v558
        %v560 = vadd.s32 %v555, 1
        %vm561 = vcmp.gt.s32.totalorder %v560, 0
        %v562 = vsel %vm561, %v560, 0
        %v563 = vshrl.u32 %v562, 5
        %v564 = vand.u32 %v562, 31
        %v565 = vsub.s32 32, %v564
        %v566 = vshrl.u32 683565275, %v565
        %v567 = vshll.u32 683565275, %v564
        %v568 = vshrl.u32 2475754826, %v565
        %v569 = vor.u32 %v567, %v568
        %v570 = vshll.u32 2475754826, %v564
        %v571 = vshrl.u32 2131351028, %v565
        %v572 = vor.u32 %v570, %v571
        %v573 = vshll.u32 2131351028, %v564
        %v574 = vshrl.u32 2102212464, %v565
        %v575 = vor.u32 %v573, %v574
        %v576 = vshll.u32 2102212464, %v564
        %v577 = vshrl.u32 920167782, %v565
        %v578 = vor.u32 %v576, %v577
        %v579 = vshll.u32 920167782, %v564
        %v580 = vshrl.u32 1326507024, %v565
        %v581 = vor.u32 %v579, %v580
        %vm582 = vcmp.lt.s32.totalorder %v563, 1
        %vm583 = vcmp.lt.s32.totalorder %v563, 2
        %vm584 = vcmp.lt.s32.totalorder %v563, 3
        %vm585 = vcmp.lt.s32.totalorder %v563, 4
        %v586 = vsel %vm582, %v566, %v569
        %v587 = vsel %vm585, %v575, 2102212464
        %v588 = vsel %vm584, %v572, %v587
        %v589 = vsel %vm583, %v586, %v588
        %v590 = vsel %vm582, %v569, %v572
        %v591 = vsel %vm585, %v578, 920167782
        %v592 = vsel %vm584, %v575, %v591
        %v593 = vsel %vm583, %v590, %v592
        %v594 = vsel %vm582, %v572, %v575
        %v595 = vsel %vm585, %v581, 1326507024
        %v596 = vsel %vm584, %v578, %v595
        %v597 = vsel %vm583, %v594, %v596
        %v598 = vshll.u32 %v558, 8
        %v599 = vmul.u32.u64.compose %v598, %v597
        %v600 = vextract.low.u32 %v599
        %v601 = vextract.high.u32 %v599
        %v602 = vmul.u32.u64.compose %v598, %v593
        %v603 = vextract.low.u32 %v602
        %v604 = vextract.high.u32 %v602
        %v605 = vmul.u32 %v598, %v589
        %v606 = vadd.s32 %v601, %v603
        %vm607 = vc.u32 %v601, %v603
        %v608 = vadd.s32 %v604, 1
        %v609 = vsel %vm607, %v608, %v604
        %v610 = vadd.s32 %v605, %v609
        %v611 = vadd.s32 %v610, 536870912
        %v612 = vshrl.u32 %v611, 30
        %v613 = vshll.u32 %v612, 30
        %v614 = vsub.s32 %v610, %v613
        %vm615 = vcmp.lt.s32.totalorder %v614, 0
        %v616 = vsub.s32 0, %v614
        %v617 = vsel %vm615, %v616, %v614
        %v618 = vclz %v617
        %v619 = vsub.s32 %v618, 2
        %vm620 = vcmp.gt.s32.totalorder 0, %v619
        %v621 = vsel %vm620, 0, %v619
        %v622 = vsub.s32 32, %v621
        %v623 = vshll.u32 %v614, %v621
        %v624 = vshrl.u32 %v606, %v622
        %v625 = vor.u32 %v623, %v624
        %v626 = vsub.s32 4294967266, %v621
        %v627 = vadd.s32 %v626, 127
        %v628 = vshll.u32 %v627, 23
        %v629 = vor.u32 4788187, %v628
        %v630 = vand.u32 2147483647, %v629
        %v632 = vcvt.s32.f32 %v625
        %v633 = vmul.f32 %v632, %v630
        %v634 = vxor.u32 %v633, 2147483648
        %v635 = vsel %vm552, %v634, %v633
        %v636 = vsub.s32 4, %v612
        %v637 = vsel %vm552, %v636, %v612
        %v638 = vsel %vm551, %v314, %v635
        %v639 = vsel %vm551, 0, %v637
        %v640 = vcosq.f32.pop %v638
        %v641 = vsinq.f32.pop %v638
        %vm642 = vweird.f32 %v314
        %v643 = vadd.s32 %v639, 3
        %v644 = vand.u32 %v643, 3
        %vm645 = vcmp.lt.s32.totalorder %v644, 2
        %vm646 = vcmp.eq.s32.totalorder %v644, 0
        %v647 = vxor.u32 %v641, 2147483648
        %v648 = vsel %vm646, %v640, %v647
        %vm649 = vcmp.eq.s32.totalorder %v644, 2
        %v650 = vxor.u32 %v640, 2147483648
        %v651 = vsel %vm649, %v650, %v641
        %v652 = vsel %vm645, %v648, %v651
        %v653 = vsel %vm642, nan, %v652
        %v654 = vand.u32 2147483647, %v319
        %vm655 = vcmp.le.f32.partialorder %v654, 0.7853982
        %vm656 = vcmp.lt.s32.totalorder %v319, 0
        %v657 = vand.u32 %v319, 2139095040
        %v658 = vshrl.u32 %v657, 23
        %v659 = vsub.s32 %v658, 127
        %v660 = vand.u32 2147483647, %v319
        %v661 = vand.u32 %v660, 8388607
        %v662 = vor.u32 %v661, 8388608
        %v663 = vsub.s32 0, %v662
        %v664 = vadd.s32 %v659, 1
        %vm665 = vcmp.gt.s32.totalorder %v664, 0
        %v666 = vsel %vm665, %v664, 0
        %v667 = vshrl.u32 %v666, 5
        %v668 = vand.u32 %v666, 31
        %v669 = vsub.s32 32, %v668
        %v670 = vshrl.u32 683565275, %v669
        %v671 = vshll.u32 683565275, %v668
        %v672 = vshrl.u32 2475754826, %v669
        %v673 = vor.u32 %v671, %v672
        %v674 = vshll.u32 2475754826, %v668
        %v675 = vshrl.u32 2131351028, %v669
        %v676 = vor.u32 %v674, %v675
        %v677 = vshll.u32 2131351028, %v668
        %v678 = vshrl.u32 2102212464, %v669
        %v679 = vor.u32 %v677, %v678
        %v680 = vshll.u32 2102212464, %v668
        %v681 = vshrl.u32 920167782, %v669
        %v682 = vor.u32 %v680, %v681
        %v683 = vshll.u32 920167782, %v668
        %v684 = vshrl.u32 1326507024, %v669
        %v685 = vor.u32 %v683, %v684
        %vm686 = vcmp.lt.s32.totalorder %v667, 1
        %vm687 = vcmp.lt.s32.totalorder %v667, 2
        %vm688 = vcmp.lt.s32.totalorder %v667, 3
        %vm689 = vcmp.lt.s32.totalorder %v667, 4
        %v690 = vsel %vm686, %v670, %v673
        %v691 = vsel %vm689, %v679, 2102212464
        %v692 = vsel %vm688, %v676, %v691
        %v693 = vsel %vm687, %v690, %v692
        %v694 = vsel %vm686, %v673, %v676
        %v695 = vsel %vm689, %v682, 920167782
        %v696 = vsel %vm688, %v679, %v695
        %v697 = vsel %vm687, %v694, %v696
        %v698 = vsel %vm686, %v676, %v679
        %v699 = vsel %vm689, %v685, 1326507024
        %v700 = vsel %vm688, %v682, %v699
        %v701 = vsel %vm687, %v698, %v700
        %v702 = vshll.u32 %v662, 8
        %v703 = vmul.u32.u64.compose %v702, %v701
        %v704 = vextract.low.u32 %v703
        %v705 = vextract.high.u32 %v703
        %v706 = vmul.u32.u64.compose %v702, %v697
        %v707 = vextract.low.u32 %v706
        %v708 = vextract.high.u32 %v706
        %v709 = vmul.u32 %v702, %v693
        %v710 = vadd.s32 %v705, %v707
        %vm711 = vc.u32 %v705, %v707
        %v712 = vadd.s32 %v708, 1
        %v713 = vsel %vm711, %v712, %v708
        %v714 = vadd.s32 %v709, %v713
        %v715 = vadd.s32 %v714, 536870912
        %v716 = vshrl.u32 %v715, 30
        %v717 = vshll.u32 %v716, 30
        %v718 = vsub.s32 %v714, %v717
        %vm719 = vcmp.lt.s32.totalorder %v718, 0
        %v720 = vsub.s32 0, %v718
        %v721 = vsel %vm719, %v720, %v718
        %v722 = vclz %v721
        %v723 = vsub.s32 %v722, 2
        %vm724 = vcmp.gt.s32.totalorder 0, %v723
        %v725 = vsel %vm724, 0, %v723
        %v726 = vsub.s32 32, %v725
        %v727 = vshll.u32 %v718, %v725
        %v728 = vshrl.u32 %v710, %v726
        %v729 = vor.u32 %v727, %v728
        %v730 = vsub.s32 4294967266, %v725
        %v731 = vadd.s32 %v730, 127
        %v732 = vshll.u32 %v731, 23
        %v733 = vor.u32 4788187, %v732
        %v734 = vand.u32 2147483647, %v733
        %v736 = vcvt.s32.f32 %v729
        %v737 = vmul.f32 %v736, %v734
        %v738 = vxor.u32 %v737, 2147483648
        %v739 = vsel %vm656, %v738, %v737
        %v740 = vsub.s32 4, %v716
        %v741 = vsel %vm656, %v740, %v716
        %v742 = vsel %vm655, %v319, %v739
        %v743 = vsel %vm655, 0, %v741
        %v744 = vcosq.f32.pop %v742
        %v745 = vsinq.f32.pop %v742
        %vm746 = vweird.f32 %v319
        %v747 = vadd.s32 %v743, 3
        %v748 = vand.u32 %v747, 3
        %vm749 = vcmp.lt.s32.totalorder %v748, 2
        %vm750 = vcmp.eq.s32.totalorder %v748, 0
        %v751 = vxor.u32 %v745, 2147483648
        %v752 = vsel %vm750, %v744, %v751
        %vm753 = vcmp.eq.s32.totalorder %v748, 2
        %v754 = vxor.u32 %v744, 2147483648
        %v755 = vsel %vm753, %v754, %v745
        %v756 = vsel %vm749, %v752, %v755
        %v757 = vsel %vm746, nan, %v756
        %v758 = vand.u32 2147483647, %v324
        %vm759 = vcmp.le.f32.partialorder %v758, 0.7853982
        %vm760 = vcmp.lt.s32.totalorder %v324, 0
        %v761 = vand.u32 %v324, 2139095040
        %v762 = vshrl.u32 %v761, 23
        %v763 = vsub.s32 %v762, 127
        %v764 = vand.u32 2147483647, %v324
        %v765 = vand.u32 %v764, 8388607
        %v766 = vor.u32 %v765, 8388608
        %v767 = vsub.s32 0, %v766
        %v768 = vadd.s32 %v763, 1
        %vm769 = vcmp.gt.s32.totalorder %v768, 0
        %v770 = vsel %vm769, %v768, 0
        %v771 = vshrl.u32 %v770, 5
        %v772 = vand.u32 %v770, 31
        %v773 = vsub.s32 32, %v772
        %v774 = vshrl.u32 683565275, %v773
        %v775 = vshll.u32 683565275, %v772
        %v776 = vshrl.u32 2475754826, %v773
        %v777 = vor.u32 %v775, %v776
        %v778 = vshll.u32 2475754826, %v772
        %v779 = vshrl.u32 2131351028, %v773
        %v780 = vor.u32 %v778, %v779
        %v781 = vshll.u32 2131351028, %v772
        %v782 = vshrl.u32 2102212464, %v773
        %v783 = vor.u32 %v781, %v782
        %v784 = vshll.u32 2102212464, %v772
        %v785 = vshrl.u32 920167782, %v773
        %v786 = vor.u32 %v784, %v785
        %v787 = vshll.u32 920167782, %v772
        %v788 = vshrl.u32 1326507024, %v773
        %v789 = vor.u32 %v787, %v788
        %vm790 = vcmp.lt.s32.totalorder %v771, 1
        %vm791 = vcmp.lt.s32.totalorder %v771, 2
        %vm792 = vcmp.lt.s32.totalorder %v771, 3
        %vm793 = vcmp.lt.s32.totalorder %v771, 4
        %v794 = vsel %vm790, %v774, %v777
        %v795 = vsel %vm793, %v783, 2102212464
        %v796 = vsel %vm792, %v780, %v795
        %v797 = vsel %vm791, %v794, %v796
        %v798 = vsel %vm790, %v777, %v780
        %v799 = vsel %vm793, %v786, 920167782
        %v800 = vsel %vm792, %v783, %v799
        %v801 = vsel %vm791, %v798, %v800
        %v802 = vsel %vm790, %v780, %v783
        %v803 = vsel %vm793, %v789, 1326507024
        %v804 = vsel %vm792, %v786, %v803
        %v805 = vsel %vm791, %v802, %v804
        %v806 = vshll.u32 %v766, 8
        %v807 = vmul.u32.u64.compose %v806, %v805
        %v808 = vextract.low.u32 %v807
        %v809 = vextract.high.u32 %v807
        %v810 = vmul.u32.u64.compose %v806, %v801
        %v811 = vextract.low.u32 %v810
        %v812 = vextract.high.u32 %v810
        %v813 = vmul.u32 %v806, %v797
        %v814 = vadd.s32 %v809, %v811
        %vm815 = vc.u32 %v809, %v811
        %v816 = vadd.s32 %v812, 1
        %v817 = vsel %vm815, %v816, %v812
        %v818 = vadd.s32 %v813, %v817
        %v819 = vadd.s32 %v818, 536870912
        %v820 = vshrl.u32 %v819, 30
        %v821 = vshll.u32 %v820, 30
        %v822 = vsub.s32 %v818, %v821
        %vm823 = vcmp.lt.s32.totalorder %v822, 0
        %v824 = vsub.s32 0, %v822
        %v825 = vsel %vm823, %v824, %v822
        %v826 = vclz %v825
        %v827 = vsub.s32 %v826, 2
        %vm828 = vcmp.gt.s32.totalorder 0, %v827
        %v829 = vsel %vm828, 0, %v827
        %v830 = vsub.s32 32, %v829
        %v831 = vshll.u32 %v822, %v829
        %v832 = vshrl.u32 %v814, %v830
        %v833 = vor.u32 %v831, %v832
        %v834 = vsub.s32 4294967266, %v829
        %v835 = vadd.s32 %v834, 127
        %v836 = vshll.u32 %v835, 23
        %v837 = vor.u32 4788187, %v836
        %v838 = vand.u32 2147483647, %v837
        %v840 = vcvt.s32.f32 %v833
        %v841 = vmul.f32 %v840, %v838
        %v842 = vxor.u32 %v841, 2147483648
        %v843 = vsel %vm760, %v842, %v841
        %v844 = vsub.s32 4, %v820
        %v845 = vsel %vm760, %v844, %v820
        %v846 = vsel %vm759, %v324, %v843
        %v847 = vsel %vm759, 0, %v845
        %v848 = vcosq.f32.pop %v846
        %v849 = vsinq.f32.pop %v846
        %vm850 = vweird.f32 %v324
        %v851 = vadd.s32 %v847, 3
        %v852 = vand.u32 %v851, 3
        %vm853 = vcmp.lt.s32.totalorder %v852, 2
        %vm854 = vcmp.eq.s32.totalorder %v852, 0
        %v855 = vxor.u32 %v849, 2147483648
        %v856 = vsel %vm854, %v848, %v855
        %vm857 = vcmp.eq.s32.totalorder %v852, 2
        %v858 = vxor.u32 %v848, 2147483648
        %v859 = vsel %vm857, %v858, %v849
        %v860 = vsel %vm853, %v856, %v859
        %v861 = vsel %vm850, nan, %v860
        %v862 = vand.u32 2147483647, %v329
        %vm863 = vcmp.le.f32.partialorder %v862, 0.7853982
        %vm864 = vcmp.lt.s32.totalorder %v329, 0
        %v865 = vand.u32 %v329, 2139095040
        %v866 = vshrl.u32 %v865, 23
        %v867 = vsub.s32 %v866, 127
        %v868 = vand.u32 2147483647, %v329
        %v869 = vand.u32 %v868, 8388607
        %v870 = vor.u32 %v869, 8388608
        %v871 = vsub.s32 0, %v870
        %v872 = vadd.s32 %v867, 1
        %vm873 = vcmp.gt.s32.totalorder %v872, 0
        %v874 = vsel %vm873, %v872, 0
        %v875 = vshrl.u32 %v874, 5
        %v876 = vand.u32 %v874, 31
        %v877 = vsub.s32 32, %v876
        %v878 = vshrl.u32 683565275, %v877
        %v879 = vshll.u32 683565275, %v876
        %v880 = vshrl.u32 2475754826, %v877
        %v881 = vor.u32 %v879, %v880
        %v882 = vshll.u32 2475754826, %v876
        %v883 = vshrl.u32 2131351028, %v877
        %v884 = vor.u32 %v882, %v883
        %v885 = vshll.u32 2131351028, %v876
        %v886 = vshrl.u32 2102212464, %v877
        %v887 = vor.u32 %v885, %v886
        %v888 = vshll.u32 2102212464, %v876
        %v889 = vshrl.u32 920167782, %v877
        %v890 = vor.u32 %v888, %v889
        %v891 = vshll.u32 920167782, %v876
        %v892 = vshrl.u32 1326507024, %v877
        %v893 = vor.u32 %v891, %v892
        %vm894 = vcmp.lt.s32.totalorder %v875, 1
        %vm895 = vcmp.lt.s32.totalorder %v875, 2
        %vm896 = vcmp.lt.s32.totalorder %v875, 3
        %vm897 = vcmp.lt.s32.totalorder %v875, 4
        %v898 = vsel %vm894, %v878, %v881
        %v899 = vsel %vm897, %v887, 2102212464
        %v900 = vsel %vm896, %v884, %v899
        %v901 = vsel %vm895, %v898, %v900
        %v902 = vsel %vm894, %v881, %v884
        %v903 = vsel %vm897, %v890, 920167782
        %v904 = vsel %vm896, %v887, %v903
        %v905 = vsel %vm895, %v902, %v904
        %v906 = vsel %vm894, %v884, %v887
        %v907 = vsel %vm897, %v893, 1326507024
        %v908 = vsel %vm896, %v890, %v907
        %v909 = vsel %vm895, %v906, %v908
        %v910 = vshll.u32 %v870, 8
        %v911 = vmul.u32.u64.compose %v910, %v909
        %v912 = vextract.low.u32 %v911
        %v913 = vextract.high.u32 %v911
        %v914 = vmul.u32.u64.compose %v910, %v905
        %v915 = vextract.low.u32 %v914
        %v916 = vextract.high.u32 %v914
        %v917 = vmul.u32 %v910, %v901
        %v918 = vadd.s32 %v913, %v915
        %vm919 = vc.u32 %v913, %v915
        %v920 = vadd.s32 %v916, 1
        %v921 = vsel %vm919, %v920, %v916
        %v922 = vadd.s32 %v917, %v921
        %v923 = vadd.s32 %v922, 536870912
        %v924 = vshrl.u32 %v923, 30
        %v925 = vshll.u32 %v924, 30
        %v926 = vsub.s32 %v922, %v925
        %vm927 = vcmp.lt.s32.totalorder %v926, 0
        %v928 = vsub.s32 0, %v926
        %v929 = vsel %vm927, %v928, %v926
        %v930 = vclz %v929
        %v931 = vsub.s32 %v930, 2
        %vm932 = vcmp.gt.s32.totalorder 0, %v931
        %v933 = vsel %vm932, 0, %v931
        %v934 = vsub.s32 32, %v933
        %v935 = vshll.u32 %v926, %v933
        %v936 = vshrl.u32 %v918, %v934
        %v937 = vor.u32 %v935, %v936
        %v938 = vsub.s32 4294967266, %v933
        %v939 = vadd.s32 %v938, 127
        %v940 = vshll.u32 %v939, 23
        %v941 = vor.u32 4788187, %v940
        %v942 = vand.u32 2147483647, %v941
        %v944 = vcvt.s32.f32 %v937
        %v945 = vmul.f32 %v944, %v942
        %v946 = vxor.u32 %v945, 2147483648
        %v947 = vsel %vm864, %v946, %v945
        %v948 = vsub.s32 4, %v924
        %v949 = vsel %vm864, %v948, %v924
        %v950 = vsel %vm863, %v329, %v947
        %v951 = vsel %vm863, 0, %v949
        %v952 = vcosq.f32.pop %v950
        %v953 = vsinq.f32.pop %v950
        %vm954 = vweird.f32 %v329
        %v955 = vadd.s32 %v951, 3
        %v956 = vand.u32 %v955, 3
        %vm957 = vcmp.lt.s32.totalorder %v956, 2
        %vm958 = vcmp.eq.s32.totalorder %v956, 0
        %v959 = vxor.u32 %v953, 2147483648
        %v960 = vsel %vm958, %v952, %v959
        %vm961 = vcmp.eq.s32.totalorder %v956, 2
        %v962 = vxor.u32 %v952, 2147483648
        %v963 = vsel %vm961, %v962, %v953
        %v964 = vsel %vm957, %v960, %v963
        %v965 = vsel %vm954, nan, %v964
        %v966 = vand.u32 2147483647, %v334
        %vm967 = vcmp.le.f32.partialorder %v966, 0.7853982
        %vm968 = vcmp.lt.s32.totalorder %v334, 0
        %v969 = vand.u32 %v334, 2139095040
        %v970 = vshrl.u32 %v969, 23
        %v971 = vsub.s32 %v970, 127
        %v972 = vand.u32 2147483647, %v334
        %v973 = vand.u32 %v972, 8388607
        %v974 = vor.u32 %v973, 8388608
        %v975 = vsub.s32 0, %v974
        %v976 = vadd.s32 %v971, 1
        %vm977 = vcmp.gt.s32.totalorder %v976, 0
        %v978 = vsel %vm977, %v976, 0
        %v979 = vshrl.u32 %v978, 5
        %v980 = vand.u32 %v978, 31
        %v981 = vsub.s32 32, %v980
        %v982 = vshrl.u32 683565275, %v981
        %v983 = vshll.u32 683565275, %v980
        %v984 = vshrl.u32 2475754826, %v981
        %v985 = vor.u32 %v983, %v984
        %v986 = vshll.u32 2475754826, %v980
        %v987 = vshrl.u32 2131351028, %v981
        %v988 = vor.u32 %v986, %v987
        %v989 = vshll.u32 2131351028, %v980
        %v990 = vshrl.u32 2102212464, %v981
        %v991 = vor.u32 %v989, %v990
        %v992 = vshll.u32 2102212464, %v980
        %v993 = vshrl.u32 920167782, %v981
        %v994 = vor.u32 %v992, %v993
        %v995 = vshll.u32 920167782, %v980
        %v996 = vshrl.u32 1326507024, %v981
        %v997 = vor.u32 %v995, %v996
        %vm998 = vcmp.lt.s32.totalorder %v979, 1
        %vm999 = vcmp.lt.s32.totalorder %v979, 2
        %vm1000 = vcmp.lt.s32.totalorder %v979, 3
        %vm1001 = vcmp.lt.s32.totalorder %v979, 4
        %v1002 = vsel %vm998, %v982, %v985
        %v1003 = vsel %vm1001, %v991, 2102212464
        %v1004 = vsel %vm1000, %v988, %v1003
        %v1005 = vsel %vm999, %v1002, %v1004
        %v1006 = vsel %vm998, %v985, %v988
        %v1007 = vsel %vm1001, %v994, 920167782
        %v1008 = vsel %vm1000, %v991, %v1007
        %v1009 = vsel %vm999, %v1006, %v1008
        %v1010 = vsel %vm998, %v988, %v991
        %v1011 = vsel %vm1001, %v997, 1326507024
        %v1012 = vsel %vm1000, %v994, %v1011
        %v1013 = vsel %vm999, %v1010, %v1012
        %v1014 = vshll.u32 %v974, 8
        %v1015 = vmul.u32.u64.compose %v1014, %v1013
        %v1016 = vextract.low.u32 %v1015
        %v1017 = vextract.high.u32 %v1015
        %v1018 = vmul.u32.u64.compose %v1014, %v1009
        %v1019 = vextract.low.u32 %v1018
        %v1020 = vextract.high.u32 %v1018
        %v1021 = vmul.u32 %v1014, %v1005
        %v1022 = vadd.s32 %v1017, %v1019
        %vm1023 = vc.u32 %v1017, %v1019
        %v1024 = vadd.s32 %v1020, 1
        %v1025 = vsel %vm1023, %v1024, %v1020
        %v1026 = vadd.s32 %v1021, %v1025
        %v1027 = vadd.s32 %v1026, 536870912
        %v1028 = vshrl.u32 %v1027, 30
        %v1029 = vshll.u32 %v1028, 30
        %v1030 = vsub.s32 %v1026, %v1029
        %vm1031 = vcmp.lt.s32.totalorder %v1030, 0
        %v1032 = vsub.s32 0, %v1030
        %v1033 = vsel %vm1031, %v1032, %v1030
        %v1034 = vclz %v1033
        %v1035 = vsub.s32 %v1034, 2
        %vm1036 = vcmp.gt.s32.totalorder 0, %v1035
        %v1037 = vsel %vm1036, 0, %v1035
        %v1038 = vsub.s32 32, %v1037
        %v1039 = vshll.u32 %v1030, %v1037
        %v1040 = vshrl.u32 %v1022, %v1038
        %v1041 = vor.u32 %v1039, %v1040
        %v1042 = vsub.s32 4294967266, %v1037
        %v1043 = vadd.s32 %v1042, 127
        %v1044 = vshll.u32 %v1043, 23
        %v1045 = vor.u32 4788187, %v1044
        %v1046 = vand.u32 2147483647, %v1045
        %v1048 = vcvt.s32.f32 %v1041
        %v1049 = vmul.f32 %v1048, %v1046
        %v1050 = vxor.u32 %v1049, 2147483648
        %v1051 = vsel %vm968, %v1050, %v1049
        %v1052 = vsub.s32 4, %v1028
        %v1053 = vsel %vm968, %v1052, %v1028
        %v1054 = vsel %vm967, %v334, %v1051
        %v1055 = vsel %vm967, 0, %v1053
        %v1056 = vcosq.f32.pop %v1054
        %v1057 = vsinq.f32.pop %v1054
        %vm1058 = vweird.f32 %v334
        %v1059 = vadd.s32 %v1055, 3
        %v1060 = vand.u32 %v1059, 3
        %vm1061 = vcmp.lt.s32.totalorder %v1060, 2
        %vm1062 = vcmp.eq.s32.totalorder %v1060, 0
        %v1063 = vxor.u32 %v1057, 2147483648
        %v1064 = vsel %vm1062, %v1056, %v1063
        %vm1065 = vcmp.eq.s32.totalorder %v1060, 2
        %v1066 = vxor.u32 %v1056, 2147483648
        %v1067 = vsel %vm1065, %v1066, %v1057
        %v1068 = vsel %vm1061, %v1064, %v1067
        %v1069 = vsel %vm1058, nan, %v1068
        %v1070 = vand.u32 2147483647, %v339
        %vm1071 = vcmp.le.f32.partialorder %v1070, 0.7853982
        %vm1072 = vcmp.lt.s32.totalorder %v339, 0
        %v1073 = vand.u32 %v339, 2139095040
        %v1074 = vshrl.u32 %v1073, 23
        %v1075 = vsub.s32 %v1074, 127
        %v1076 = vand.u32 2147483647, %v339
        %v1077 = vand.u32 %v1076, 8388607
        %v1078 = vor.u32 %v1077, 8388608
        %v1079 = vsub.s32 0, %v1078
        %v1080 = vadd.s32 %v1075, 1
        %vm1081 = vcmp.gt.s32.totalorder %v1080, 0
        %v1082 = vsel %vm1081, %v1080, 0
        %v1083 = vshrl.u32 %v1082, 5
        %v1084 = vand.u32 %v1082, 31
        %v1085 = vsub.s32 32, %v1084
        %v1086 = vshrl.u32 683565275, %v1085
        %v1087 = vshll.u32 683565275, %v1084
        %v1088 = vshrl.u32 2475754826, %v1085
        %v1089 = vor.u32 %v1087, %v1088
        %v1090 = vshll.u32 2475754826, %v1084
        %v1091 = vshrl.u32 2131351028, %v1085
        %v1092 = vor.u32 %v1090, %v1091
        %v1093 = vshll.u32 2131351028, %v1084
        %v1094 = vshrl.u32 2102212464, %v1085
        %v1095 = vor.u32 %v1093, %v1094
        %v1096 = vshll.u32 2102212464, %v1084
        %v1097 = vshrl.u32 920167782, %v1085
        %v1098 = vor.u32 %v1096, %v1097
        %v1099 = vshll.u32 920167782, %v1084
        %v1100 = vshrl.u32 1326507024, %v1085
        %v1101 = vor.u32 %v1099, %v1100
        %vm1102 = vcmp.lt.s32.totalorder %v1083, 1
        %vm1103 = vcmp.lt.s32.totalorder %v1083, 2
        %vm1104 = vcmp.lt.s32.totalorder %v1083, 3
        %vm1105 = vcmp.lt.s32.totalorder %v1083, 4
        %v1106 = vsel %vm1102, %v1086, %v1089
        %v1107 = vsel %vm1105, %v1095, 2102212464
        %v1108 = vsel %vm1104, %v1092, %v1107
        %v1109 = vsel %vm1103, %v1106, %v1108
        %v1110 = vsel %vm1102, %v1089, %v1092
        %v1111 = vsel %vm1105, %v1098, 920167782
        %v1112 = vsel %vm1104, %v1095, %v1111
        %v1113 = vsel %vm1103, %v1110, %v1112
        %v1114 = vsel %vm1102, %v1092, %v1095
        %v1115 = vsel %vm1105, %v1101, 1326507024
        %v1116 = vsel %vm1104, %v1098, %v1115
        %v1117 = vsel %vm1103, %v1114, %v1116
        %v1118 = vshll.u32 %v1078, 8
        %v1119 = vmul.u32.u64.compose %v1118, %v1117
        %v1120 = vextract.low.u32 %v1119
        %v1121 = vextract.high.u32 %v1119
        %v1122 = vmul.u32.u64.compose %v1118, %v1113
        %v1123 = vextract.low.u32 %v1122
        %v1124 = vextract.high.u32 %v1122
        %v1125 = vmul.u32 %v1118, %v1109
        %v1126 = vadd.s32 %v1121, %v1123
        %vm1127 = vc.u32 %v1121, %v1123
        %v1128 = vadd.s32 %v1124, 1
        %v1129 = vsel %vm1127, %v1128, %v1124
        %v1130 = vadd.s32 %v1125, %v1129
        %v1131 = vadd.s32 %v1130, 536870912
        %v1132 = vshrl.u32 %v1131, 30
        %v1133 = vshll.u32 %v1132, 30
        %v1134 = vsub.s32 %v1130, %v1133
        %vm1135 = vcmp.lt.s32.totalorder %v1134, 0
        %v1136 = vsub.s32 0, %v1134
        %v1137 = vsel %vm1135, %v1136, %v1134
        %v1138 = vclz %v1137
        %v1139 = vsub.s32 %v1138, 2
        %vm1140 = vcmp.gt.s32.totalorder 0, %v1139
        %v1141 = vsel %vm1140, 0, %v1139
        %v1142 = vsub.s32 32, %v1141
        %v1143 = vshll.u32 %v1134, %v1141
        %v1144 = vshrl.u32 %v1126, %v1142
        %v1145 = vor.u32 %v1143, %v1144
        %v1146 = vsub.s32 4294967266, %v1141
        %v1147 = vadd.s32 %v1146, 127
        %v1148 = vshll.u32 %v1147, 23
        %v1149 = vor.u32 4788187, %v1148
        %v1150 = vand.u32 2147483647, %v1149
        %v1152 = vcvt.s32.f32 %v1145
        %v1153 = vmul.f32 %v1152, %v1150
        %v1154 = vxor.u32 %v1153, 2147483648
        %v1155 = vsel %vm1072, %v1154, %v1153
        %v1156 = vsub.s32 4, %v1132
        %v1157 = vsel %vm1072, %v1156, %v1132
        %v1158 = vsel %vm1071, %v339, %v1155
        %v1159 = vsel %vm1071, 0, %v1157
        %v1160 = vcosq.f32.pop %v1158
        %v1161 = vsinq.f32.pop %v1158
        %vm1162 = vweird.f32 %v339
        %v1163 = vadd.s32 %v1159, 3
        %v1164 = vand.u32 %v1163, 3
        %vm1165 = vcmp.lt.s32.totalorder %v1164, 2
        %vm1166 = vcmp.eq.s32.totalorder %v1164, 0
        %v1167 = vxor.u32 %v1161, 2147483648
        %v1168 = vsel %vm1166, %v1160, %v1167
        %vm1169 = vcmp.eq.s32.totalorder %v1164, 2
        %v1170 = vxor.u32 %v1160, 2147483648
        %v1171 = vsel %vm1169, %v1170, %v1161
        %v1172 = vsel %vm1165, %v1168, %v1171
        %v1173 = vsel %vm1162, nan, %v1172
        %s1174 = scalar_lea.vmem [#allocation5], 128
        %v1175 = vld [vmem:[%s1174] sm:$0xff]
        %v1176 = vld [vmem:[%s1174 + $0x8] sm:$0xff]
        %v1177 = vld [vmem:[%s1174 + $0x10] sm:$0xff]
        %v1178 = vld [vmem:[%s1174 + $0x18] sm:$0xff]
        %v1179 = vld [vmem:[%s1174 + $0x20] sm:$0xff]
        %v1180 = vld [vmem:[%s1174 + $0x28] sm:$0xff]
        %v1181 = vld [vmem:[%s1174 + $0x30] sm:$0xff]
        %v1182 = vld [vmem:[%s1174 + $0x38] sm:$0xff]
        %v1183 = vld [vmem:[%s1174 + $0x40] sm:$0xff]
        %v1184 = vld [vmem:[%s1174 + $0x48] sm:$0xff]
        %v1185 = vld [vmem:[%s1174 + $0x50] sm:$0xff]
        %v1186 = vld [vmem:[%s1174 + $0x58] sm:$0xff]
        %v1187 = vld [vmem:[%s1174 + $0x60] sm:$0xff]
        %v1188 = vld [vmem:[%s1174 + $0x68] sm:$0xff]
        %v1189 = vld [vmem:[%s1174 + $0x70] sm:$0xff]
        %v1190 = vld [vmem:[%s1174 + $0x78] sm:$0xff]
        %s1191 = scalar_lea.vmem %s2, 1
        %v1192 = vld [vmem:[%s1191] sm:$0x1]
        %v1194 = vlaneseq
        %v1195 = vshrl.u32 %v1194, 7
        %v1196 = vsub.s32 0, %v1195
        %v1197 = vrot.slane %v1192, %v1196
        %1199 = vmatprep.subr.mxu0 0.0
        %1200 = vmatpush1.msra.mxu0 %v1175
        %1201 = vmatprep.subr.mxu0 0.0
        %1202 = vmatpush1.msra.mxu0 %v1176
        %1203 = vmatprep.subr.mxu0 0.0
        %1204 = vmatpush1.msra.mxu0 %v1177
        %1205 = vmatprep.subr.mxu0 0.0
        %1206 = vmatpush1.msra.mxu0 %v1178
        %1207 = vmatprep.subr.mxu0 0.0
        %1208 = vmatpush1.msra.mxu0 %v1179
        %1209 = vmatprep.subr.mxu0 0.0
        %1210 = vmatpush1.msra.mxu0 %v1180
        %1211 = vmatprep.subr.mxu0 0.0
        %1212 = vmatpush1.msra.mxu0 %v1181
        %1213 = vmatprep.subr.mxu0 0.0
        %1214 = vmatpush1.msra.mxu0 %v1182
        %1215 = vmatprep.subr.mxu0 0.0
        %1216 = vmatpush1.msra.mxu0 %v1183
        %1217 = vmatprep.subr.mxu0 0.0
        %1218 = vmatpush1.msra.mxu0 %v1184
        %1219 = vmatprep.subr.mxu0 0.0
        %1220 = vmatpush1.msra.mxu0 %v1185
        %1221 = vmatprep.subr.mxu0 0.0
        %1222 = vmatpush1.msra.mxu0 %v1186
        %1223 = vmatprep.subr.mxu0 0.0
        %1224 = vmatpush1.msra.mxu0 %v1187
        %1225 = vmatprep.subr.mxu0 0.0
        %1226 = vmatpush1.msra.mxu0 %v1188
        %1227 = vmatprep.subr.mxu0 0.0
        %1228 = vmatpush1.msra.mxu0 %v1189
        %1229 = vmatprep.subr.mxu0 0.0
        %1230 = vmatpush1.msra.mxu0 %v1190
        %1231 = vmatprep.subr.mxu0 0.0
        %1232 = vmatpush1.msra.mxu0 0.0
        %1233 = vmatprep.subr.mxu0 0.0
        %1234 = vmatpush1.msra.mxu0 0.0
        %1235 = vmatprep.subr.mxu0 0.0
        %1236 = vmatpush1.msra.mxu0 0.0
        %1237 = vmatprep.subr.mxu0 0.0
        %1238 = vmatpush1.msra.mxu0 0.0
        %1239 = vmatprep.subr.mxu0 0.0
        %1240 = vmatpush1.msra.mxu0 0.0
        %1241 = vmatprep.subr.mxu0 0.0
        %1242 = vmatpush1.msra.mxu0 0.0
        %1243 = vmatprep.subr.mxu0 0.0
        %1244 = vmatpush1.msra.mxu0 0.0
        %1245 = vmatprep.subr.mxu0 0.0
        %1246 = vmatpush1.msra.mxu0 0.0
        %1247 = vmatprep.subr.mxu0 0.0
        %1248 = vmatpush1.msra.mxu0 0.0
        %1249 = vmatprep.subr.mxu0 0.0
        %1250 = vmatpush1.msra.mxu0 0.0
        %1251 = vmatprep.subr.mxu0 0.0
        %1252 = vmatpush1.msra.mxu0 0.0
        %1253 = vmatprep.subr.mxu0 0.0
        %1254 = vmatpush1.msra.mxu0 0.0
        %1255 = vmatprep.subr.mxu0 0.0
        %1256 = vmatpush1.msra.mxu0 0.0
        %1257 = vmatprep.subr.mxu0 0.0
        %1258 = vmatpush1.msra.mxu0 0.0
        %1259 = vmatprep.subr.mxu0 0.0
        %1260 = vmatpush1.msra.mxu0 0.0
        %1261 = vmatprep.subr.mxu0 0.0
        %1262 = vmatpush1.msra.mxu0 0.0
        %1263 = vmatprep.mubr.f32.mxu0 0.0
        %1264 = vmatmul.mubr.f32.gmra.mrb[0].mxu0 %v445
        %v1265 = vpop.f32.mrb[0].mxu0
        %v1266 = vadd.f32 %v1197, %v1265
        %v1267 = vpop.f32.mrb[0].mxu0
        %1268 = vmatprep.mubr.f32.mxu0 0.0
        %1269 = vmatmul.mubr.f32.gmra.mrb[0].mxu0 %v549
        %v1270 = vpop.f32.mrb[0].mxu0
        %v1271 = vadd.f32 %v1197, %v1270
        %v1272 = vpop.f32.mrb[0].mxu0
        %1273 = vmatprep.mubr.f32.mxu0 0.0
        %1274 = vmatmul.mubr.f32.gmra.mrb[0].mxu0 %v653
        %v1275 = vpop.f32.mrb[0].mxu0
        %v1276 = vadd.f32 %v1197, %v1275
        %v1277 = vpop.f32.mrb[0].mxu0
        %1278 = vmatprep.mubr.f32.mxu0 0.0
        %1279 = vmatmul.mubr.f32.gmra.mrb[0].mxu0 %v757
        %v1280 = vpop.f32.mrb[0].mxu0
        %v1281 = vadd.f32 %v1197, %v1280
        %v1282 = vpop.f32.mrb[0].mxu0
        %1283 = vmatprep.mubr.f32.mxu0 0.0
        %1284 = vmatmul.mubr.f32.gmra.mrb[0].mxu0 %v861
        %v1285 = vpop.f32.mrb[0].mxu0
        %v1286 = vadd.f32 %v1197, %v1285
        %v1287 = vpop.f32.mrb[0].mxu0
        %1288 = vmatprep.mubr.f32.mxu0 0.0
        %1289 = vmatmul.mubr.f32.gmra.mrb[0].mxu0 %v965
        %v1290 = vpop.f32.mrb[0].mxu0
        %v1291 = vadd.f32 %v1197, %v1290
        %v1292 = vpop.f32.mrb[0].mxu0
        %1293 = vmatprep.mubr.f32.mxu0 0.0
        %1294 = vmatmul.mubr.f32.gmra.mrb[0].mxu0 %v1069
        %v1295 = vpop.f32.mrb[0].mxu0
        %v1296 = vadd.f32 %v1197, %v1295
        %v1297 = vpop.f32.mrb[0].mxu0
        %1298 = vmatprep.mubr.f32.mxu0 0.0
        %1299 = vmatmul.mubr.f32.gmra.mrb[0].mxu0 %v1173
        %v1300 = vpop.f32.mrb[0].mxu0
        %v1301 = vadd.f32 %v1197, %v1300
        %v1302 = vpop.f32.mrb[0].mxu0
        %1303 = vdwg.mxu0
        %v1304 = vand.u32 2147483647, %v1266
        %vm1305 = vcmp.le.f32.partialorder %v1304, 0.7853982
        %vm1306 = vcmp.lt.s32.totalorder %v1266, 0
        %v1307 = vand.u32 %v1266, 2139095040
        %v1308 = vshrl.u32 %v1307, 23
        %v1309 = vsub.s32 %v1308, 127
        %v1310 = vand.u32 2147483647, %v1266
        %v1311 = vand.u32 %v1310, 8388607
        %v1312 = vor.u32 %v1311, 8388608
        %v1313 = vsub.s32 0, %v1312
        %v1314 = vadd.s32 %v1309, 1
        %vm1315 = vcmp.gt.s32.totalorder %v1314, 0
        %v1316 = vsel %vm1315, %v1314, 0
        %v1317 = vshrl.u32 %v1316, 5
        %v1318 = vand.u32 %v1316, 31
        %v1319 = vsub.s32 32, %v1318
        %v1320 = vshrl.u32 683565275, %v1319
        %v1321 = vshll.u32 683565275, %v1318
        %v1322 = vshrl.u32 2475754826, %v1319
        %v1323 = vor.u32 %v1321, %v1322
        %v1324 = vshll.u32 2475754826, %v1318
        %v1325 = vshrl.u32 2131351028, %v1319
        %v1326 = vor.u32 %v1324, %v1325
        %v1327 = vshll.u32 2131351028, %v1318
        %v1328 = vshrl.u32 2102212464, %v1319
        %v1329 = vor.u32 %v1327, %v1328
        %v1330 = vshll.u32 2102212464, %v1318
        %v1331 = vshrl.u32 920167782, %v1319
        %v1332 = vor.u32 %v1330, %v1331
        %v1333 = vshll.u32 920167782, %v1318
        %v1334 = vshrl.u32 1326507024, %v1319
        %v1335 = vor.u32 %v1333, %v1334
        %vm1336 = vcmp.lt.s32.totalorder %v1317, 1
        %vm1337 = vcmp.lt.s32.totalorder %v1317, 2
        %vm1338 = vcmp.lt.s32.totalorder %v1317, 3
        %vm1339 = vcmp.lt.s32.totalorder %v1317, 4
        %v1340 = vsel %vm1336, %v1320, %v1323
        %v1341 = vsel %vm1339, %v1329, 2102212464
        %v1342 = vsel %vm1338, %v1326, %v1341
        %v1343 = vsel %vm1337, %v1340, %v1342
        %v1344 = vsel %vm1336, %v1323, %v1326
        %v1345 = vsel %vm1339, %v1332, 920167782
        %v1346 = vsel %vm1338, %v1329, %v1345
        %v1347 = vsel %vm1337, %v1344, %v1346
        %v1348 = vsel %vm1336, %v1326, %v1329
        %v1349 = vsel %vm1339, %v1335, 1326507024
        %v1350 = vsel %vm1338, %v1332, %v1349
        %v1351 = vsel %vm1337, %v1348, %v1350
        %v1352 = vshll.u32 %v1312, 8
        %v1353 = vmul.u32.u64.compose %v1352, %v1351
        %v1354 = vextract.low.u32 %v1353
        %v1355 = vextract.high.u32 %v1353
        %v1356 = vmul.u32.u64.compose %v1352, %v1347
        %v1357 = vextract.low.u32 %v1356
        %v1358 = vextract.high.u32 %v1356
        %v1359 = vmul.u32 %v1352, %v1343
        %v1360 = vadd.s32 %v1355, %v1357
        %vm1361 = vc.u32 %v1355, %v1357
        %v1362 = vadd.s32 %v1358, 1
        %v1363 = vsel %vm1361, %v1362, %v1358
        %v1364 = vadd.s32 %v1359, %v1363
        %v1365 = vadd.s32 %v1364, 536870912
        %v1366 = vshrl.u32 %v1365, 30
        %v1367 = vshll.u32 %v1366, 30
        %v1368 = vsub.s32 %v1364, %v1367
        %vm1369 = vcmp.lt.s32.totalorder %v1368, 0
        %v1370 = vsub.s32 0, %v1368
        %v1371 = vsel %vm1369, %v1370, %v1368
        %v1372 = vclz %v1371
        %v1373 = vsub.s32 %v1372, 2
        %vm1374 = vcmp.gt.s32.totalorder 0, %v1373
        %v1375 = vsel %vm1374, 0, %v1373
        %v1376 = vsub.s32 32, %v1375
        %v1377 = vshll.u32 %v1368, %v1375
        %v1378 = vshrl.u32 %v1360, %v1376
        %v1379 = vor.u32 %v1377, %v1378
        %v1380 = vsub.s32 4294967266, %v1375
        %v1381 = vadd.s32 %v1380, 127
        %v1382 = vshll.u32 %v1381, 23
        %v1383 = vor.u32 4788187, %v1382
        %v1384 = vand.u32 2147483647, %v1383
        %v1386 = vcvt.s32.f32 %v1379
        %v1387 = vmul.f32 %v1386, %v1384
        %v1388 = vxor.u32 %v1387, 2147483648
        %v1389 = vsel %vm1306, %v1388, %v1387
        %v1390 = vsub.s32 4, %v1366
        %v1391 = vsel %vm1306, %v1390, %v1366
        %v1392 = vsel %vm1305, %v1266, %v1389
        %v1393 = vsel %vm1305, 0, %v1391
        %v1394 = vcosq.f32.pop %v1392
        %v1395 = vsinq.f32.pop %v1392
        %vm1396 = vweird.f32 %v1266
        %v1397 = vadd.s32 %v1393, 3
        %v1398 = vand.u32 %v1397, 3
        %vm1399 = vcmp.lt.s32.totalorder %v1398, 2
        %vm1400 = vcmp.eq.s32.totalorder %v1398, 0
        %v1401 = vxor.u32 %v1395, 2147483648
        %v1402 = vsel %vm1400, %v1394, %v1401
        %vm1403 = vcmp.eq.s32.totalorder %v1398, 2
        %v1404 = vxor.u32 %v1394, 2147483648
        %v1405 = vsel %vm1403, %v1404, %v1395
        %v1406 = vsel %vm1399, %v1402, %v1405
        %v1407 = vsel %vm1396, nan, %v1406
        %v1408 = vand.u32 2147483647, %v1271
        %vm1409 = vcmp.le.f32.partialorder %v1408, 0.7853982
        %vm1410 = vcmp.lt.s32.totalorder %v1271, 0
        %v1411 = vand.u32 %v1271, 2139095040
        %v1412 = vshrl.u32 %v1411, 23
        %v1413 = vsub.s32 %v1412, 127
        %v1414 = vand.u32 2147483647, %v1271
        %v1415 = vand.u32 %v1414, 8388607
        %v1416 = vor.u32 %v1415, 8388608
        %v1417 = vsub.s32 0, %v1416
        %v1418 = vadd.s32 %v1413, 1
        %vm1419 = vcmp.gt.s32.totalorder %v1418, 0
        %v1420 = vsel %vm1419, %v1418, 0
        %v1421 = vshrl.u32 %v1420, 5
        %v1422 = vand.u32 %v1420, 31
        %v1423 = vsub.s32 32, %v1422
        %v1424 = vshrl.u32 683565275, %v1423
        %v1425 = vshll.u32 683565275, %v1422
        %v1426 = vshrl.u32 2475754826, %v1423
        %v1427 = vor.u32 %v1425, %v1426
        %v1428 = vshll.u32 2475754826, %v1422
        %v1429 = vshrl.u32 2131351028, %v1423
        %v1430 = vor.u32 %v1428, %v1429
        %v1431 = vshll.u32 2131351028, %v1422
        %v1432 = vshrl.u32 2102212464, %v1423
        %v1433 = vor.u32 %v1431, %v1432
        %v1434 = vshll.u32 2102212464, %v1422
        %v1435 = vshrl.u32 920167782, %v1423
        %v1436 = vor.u32 %v1434, %v1435
        %v1437 = vshll.u32 920167782, %v1422
        %v1438 = vshrl.u32 1326507024, %v1423
        %v1439 = vor.u32 %v1437, %v1438
        %vm1440 = vcmp.lt.s32.totalorder %v1421, 1
        %vm1441 = vcmp.lt.s32.totalorder %v1421, 2
        %vm1442 = vcmp.lt.s32.totalorder %v1421, 3
        %vm1443 = vcmp.lt.s32.totalorder %v1421, 4
        %v1444 = vsel %vm1440, %v1424, %v1427
        %v1445 = vsel %vm1443, %v1433, 2102212464
        %v1446 = vsel %vm1442, %v1430, %v1445
        %v1447 = vsel %vm1441, %v1444, %v1446
        %v1448 = vsel %vm1440, %v1427, %v1430
        %v1449 = vsel %vm1443, %v1436, 920167782
        %v1450 = vsel %vm1442, %v1433, %v1449
        %v1451 = vsel %vm1441, %v1448, %v1450
        %v1452 = vsel %vm1440, %v1430, %v1433
        %v1453 = vsel %vm1443, %v1439, 1326507024
        %v1454 = vsel %vm1442, %v1436, %v1453
        %v1455 = vsel %vm1441, %v1452, %v1454
        %v1456 = vshll.u32 %v1416, 8
        %v1457 = vmul.u32.u64.compose %v1456, %v1455
        %v1458 = vextract.low.u32 %v1457
        %v1459 = vextract.high.u32 %v1457
        %v1460 = vmul.u32.u64.compose %v1456, %v1451
        %v1461 = vextract.low.u32 %v1460
        %v1462 = vextract.high.u32 %v1460
        %v1463 = vmul.u32 %v1456, %v1447
        %v1464 = vadd.s32 %v1459, %v1461
        %vm1465 = vc.u32 %v1459, %v1461
        %v1466 = vadd.s32 %v1462, 1
        %v1467 = vsel %vm1465, %v1466, %v1462
        %v1468 = vadd.s32 %v1463, %v1467
        %v1469 = vadd.s32 %v1468, 536870912
        %v1470 = vshrl.u32 %v1469, 30
        %v1471 = vshll.u32 %v1470, 30
        %v1472 = vsub.s32 %v1468, %v1471
        %vm1473 = vcmp.lt.s32.totalorder %v1472, 0
        %v1474 = vsub.s32 0, %v1472
        %v1475 = vsel %vm1473, %v1474, %v1472
        %v1476 = vclz %v1475
        %v1477 = vsub.s32 %v1476, 2
        %vm1478 = vcmp.gt.s32.totalorder 0, %v1477
        %v1479 = vsel %vm1478, 0, %v1477
        %v1480 = vsub.s32 32, %v1479
        %v1481 = vshll.u32 %v1472, %v1479
        %v1482 = vshrl.u32 %v1464, %v1480
        %v1483 = vor.u32 %v1481, %v1482
        %v1484 = vsub.s32 4294967266, %v1479
        %v1485 = vadd.s32 %v1484, 127
        %v1486 = vshll.u32 %v1485, 23
        %v1487 = vor.u32 4788187, %v1486
        %v1488 = vand.u32 2147483647, %v1487
        %v1490 = vcvt.s32.f32 %v1483
        %v1491 = vmul.f32 %v1490, %v1488
        %v1492 = vxor.u32 %v1491, 2147483648
        %v1493 = vsel %vm1410, %v1492, %v1491
        %v1494 = vsub.s32 4, %v1470
        %v1495 = vsel %vm1410, %v1494, %v1470
        %v1496 = vsel %vm1409, %v1271, %v1493
        %v1497 = vsel %vm1409, 0, %v1495
        %v1498 = vcosq.f32.pop %v1496
        %v1499 = vsinq.f32.pop %v1496
        %vm1500 = vweird.f32 %v1271
        %v1501 = vadd.s32 %v1497, 3
        %v1502 = vand.u32 %v1501, 3
        %vm1503 = vcmp.lt.s32.totalorder %v1502, 2
        %vm1504 = vcmp.eq.s32.totalorder %v1502, 0
        %v1505 = vxor.u32 %v1499, 2147483648
        %v1506 = vsel %vm1504, %v1498, %v1505
        %vm1507 = vcmp.eq.s32.totalorder %v1502, 2
        %v1508 = vxor.u32 %v1498, 2147483648
        %v1509 = vsel %vm1507, %v1508, %v1499
        %v1510 = vsel %vm1503, %v1506, %v1509
        %v1511 = vsel %vm1500, nan, %v1510
        %v1512 = vand.u32 2147483647, %v1276
        %vm1513 = vcmp.le.f32.partialorder %v1512, 0.7853982
        %vm1514 = vcmp.lt.s32.totalorder %v1276, 0
        %v1515 = vand.u32 %v1276, 2139095040
        %v1516 = vshrl.u32 %v1515, 23
        %v1517 = vsub.s32 %v1516, 127
        %v1518 = vand.u32 2147483647, %v1276
        %v1519 = vand.u32 %v1518, 8388607
        %v1520 = vor.u32 %v1519, 8388608
        %v1521 = vsub.s32 0, %v1520
        %v1522 = vadd.s32 %v1517, 1
        %vm1523 = vcmp.gt.s32.totalorder %v1522, 0
        %v1524 = vsel %vm1523, %v1522, 0
        %v1525 = vshrl.u32 %v1524, 5
        %v1526 = vand.u32 %v1524, 31
        %v1527 = vsub.s32 32, %v1526
        %v1528 = vshrl.u32 683565275, %v1527
        %v1529 = vshll.u32 683565275, %v1526
        %v1530 = vshrl.u32 2475754826, %v1527
        %v1531 = vor.u32 %v1529, %v1530
        %v1532 = vshll.u32 2475754826, %v1526
        %v1533 = vshrl.u32 2131351028, %v1527
        %v1534 = vor.u32 %v1532, %v1533
        %v1535 = vshll.u32 2131351028, %v1526
        %v1536 = vshrl.u32 2102212464, %v1527
        %v1537 = vor.u32 %v1535, %v1536
        %v1538 = vshll.u32 2102212464, %v1526
        %v1539 = vshrl.u32 920167782, %v1527
        %v1540 = vor.u32 %v1538, %v1539
        %v1541 = vshll.u32 920167782, %v1526
        %v1542 = vshrl.u32 1326507024, %v1527
        %v1543 = vor.u32 %v1541, %v1542
        %vm1544 = vcmp.lt.s32.totalorder %v1525, 1
        %vm1545 = vcmp.lt.s32.totalorder %v1525, 2
        %vm1546 = vcmp.lt.s32.totalorder %v1525, 3
        %vm1547 = vcmp.lt.s32.totalorder %v1525, 4
        %v1548 = vsel %vm1544, %v1528, %v1531
        %v1549 = vsel %vm1547, %v1537, 2102212464
        %v1550 = vsel %vm1546, %v1534, %v1549
        %v1551 = vsel %vm1545, %v1548, %v1550
        %v1552 = vsel %vm1544, %v1531, %v1534
        %v1553 = vsel %vm1547, %v1540, 920167782
        %v1554 = vsel %vm1546, %v1537, %v1553
        %v1555 = vsel %vm1545, %v1552, %v1554
        %v1556 = vsel %vm1544, %v1534, %v1537
        %v1557 = vsel %vm1547, %v1543, 1326507024
        %v1558 = vsel %vm1546, %v1540, %v1557
        %v1559 = vsel %vm1545, %v1556, %v1558
        %v1560 = vshll.u32 %v1520, 8
        %v1561 = vmul.u32.u64.compose %v1560, %v1559
        %v1562 = vextract.low.u32 %v1561
        %v1563 = vextract.high.u32 %v1561
        %v1564 = vmul.u32.u64.compose %v1560, %v1555
        %v1565 = vextract.low.u32 %v1564
        %v1566 = vextract.high.u32 %v1564
        %v1567 = vmul.u32 %v1560, %v1551
        %v1568 = vadd.s32 %v1563, %v1565
        %vm1569 = vc.u32 %v1563, %v1565
        %v1570 = vadd.s32 %v1566, 1
        %v1571 = vsel %vm1569, %v1570, %v1566
        %v1572 = vadd.s32 %v1567, %v1571
        %v1573 = vadd.s32 %v1572, 536870912
        %v1574 = vshrl.u32 %v1573, 30
        %v1575 = vshll.u32 %v1574, 30
        %v1576 = vsub.s32 %v1572, %v1575
        %vm1577 = vcmp.lt.s32.totalorder %v1576, 0
        %v1578 = vsub.s32 0, %v1576
        %v1579 = vsel %vm1577, %v1578, %v1576
        %v1580 = vclz %v1579
        %v1581 = vsub.s32 %v1580, 2
        %vm1582 = vcmp.gt.s32.totalorder 0, %v1581
        %v1583 = vsel %vm1582, 0, %v1581
        %v1584 = vsub.s32 32, %v1583
        %v1585 = vshll.u32 %v1576, %v1583
        %v1586 = vshrl.u32 %v1568, %v1584
        %v1587 = vor.u32 %v1585, %v1586
        %v1588 = vsub.s32 4294967266, %v1583
        %v1589 = vadd.s32 %v1588, 127
        %v1590 = vshll.u32 %v1589, 23
        %v1591 = vor.u32 4788187, %v1590
        %v1592 = vand.u32 2147483647, %v1591
        %v1594 = vcvt.s32.f32 %v1587
        %v1595 = vmul.f32 %v1594, %v1592
        %v1596 = vxor.u32 %v1595, 2147483648
        %v1597 = vsel %vm1514, %v1596, %v1595
        %v1598 = vsub.s32 4, %v1574
        %v1599 = vsel %vm1514, %v1598, %v1574
        %v1600 = vsel %vm1513, %v1276, %v1597
        %v1601 = vsel %vm1513, 0, %v1599
        %v1602 = vcosq.f32.pop %v1600
        %v1603 = vsinq.f32.pop %v1600
        %vm1604 = vweird.f32 %v1276
        %v1605 = vadd.s32 %v1601, 3
        %v1606 = vand.u32 %v1605, 3
        %vm1607 = vcmp.lt.s32.totalorder %v1606, 2
        %vm1608 = vcmp.eq.s32.totalorder %v1606, 0
        %v1609 = vxor.u32 %v1603, 2147483648
        %v1610 = vsel %vm1608, %v1602, %v1609
        %vm1611 = vcmp.eq.s32.totalorder %v1606, 2
        %v1612 = vxor.u32 %v1602, 2147483648
        %v1613 = vsel %vm1611, %v1612, %v1603
        %v1614 = vsel %vm1607, %v1610, %v1613
        %v1615 = vsel %vm1604, nan, %v1614
        %v1616 = vand.u32 2147483647, %v1281
        %vm1617 = vcmp.le.f32.partialorder %v1616, 0.7853982
        %vm1618 = vcmp.lt.s32.totalorder %v1281, 0
        %v1619 = vand.u32 %v1281, 2139095040
        %v1620 = vshrl.u32 %v1619, 23
        %v1621 = vsub.s32 %v1620, 127
        %v1622 = vand.u32 2147483647, %v1281
        %v1623 = vand.u32 %v1622, 8388607
        %v1624 = vor.u32 %v1623, 8388608
        %v1625 = vsub.s32 0, %v1624
        %v1626 = vadd.s32 %v1621, 1
        %vm1627 = vcmp.gt.s32.totalorder %v1626, 0
        %v1628 = vsel %vm1627, %v1626, 0
        %v1629 = vshrl.u32 %v1628, 5
        %v1630 = vand.u32 %v1628, 31
        %v1631 = vsub.s32 32, %v1630
        %v1632 = vshrl.u32 683565275, %v1631
        %v1633 = vshll.u32 683565275, %v1630
        %v1634 = vshrl.u32 2475754826, %v1631
        %v1635 = vor.u32 %v1633, %v1634
        %v1636 = vshll.u32 2475754826, %v1630
        %v1637 = vshrl.u32 2131351028, %v1631
        %v1638 = vor.u32 %v1636, %v1637
        %v1639 = vshll.u32 2131351028, %v1630
        %v1640 = vshrl.u32 2102212464, %v1631
        %v1641 = vor.u32 %v1639, %v1640
        %v1642 = vshll.u32 2102212464, %v1630
        %v1643 = vshrl.u32 920167782, %v1631
        %v1644 = vor.u32 %v1642, %v1643
        %v1645 = vshll.u32 920167782, %v1630
        %v1646 = vshrl.u32 1326507024, %v1631
        %v1647 = vor.u32 %v1645, %v1646
        %vm1648 = vcmp.lt.s32.totalorder %v1629, 1
        %vm1649 = vcmp.lt.s32.totalorder %v1629, 2
        %vm1650 = vcmp.lt.s32.totalorder %v1629, 3
        %vm1651 = vcmp.lt.s32.totalorder %v1629, 4
        %v1652 = vsel %vm1648, %v1632, %v1635
        %v1653 = vsel %vm1651, %v1641, 2102212464
        %v1654 = vsel %vm1650, %v1638, %v1653
        %v1655 = vsel %vm1649, %v1652, %v1654
        %v1656 = vsel %vm1648, %v1635, %v1638
        %v1657 = vsel %vm1651, %v1644, 920167782
        %v1658 = vsel %vm1650, %v1641, %v1657
        %v1659 = vsel %vm1649, %v1656, %v1658
        %v1660 = vsel %vm1648, %v1638, %v1641
        %v1661 = vsel %vm1651, %v1647, 1326507024
        %v1662 = vsel %vm1650, %v1644, %v1661
        %v1663 = vsel %vm1649, %v1660, %v1662
        %v1664 = vshll.u32 %v1624, 8
        %v1665 = vmul.u32.u64.compose %v1664, %v1663
        %v1666 = vextract.low.u32 %v1665
        %v1667 = vextract.high.u32 %v1665
        %v1668 = vmul.u32.u64.compose %v1664, %v1659
        %v1669 = vextract.low.u32 %v1668
        %v1670 = vextract.high.u32 %v1668
        %v1671 = vmul.u32 %v1664, %v1655
        %v1672 = vadd.s32 %v1667, %v1669
        %vm1673 = vc.u32 %v1667, %v1669
        %v1674 = vadd.s32 %v1670, 1
        %v1675 = vsel %vm1673, %v1674, %v1670
        %v1676 = vadd.s32 %v1671, %v1675
        %v1677 = vadd.s32 %v1676, 536870912
        %v1678 = vshrl.u32 %v1677, 30
        %v1679 = vshll.u32 %v1678, 30
        %v1680 = vsub.s32 %v1676, %v1679
        %vm1681 = vcmp.lt.s32.totalorder %v1680, 0
        %v1682 = vsub.s32 0, %v1680
        %v1683 = vsel %vm1681, %v1682, %v1680
        %v1684 = vclz %v1683
        %v1685 = vsub.s32 %v1684, 2
        %vm1686 = vcmp.gt.s32.totalorder 0, %v1685
        %v1687 = vsel %vm1686, 0, %v1685
        %v1688 = vsub.s32 32, %v1687
        %v1689 = vshll.u32 %v1680, %v1687
        %v1690 = vshrl.u32 %v1672, %v1688
        %v1691 = vor.u32 %v1689, %v1690
        %v1692 = vsub.s32 4294967266, %v1687
        %v1693 = vadd.s32 %v1692, 127
        %v1694 = vshll.u32 %v1693, 23
        %v1695 = vor.u32 4788187, %v1694
        %v1696 = vand.u32 2147483647, %v1695
        %v1698 = vcvt.s32.f32 %v1691
        %v1699 = vmul.f32 %v1698, %v1696
        %v1700 = vxor.u32 %v1699, 2147483648
        %v1701 = vsel %vm1618, %v1700, %v1699
        %v1702 = vsub.s32 4, %v1678
        %v1703 = vsel %vm1618, %v1702, %v1678
        %v1704 = vsel %vm1617, %v1281, %v1701
        %v1705 = vsel %vm1617, 0, %v1703
        %v1706 = vcosq.f32.pop %v1704
        %v1707 = vsinq.f32.pop %v1704
        %vm1708 = vweird.f32 %v1281
        %v1709 = vadd.s32 %v1705, 3
        %v1710 = vand.u32 %v1709, 3
        %vm1711 = vcmp.lt.s32.totalorder %v1710, 2
        %vm1712 = vcmp.eq.s32.totalorder %v1710, 0
        %v1713 = vxor.u32 %v1707, 2147483648
        %v1714 = vsel %vm1712, %v1706, %v1713
        %vm1715 = vcmp.eq.s32.totalorder %v1710, 2
        %v1716 = vxor.u32 %v1706, 2147483648
        %v1717 = vsel %vm1715, %v1716, %v1707
        %v1718 = vsel %vm1711, %v1714, %v1717
        %v1719 = vsel %vm1708, nan, %v1718
        %v1720 = vand.u32 2147483647, %v1286
        %vm1721 = vcmp.le.f32.partialorder %v1720, 0.7853982
        %vm1722 = vcmp.lt.s32.totalorder %v1286, 0
        %v1723 = vand.u32 %v1286, 2139095040
        %v1724 = vshrl.u32 %v1723, 23
        %v1725 = vsub.s32 %v1724, 127
        %v1726 = vand.u32 2147483647, %v1286
        %v1727 = vand.u32 %v1726, 8388607
        %v1728 = vor.u32 %v1727, 8388608
        %v1729 = vsub.s32 0, %v1728
        %v1730 = vadd.s32 %v1725, 1
        %vm1731 = vcmp.gt.s32.totalorder %v1730, 0
        %v1732 = vsel %vm1731, %v1730, 0
        %v1733 = vshrl.u32 %v1732, 5
        %v1734 = vand.u32 %v1732, 31
        %v1735 = vsub.s32 32, %v1734
        %v1736 = vshrl.u32 683565275, %v1735
        %v1737 = vshll.u32 683565275, %v1734
        %v1738 = vshrl.u32 2475754826, %v1735
        %v1739 = vor.u32 %v1737, %v1738
        %v1740 = vshll.u32 2475754826, %v1734
        %v1741 = vshrl.u32 2131351028, %v1735
        %v1742 = vor.u32 %v1740, %v1741
        %v1743 = vshll.u32 2131351028, %v1734
        %v1744 = vshrl.u32 2102212464, %v1735
        %v1745 = vor.u32 %v1743, %v1744
        %v1746 = vshll.u32 2102212464, %v1734
        %v1747 = vshrl.u32 920167782, %v1735
        %v1748 = vor.u32 %v1746, %v1747
        %v1749 = vshll.u32 920167782, %v1734
        %v1750 = vshrl.u32 1326507024, %v1735
        %v1751 = vor.u32 %v1749, %v1750
        %vm1752 = vcmp.lt.s32.totalorder %v1733, 1
        %vm1753 = vcmp.lt.s32.totalorder %v1733, 2
        %vm1754 = vcmp.lt.s32.totalorder %v1733, 3
        %vm1755 = vcmp.lt.s32.totalorder %v1733, 4
        %v1756 = vsel %vm1752, %v1736, %v1739
        %v1757 = vsel %vm1755, %v1745, 2102212464
        %v1758 = vsel %vm1754, %v1742, %v1757
        %v1759 = vsel %vm1753, %v1756, %v1758
        %v1760 = vsel %vm1752, %v1739, %v1742
        %v1761 = vsel %vm1755, %v1748, 920167782
        %v1762 = vsel %vm1754, %v1745, %v1761
        %v1763 = vsel %vm1753, %v1760, %v1762
        %v1764 = vsel %vm1752, %v1742, %v1745
        %v1765 = vsel %vm1755, %v1751, 1326507024
        %v1766 = vsel %vm1754, %v1748, %v1765
        %v1767 = vsel %vm1753, %v1764, %v1766
        %v1768 = vshll.u32 %v1728, 8
        %v1769 = vmul.u32.u64.compose %v1768, %v1767
        %v1770 = vextract.low.u32 %v1769
        %v1771 = vextract.high.u32 %v1769
        %v1772 = vmul.u32.u64.compose %v1768, %v1763
        %v1773 = vextract.low.u32 %v1772
        %v1774 = vextract.high.u32 %v1772
        %v1775 = vmul.u32 %v1768, %v1759
        %v1776 = vadd.s32 %v1771, %v1773
        %vm1777 = vc.u32 %v1771, %v1773
        %v1778 = vadd.s32 %v1774, 1
        %v1779 = vsel %vm1777, %v1778, %v1774
        %v1780 = vadd.s32 %v1775, %v1779
        %v1781 = vadd.s32 %v1780, 536870912
        %v1782 = vshrl.u32 %v1781, 30
        %v1783 = vshll.u32 %v1782, 30
        %v1784 = vsub.s32 %v1780, %v1783
        %vm1785 = vcmp.lt.s32.totalorder %v1784, 0
        %v1786 = vsub.s32 0, %v1784
        %v1787 = vsel %vm1785, %v1786, %v1784
        %v1788 = vclz %v1787
        %v1789 = vsub.s32 %v1788, 2
        %vm1790 = vcmp.gt.s32.totalorder 0, %v1789
        %v1791 = vsel %vm1790, 0, %v1789
        %v1792 = vsub.s32 32, %v1791
        %v1793 = vshll.u32 %v1784, %v1791
        %v1794 = vshrl.u32 %v1776, %v1792
        %v1795 = vor.u32 %v1793, %v1794
        %v1796 = vsub.s32 4294967266, %v1791
        %v1797 = vadd.s32 %v1796, 127
        %v1798 = vshll.u32 %v1797, 23
        %v1799 = vor.u32 4788187, %v1798
        %v1800 = vand.u32 2147483647, %v1799
        %v1802 = vcvt.s32.f32 %v1795
        %v1803 = vmul.f32 %v1802, %v1800
        %v1804 = vxor.u32 %v1803, 2147483648
        %v1805 = vsel %vm1722, %v1804, %v1803
        %v1806 = vsub.s32 4, %v1782
        %v1807 = vsel %vm1722, %v1806, %v1782
        %v1808 = vsel %vm1721, %v1286, %v1805
        %v1809 = vsel %vm1721, 0, %v1807
        %v1810 = vcosq.f32.pop %v1808
        %v1811 = vsinq.f32.pop %v1808
        %vm1812 = vweird.f32 %v1286
        %v1813 = vadd.s32 %v1809, 3
        %v1814 = vand.u32 %v1813, 3
        %vm1815 = vcmp.lt.s32.totalorder %v1814, 2
        %vm1816 = vcmp.eq.s32.totalorder %v1814, 0
        %v1817 = vxor.u32 %v1811, 2147483648
        %v1818 = vsel %vm1816, %v1810, %v1817
        %vm1819 = vcmp.eq.s32.totalorder %v1814, 2
        %v1820 = vxor.u32 %v1810, 2147483648
        %v1821 = vsel %vm1819, %v1820, %v1811
        %v1822 = vsel %vm1815, %v1818, %v1821
        %v1823 = vsel %vm1812, nan, %v1822
        %v1824 = vand.u32 2147483647, %v1291
        %vm1825 = vcmp.le.f32.partialorder %v1824, 0.7853982
        %vm1826 = vcmp.lt.s32.totalorder %v1291, 0
        %v1827 = vand.u32 %v1291, 2139095040
        %v1828 = vshrl.u32 %v1827, 23
        %v1829 = vsub.s32 %v1828, 127
        %v1830 = vand.u32 2147483647, %v1291
        %v1831 = vand.u32 %v1830, 8388607
        %v1832 = vor.u32 %v1831, 8388608
        %v1833 = vsub.s32 0, %v1832
        %v1834 = vadd.s32 %v1829, 1
        %vm1835 = vcmp.gt.s32.totalorder %v1834, 0
        %v1836 = vsel %vm1835, %v1834, 0
        %v1837 = vshrl.u32 %v1836, 5
        %v1838 = vand.u32 %v1836, 31
        %v1839 = vsub.s32 32, %v1838
        %v1840 = vshrl.u32 683565275, %v1839
        %v1841 = vshll.u32 683565275, %v1838
        %v1842 = vshrl.u32 2475754826, %v1839
        %v1843 = vor.u32 %v1841, %v1842
        %v1844 = vshll.u32 2475754826, %v1838
        %v1845 = vshrl.u32 2131351028, %v1839
        %v1846 = vor.u32 %v1844, %v1845
        %v1847 = vshll.u32 2131351028, %v1838
        %v1848 = vshrl.u32 2102212464, %v1839
        %v1849 = vor.u32 %v1847, %v1848
        %v1850 = vshll.u32 2102212464, %v1838
        %v1851 = vshrl.u32 920167782, %v1839
        %v1852 = vor.u32 %v1850, %v1851
        %v1853 = vshll.u32 920167782, %v1838
        %v1854 = vshrl.u32 1326507024, %v1839
        %v1855 = vor.u32 %v1853, %v1854
        %vm1856 = vcmp.lt.s32.totalorder %v1837, 1
        %vm1857 = vcmp.lt.s32.totalorder %v1837, 2
        %vm1858 = vcmp.lt.s32.totalorder %v1837, 3
        %vm1859 = vcmp.lt.s32.totalorder %v1837, 4
        %v1860 = vsel %vm1856, %v1840, %v1843
        %v1861 = vsel %vm1859, %v1849, 2102212464
        %v1862 = vsel %vm1858, %v1846, %v1861
        %v1863 = vsel %vm1857, %v1860, %v1862
        %v1864 = vsel %vm1856, %v1843, %v1846
        %v1865 = vsel %vm1859, %v1852, 920167782
        %v1866 = vsel %vm1858, %v1849, %v1865
        %v1867 = vsel %vm1857, %v1864, %v1866
        %v1868 = vsel %vm1856, %v1846, %v1849
        %v1869 = vsel %vm1859, %v1855, 1326507024
        %v1870 = vsel %vm1858, %v1852, %v1869
        %v1871 = vsel %vm1857, %v1868, %v1870
        %v1872 = vshll.u32 %v1832, 8
        %v1873 = vmul.u32.u64.compose %v1872, %v1871
        %v1874 = vextract.low.u32 %v1873
        %v1875 = vextract.high.u32 %v1873
        %v1876 = vmul.u32.u64.compose %v1872, %v1867
        %v1877 = vextract.low.u32 %v1876
        %v1878 = vextract.high.u32 %v1876
        %v1879 = vmul.u32 %v1872, %v1863
        %v1880 = vadd.s32 %v1875, %v1877
        %vm1881 = vc.u32 %v1875, %v1877
        %v1882 = vadd.s32 %v1878, 1
        %v1883 = vsel %vm1881, %v1882, %v1878
        %v1884 = vadd.s32 %v1879, %v1883
        %v1885 = vadd.s32 %v1884, 536870912
        %v1886 = vshrl.u32 %v1885, 30
        %v1887 = vshll.u32 %v1886, 30
        %v1888 = vsub.s32 %v1884, %v1887
        %vm1889 = vcmp.lt.s32.totalorder %v1888, 0
        %v1890 = vsub.s32 0, %v1888
        %v1891 = vsel %vm1889, %v1890, %v1888
        %v1892 = vclz %v1891
        %v1893 = vsub.s32 %v1892, 2
        %vm1894 = vcmp.gt.s32.totalorder 0, %v1893
        %v1895 = vsel %vm1894, 0, %v1893
        %v1896 = vsub.s32 32, %v1895
        %v1897 = vshll.u32 %v1888, %v1895
        %v1898 = vshrl.u32 %v1880, %v1896
        %v1899 = vor.u32 %v1897, %v1898
        %v1900 = vsub.s32 4294967266, %v1895
        %v1901 = vadd.s32 %v1900, 127
        %v1902 = vshll.u32 %v1901, 23
        %v1903 = vor.u32 4788187, %v1902
        %v1904 = vand.u32 2147483647, %v1903
        %v1906 = vcvt.s32.f32 %v1899
        %v1907 = vmul.f32 %v1906, %v1904
        %v1908 = vxor.u32 %v1907, 2147483648
        %v1909 = vsel %vm1826, %v1908, %v1907
        %v1910 = vsub.s32 4, %v1886
        %v1911 = vsel %vm1826, %v1910, %v1886
        %v1912 = vsel %vm1825, %v1291, %v1909
        %v1913 = vsel %vm1825, 0, %v1911
        %v1914 = vcosq.f32.pop %v1912
        %v1915 = vsinq.f32.pop %v1912
        %vm1916 = vweird.f32 %v1291
        %v1917 = vadd.s32 %v1913, 3
        %v1918 = vand.u32 %v1917, 3
        %vm1919 = vcmp.lt.s32.totalorder %v1918, 2
        %vm1920 = vcmp.eq.s32.totalorder %v1918, 0
        %v1921 = vxor.u32 %v1915, 2147483648
        %v1922 = vsel %vm1920, %v1914, %v1921
        %vm1923 = vcmp.eq.s32.totalorder %v1918, 2
        %v1924 = vxor.u32 %v1914, 2147483648
        %v1925 = vsel %vm1923, %v1924, %v1915
        %v1926 = vsel %vm1919, %v1922, %v1925
        %v1927 = vsel %vm1916, nan, %v1926
        %v1928 = vand.u32 2147483647, %v1296
        %vm1929 = vcmp.le.f32.partialorder %v1928, 0.7853982
        %vm1930 = vcmp.lt.s32.totalorder %v1296, 0
        %v1931 = vand.u32 %v1296, 2139095040
        %v1932 = vshrl.u32 %v1931, 23
        %v1933 = vsub.s32 %v1932, 127
        %v1934 = vand.u32 2147483647, %v1296
        %v1935 = vand.u32 %v1934, 8388607
        %v1936 = vor.u32 %v1935, 8388608
        %v1937 = vsub.s32 0, %v1936
        %v1938 = vadd.s32 %v1933, 1
        %vm1939 = vcmp.gt.s32.totalorder %v1938, 0
        %v1940 = vsel %vm1939, %v1938, 0
        %v1941 = vshrl.u32 %v1940, 5
        %v1942 = vand.u32 %v1940, 31
        %v1943 = vsub.s32 32, %v1942
        %v1944 = vshrl.u32 683565275, %v1943
        %v1945 = vshll.u32 683565275, %v1942
        %v1946 = vshrl.u32 2475754826, %v1943
        %v1947 = vor.u32 %v1945, %v1946
        %v1948 = vshll.u32 2475754826, %v1942
        %v1949 = vshrl.u32 2131351028, %v1943
        %v1950 = vor.u32 %v1948, %v1949
        %v1951 = vshll.u32 2131351028, %v1942
        %v1952 = vshrl.u32 2102212464, %v1943
        %v1953 = vor.u32 %v1951, %v1952
        %v1954 = vshll.u32 2102212464, %v1942
        %v1955 = vshrl.u32 920167782, %v1943
        %v1956 = vor.u32 %v1954, %v1955
        %v1957 = vshll.u32 920167782, %v1942
        %v1958 = vshrl.u32 1326507024, %v1943
        %v1959 = vor.u32 %v1957, %v1958
        %vm1960 = vcmp.lt.s32.totalorder %v1941, 1
        %vm1961 = vcmp.lt.s32.totalorder %v1941, 2
        %vm1962 = vcmp.lt.s32.totalorder %v1941, 3
        %vm1963 = vcmp.lt.s32.totalorder %v1941, 4
        %v1964 = vsel %vm1960, %v1944, %v1947
        %v1965 = vsel %vm1963, %v1953, 2102212464
        %v1966 = vsel %vm1962, %v1950, %v1965
        %v1967 = vsel %vm1961, %v1964, %v1966
        %v1968 = vsel %vm1960, %v1947, %v1950
        %v1969 = vsel %vm1963, %v1956, 920167782
        %v1970 = vsel %vm1962, %v1953, %v1969
        %v1971 = vsel %vm1961, %v1968, %v1970
        %v1972 = vsel %vm1960, %v1950, %v1953
        %v1973 = vsel %vm1963, %v1959, 1326507024
        %v1974 = vsel %vm1962, %v1956, %v1973
        %v1975 = vsel %vm1961, %v1972, %v1974
        %v1976 = vshll.u32 %v1936, 8
        %v1977 = vmul.u32.u64.compose %v1976, %v1975
        %v1978 = vextract.low.u32 %v1977
        %v1979 = vextract.high.u32 %v1977
        %v1980 = vmul.u32.u64.compose %v1976, %v1971
        %v1981 = vextract.low.u32 %v1980
        %v1982 = vextract.high.u32 %v1980
        %v1983 = vmul.u32 %v1976, %v1967
        %v1984 = vadd.s32 %v1979, %v1981
        %vm1985 = vc.u32 %v1979, %v1981
        %v1986 = vadd.s32 %v1982, 1
        %v1987 = vsel %vm1985, %v1986, %v1982
        %v1988 = vadd.s32 %v1983, %v1987
        %v1989 = vadd.s32 %v1988, 536870912
        %v1990 = vshrl.u32 %v1989, 30
        %v1991 = vshll.u32 %v1990, 30
        %v1992 = vsub.s32 %v1988, %v1991
        %vm1993 = vcmp.lt.s32.totalorder %v1992, 0
        %v1994 = vsub.s32 0, %v1992
        %v1995 = vsel %vm1993, %v1994, %v1992
        %v1996 = vclz %v1995
        %v1997 = vsub.s32 %v1996, 2
        %vm1998 = vcmp.gt.s32.totalorder 0, %v1997
        %v1999 = vsel %vm1998, 0, %v1997
        %v2000 = vsub.s32 32, %v1999
        %v2001 = vshll.u32 %v1992, %v1999
        %v2002 = vshrl.u32 %v1984, %v2000
        %v2003 = vor.u32 %v2001, %v2002
        %v2004 = vsub.s32 4294967266, %v1999
        %v2005 = vadd.s32 %v2004, 127
        %v2006 = vshll.u32 %v2005, 23
        %v2007 = vor.u32 4788187, %v2006
        %v2008 = vand.u32 2147483647, %v2007
        %v2010 = vcvt.s32.f32 %v2003
        %v2011 = vmul.f32 %v2010, %v2008
        %v2012 = vxor.u32 %v2011, 2147483648
        %v2013 = vsel %vm1930, %v2012, %v2011
        %v2014 = vsub.s32 4, %v1990
        %v2015 = vsel %vm1930, %v2014, %v1990
        %v2016 = vsel %vm1929, %v1296, %v2013
        %v2017 = vsel %vm1929, 0, %v2015
        %v2018 = vcosq.f32.pop %v2016
        %v2019 = vsinq.f32.pop %v2016
        %vm2020 = vweird.f32 %v1296
        %v2021 = vadd.s32 %v2017, 3
        %v2022 = vand.u32 %v2021, 3
        %vm2023 = vcmp.lt.s32.totalorder %v2022, 2
        %vm2024 = vcmp.eq.s32.totalorder %v2022, 0
        %v2025 = vxor.u32 %v2019, 2147483648
        %v2026 = vsel %vm2024, %v2018, %v2025
        %vm2027 = vcmp.eq.s32.totalorder %v2022, 2
        %v2028 = vxor.u32 %v2018, 2147483648
        %v2029 = vsel %vm2027, %v2028, %v2019
        %v2030 = vsel %vm2023, %v2026, %v2029
        %v2031 = vsel %vm2020, nan, %v2030
        %v2032 = vand.u32 2147483647, %v1301
        %vm2033 = vcmp.le.f32.partialorder %v2032, 0.7853982
        %vm2034 = vcmp.lt.s32.totalorder %v1301, 0
        %v2035 = vand.u32 %v1301, 2139095040
        %v2036 = vshrl.u32 %v2035, 23
        %v2037 = vsub.s32 %v2036, 127
        %v2038 = vand.u32 2147483647, %v1301
        %v2039 = vand.u32 %v2038, 8388607
        %v2040 = vor.u32 %v2039, 8388608
        %v2041 = vsub.s32 0, %v2040
        %v2042 = vadd.s32 %v2037, 1
        %vm2043 = vcmp.gt.s32.totalorder %v2042, 0
        %v2044 = vsel %vm2043, %v2042, 0
        %v2045 = vshrl.u32 %v2044, 5
        %v2046 = vand.u32 %v2044, 31
        %v2047 = vsub.s32 32, %v2046
        %v2048 = vshrl.u32 683565275, %v2047
        %v2049 = vshll.u32 683565275, %v2046
        %v2050 = vshrl.u32 2475754826, %v2047
        %v2051 = vor.u32 %v2049, %v2050
        %v2052 = vshll.u32 2475754826, %v2046
        %v2053 = vshrl.u32 2131351028, %v2047
        %v2054 = vor.u32 %v2052, %v2053
        %v2055 = vshll.u32 2131351028, %v2046
        %v2056 = vshrl.u32 2102212464, %v2047
        %v2057 = vor.u32 %v2055, %v2056
        %v2058 = vshll.u32 2102212464, %v2046
        %v2059 = vshrl.u32 920167782, %v2047
        %v2060 = vor.u32 %v2058, %v2059
        %v2061 = vshll.u32 920167782, %v2046
        %v2062 = vshrl.u32 1326507024, %v2047
        %v2063 = vor.u32 %v2061, %v2062
        %vm2064 = vcmp.lt.s32.totalorder %v2045, 1
        %vm2065 = vcmp.lt.s32.totalorder %v2045, 2
        %vm2066 = vcmp.lt.s32.totalorder %v2045, 3
        %vm2067 = vcmp.lt.s32.totalorder %v2045, 4
        %v2068 = vsel %vm2064, %v2048, %v2051
        %v2069 = vsel %vm2067, %v2057, 2102212464
        %v2070 = vsel %vm2066, %v2054, %v2069
        %v2071 = vsel %vm2065, %v2068, %v2070
        %v2072 = vsel %vm2064, %v2051, %v2054
        %v2073 = vsel %vm2067, %v2060, 920167782
        %v2074 = vsel %vm2066, %v2057, %v2073
        %v2075 = vsel %vm2065, %v2072, %v2074
        %v2076 = vsel %vm2064, %v2054, %v2057
        %v2077 = vsel %vm2067, %v2063, 1326507024
        %v2078 = vsel %vm2066, %v2060, %v2077
        %v2079 = vsel %vm2065, %v2076, %v2078
        %v2080 = vshll.u32 %v2040, 8
        %v2081 = vmul.u32.u64.compose %v2080, %v2079
        %v2082 = vextract.low.u32 %v2081
        %v2083 = vextract.high.u32 %v2081
        %v2084 = vmul.u32.u64.compose %v2080, %v2075
        %v2085 = vextract.low.u32 %v2084
        %v2086 = vextract.high.u32 %v2084
        %v2087 = vmul.u32 %v2080, %v2071
        %v2088 = vadd.s32 %v2083, %v2085
        %vm2089 = vc.u32 %v2083, %v2085
        %v2090 = vadd.s32 %v2086, 1
        %v2091 = vsel %vm2089, %v2090, %v2086
        %v2092 = vadd.s32 %v2087, %v2091
        %v2093 = vadd.s32 %v2092, 536870912
        %v2094 = vshrl.u32 %v2093, 30
        %v2095 = vshll.u32 %v2094, 30
        %v2096 = vsub.s32 %v2092, %v2095
        %vm2097 = vcmp.lt.s32.totalorder %v2096, 0
        %v2098 = vsub.s32 0, %v2096
        %v2099 = vsel %vm2097, %v2098, %v2096
        %v2100 = vclz %v2099
        %v2101 = vsub.s32 %v2100, 2
        %vm2102 = vcmp.gt.s32.totalorder 0, %v2101
        %v2103 = vsel %vm2102, 0, %v2101
        %v2104 = vsub.s32 32, %v2103
        %v2105 = vshll.u32 %v2096, %v2103
        %v2106 = vshrl.u32 %v2088, %v2104
        %v2107 = vor.u32 %v2105, %v2106
        %v2108 = vsub.s32 4294967266, %v2103
        %v2109 = vadd.s32 %v2108, 127
        %v2110 = vshll.u32 %v2109, 23
        %v2111 = vor.u32 4788187, %v2110
        %v2112 = vand.u32 2147483647, %v2111
        %v2114 = vcvt.s32.f32 %v2107
        %v2115 = vmul.f32 %v2114, %v2112
        %v2116 = vxor.u32 %v2115, 2147483648
        %v2117 = vsel %vm2034, %v2116, %v2115
        %v2118 = vsub.s32 4, %v2094
        %v2119 = vsel %vm2034, %v2118, %v2094
        %v2120 = vsel %vm2033, %v1301, %v2117
        %v2121 = vsel %vm2033, 0, %v2119
        %v2122 = vcosq.f32.pop %v2120
        %v2123 = vsinq.f32.pop %v2120
        %vm2124 = vweird.f32 %v1301
        %v2125 = vadd.s32 %v2121, 3
        %v2126 = vand.u32 %v2125, 3
        %vm2127 = vcmp.lt.s32.totalorder %v2126, 2
        %vm2128 = vcmp.eq.s32.totalorder %v2126, 0
        %v2129 = vxor.u32 %v2123, 2147483648
        %v2130 = vsel %vm2128, %v2122, %v2129
        %vm2131 = vcmp.eq.s32.totalorder %v2126, 2
        %v2132 = vxor.u32 %v2122, 2147483648
        %v2133 = vsel %vm2131, %v2132, %v2123
        %v2134 = vsel %vm2127, %v2130, %v2133
        %v2135 = vsel %vm2124, nan, %v2134
        %s2136 = scalar_lea.vmem [#allocation5], 256
        %v2137 = vld [vmem:[%s2136] sm:$0xff]
        %v2138 = vld [vmem:[%s2136 + $0x8] sm:$0xff]
        %v2139 = vld [vmem:[%s2136 + $0x10] sm:$0xff]
        %v2140 = vld [vmem:[%s2136 + $0x18] sm:$0xff]
        %v2141 = vld [vmem:[%s2136 + $0x20] sm:$0xff]
        %v2142 = vld [vmem:[%s2136 + $0x28] sm:$0xff]
        %v2143 = vld [vmem:[%s2136 + $0x30] sm:$0xff]
        %v2144 = vld [vmem:[%s2136 + $0x38] sm:$0xff]
        %v2145 = vld [vmem:[%s2136 + $0x40] sm:$0xff]
        %v2146 = vld [vmem:[%s2136 + $0x48] sm:$0xff]
        %v2147 = vld [vmem:[%s2136 + $0x50] sm:$0xff]
        %v2148 = vld [vmem:[%s2136 + $0x58] sm:$0xff]
        %v2149 = vld [vmem:[%s2136 + $0x60] sm:$0xff]
        %v2150 = vld [vmem:[%s2136 + $0x68] sm:$0xff]
        %v2151 = vld [vmem:[%s2136 + $0x70] sm:$0xff]
        %v2152 = vld [vmem:[%s2136 + $0x78] sm:$0xff]
        %s2153 = scalar_lea.vmem %s2, 2
        %v2154 = vld [vmem:[%s2153] sm:$0x1]
        %v2156 = vlaneseq
        %v2157 = vshrl.u32 %v2156, 7
        %v2158 = vsub.s32 0, %v2157
        %v2159 = vrot.slane %v2154, %v2158
        %2161 = vmatprep.subr.mxu0 0.0
        %2162 = vmatpush1.msra.mxu0 %v2137
        %2163 = vmatprep.subr.mxu0 0.0
        %2164 = vmatpush1.msra.mxu0 %v2138
        %2165 = vmatprep.subr.mxu0 0.0
        %2166 = vmatpush1.msra.mxu0 %v2139
        %2167 = vmatprep.subr.mxu0 0.0
        %2168 = vmatpush1.msra.mxu0 %v2140
        %2169 = vmatprep.subr.mxu0 0.0
        %2170 = vmatpush1.msra.mxu0 %v2141
        %2171 = vmatprep.subr.mxu0 0.0
        %2172 = vmatpush1.msra.mxu0 %v2142
        %2173 = vmatprep.subr.mxu0 0.0
        %2174 = vmatpush1.msra.mxu0 %v2143
        %2175 = vmatprep.subr.mxu0 0.0
        %2176 = vmatpush1.msra.mxu0 %v2144
        %2177 = vmatprep.subr.mxu0 0.0
        %2178 = vmatpush1.msra.mxu0 %v2145
        %2179 = vmatprep.subr.mxu0 0.0
        %2180 = vmatpush1.msra.mxu0 %v2146
        %2181 = vmatprep.subr.mxu0 0.0
        %2182 = vmatpush1.msra.mxu0 %v2147
        %2183 = vmatprep.subr.mxu0 0.0
        %2184 = vmatpush1.msra.mxu0 %v2148
        %2185 = vmatprep.subr.mxu0 0.0
        %2186 = vmatpush1.msra.mxu0 %v2149
        %2187 = vmatprep.subr.mxu0 0.0
        %2188 = vmatpush1.msra.mxu0 %v2150
        %2189 = vmatprep.subr.mxu0 0.0
        %2190 = vmatpush1.msra.mxu0 %v2151
        %2191 = vmatprep.subr.mxu0 0.0
        %2192 = vmatpush1.msra.mxu0 %v2152
        %2193 = vmatprep.subr.mxu0 0.0
        %2194 = vmatpush1.msra.mxu0 0.0
        %2195 = vmatprep.subr.mxu0 0.0
        %2196 = vmatpush1.msra.mxu0 0.0
        %2197 = vmatprep.subr.mxu0 0.0
        %2198 = vmatpush1.msra.mxu0 0.0
        %2199 = vmatprep.subr.mxu0 0.0
        %2200 = vmatpush1.msra.mxu0 0.0
        %2201 = vmatprep.subr.mxu0 0.0
        %2202 = vmatpush1.msra.mxu0 0.0
        %2203 = vmatprep.subr.mxu0 0.0
        %2204 = vmatpush1.msra.mxu0 0.0
        %2205 = vmatprep.subr.mxu0 0.0
        %2206 = vmatpush1.msra.mxu0 0.0
        %2207 = vmatprep.subr.mxu0 0.0
        %2208 = vmatpush1.msra.mxu0 0.0
        %2209 = vmatprep.subr.mxu0 0.0
        %2210 = vmatpush1.msra.mxu0 0.0
        %2211 = vmatprep.subr.mxu0 0.0
        %2212 = vmatpush1.msra.mxu0 0.0
        %2213 = vmatprep.subr.mxu0 0.0
        %2214 = vmatpush1.msra.mxu0 0.0
        %2215 = vmatprep.subr.mxu0 0.0
        %2216 = vmatpush1.msra.mxu0 0.0
        %2217 = vmatprep.subr.mxu0 0.0
        %2218 = vmatpush1.msra.mxu0 0.0
        %2219 = vmatprep.subr.mxu0 0.0
        %2220 = vmatpush1.msra.mxu0 0.0
        %2221 = vmatprep.subr.mxu0 0.0
        %2222 = vmatpush1.msra.mxu0 0.0
        %2223 = vmatprep.subr.mxu0 0.0
        %2224 = vmatpush1.msra.mxu0 0.0
        %2225 = vmatprep.mubr.f32.mxu0 0.0
        %2226 = vmatmul.mubr.f32.gmra.mrb[0].mxu0 %v1407
        %v2227 = vpop.f32.mrb[0].mxu0
        %v2228 = vadd.f32 %v2159, %v2227
        %v2229 = vpop.f32.mrb[0].mxu0
        %2230 = vmatprep.mubr.f32.mxu0 0.0
        %2231 = vmatmul.mubr.f32.gmra.mrb[0].mxu0 %v1511
        %v2232 = vpop.f32.mrb[0].mxu0
        %v2233 = vadd.f32 %v2159, %v2232
        %v2234 = vpop.f32.mrb[0].mxu0
        %2235 = vmatprep.mubr.f32.mxu0 0.0
        %2236 = vmatmul.mubr.f32.gmra.mrb[0].mxu0 %v1615
        %v2237 = vpop.f32.mrb[0].mxu0
        %v2238 = vadd.f32 %v2159, %v2237
        %v2239 = vpop.f32.mrb[0].mxu0
        %2240 = vmatprep.mubr.f32.mxu0 0.0
        %2241 = vmatmul.mubr.f32.gmra.mrb[0].mxu0 %v1719
        %v2242 = vpop.f32.mrb[0].mxu0
        %v2243 = vadd.f32 %v2159, %v2242
        %v2244 = vpop.f32.mrb[0].mxu0
        %2245 = vmatprep.mubr.f32.mxu0 0.0
        %2246 = vmatmul.mubr.f32.gmra.mrb[0].mxu0 %v1823
        %v2247 = vpop.f32.mrb[0].mxu0
        %v2248 = vadd.f32 %v2159, %v2247
        %v2249 = vpop.f32.mrb[0].mxu0
        %2250 = vmatprep.mubr.f32.mxu0 0.0
        %2251 = vmatmul.mubr.f32.gmra.mrb[0].mxu0 %v1927
        %v2252 = vpop.f32.mrb[0].mxu0
        %v2253 = vadd.f32 %v2159, %v2252
        %v2254 = vpop.f32.mrb[0].mxu0
        %2255 = vmatprep.mubr.f32.mxu0 0.0
        %2256 = vmatmul.mubr.f32.gmra.mrb[0].mxu0 %v2031
        %v2257 = vpop.f32.mrb[0].mxu0
        %v2258 = vadd.f32 %v2159, %v2257
        %v2259 = vpop.f32.mrb[0].mxu0
        %2260 = vmatprep.mubr.f32.mxu0 0.0
        %2261 = vmatmul.mubr.f32.gmra.mrb[0].mxu0 %v2135
        %v2262 = vpop.f32.mrb[0].mxu0
        %v2263 = vadd.f32 %v2159, %v2262
        %v2264 = vpop.f32.mrb[0].mxu0
        %2265 = vdwg.mxu0
        %v2266 = vand.u32 2147483647, %v2228
        %vm2267 = vcmp.le.f32.partialorder %v2266, 0.7853982
        %vm2268 = vcmp.lt.s32.totalorder %v2228, 0
        %v2269 = vand.u32 %v2228, 2139095040
        %v2270 = vshrl.u32 %v2269, 23
        %v2271 = vsub.s32 %v2270, 127
        %v2272 = vand.u32 2147483647, %v2228
        %v2273 = vand.u32 %v2272, 8388607
        %v2274 = vor.u32 %v2273, 8388608
        %v2275 = vsub.s32 0, %v2274
        %v2276 = vadd.s32 %v2271, 1
        %vm2277 = vcmp.gt.s32.totalorder %v2276, 0
        %v2278 = vsel %vm2277, %v2276, 0
        %v2279 = vshrl.u32 %v2278, 5
        %v2280 = vand.u32 %v2278, 31
        %v2281 = vsub.s32 32, %v2280
        %v2282 = vshrl.u32 683565275, %v2281
        %v2283 = vshll.u32 683565275, %v2280
        %v2284 = vshrl.u32 2475754826, %v2281
        %v2285 = vor.u32 %v2283, %v2284
        %v2286 = vshll.u32 2475754826, %v2280
        %v2287 = vshrl.u32 2131351028, %v2281
        %v2288 = vor.u32 %v2286, %v2287
        %v2289 = vshll.u32 2131351028, %v2280
        %v2290 = vshrl.u32 2102212464, %v2281
        %v2291 = vor.u32 %v2289, %v2290
        %v2292 = vshll.u32 2102212464, %v2280
        %v2293 = vshrl.u32 920167782, %v2281
        %v2294 = vor.u32 %v2292, %v2293
        %v2295 = vshll.u32 920167782, %v2280
        %v2296 = vshrl.u32 1326507024, %v2281
        %v2297 = vor.u32 %v2295, %v2296
        %vm2298 = vcmp.lt.s32.totalorder %v2279, 1
        %vm2299 = vcmp.lt.s32.totalorder %v2279, 2
        %vm2300 = vcmp.lt.s32.totalorder %v2279, 3
        %vm2301 = vcmp.lt.s32.totalorder %v2279, 4
        %v2302 = vsel %vm2298, %v2282, %v2285
        %v2303 = vsel %vm2301, %v2291, 2102212464
        %v2304 = vsel %vm2300, %v2288, %v2303
        %v2305 = vsel %vm2299, %v2302, %v2304
        %v2306 = vsel %vm2298, %v2285, %v2288
        %v2307 = vsel %vm2301, %v2294, 920167782
        %v2308 = vsel %vm2300, %v2291, %v2307
        %v2309 = vsel %vm2299, %v2306, %v2308
        %v2310 = vsel %vm2298, %v2288, %v2291
        %v2311 = vsel %vm2301, %v2297, 1326507024
        %v2312 = vsel %vm2300, %v2294, %v2311
        %v2313 = vsel %vm2299, %v2310, %v2312
        %v2314 = vshll.u32 %v2274, 8
        %v2315 = vmul.u32.u64.compose %v2314, %v2313
        %v2316 = vextract.low.u32 %v2315
        %v2317 = vextract.high.u32 %v2315
        %v2318 = vmul.u32.u64.compose %v2314, %v2309
        %v2319 = vextract.low.u32 %v2318
        %v2320 = vextract.high.u32 %v2318
        %v2321 = vmul.u32 %v2314, %v2305
        %v2322 = vadd.s32 %v2317, %v2319
        %vm2323 = vc.u32 %v2317, %v2319
        %v2324 = vadd.s32 %v2320, 1
        %v2325 = vsel %vm2323, %v2324, %v2320
        %v2326 = vadd.s32 %v2321, %v2325
        %v2327 = vadd.s32 %v2326, 536870912
        %v2328 = vshrl.u32 %v2327, 30
        %v2329 = vshll.u32 %v2328, 30
        %v2330 = vsub.s32 %v2326, %v2329
        %vm2331 = vcmp.lt.s32.totalorder %v2330, 0
        %v2332 = vsub.s32 0, %v2330
        %v2333 = vsel %vm2331, %v2332, %v2330
        %v2334 = vclz %v2333
        %v2335 = vsub.s32 %v2334, 2
        %vm2336 = vcmp.gt.s32.totalorder 0, %v2335
        %v2337 = vsel %vm2336, 0, %v2335
        %v2338 = vsub.s32 32, %v2337
        %v2339 = vshll.u32 %v2330, %v2337
        %v2340 = vshrl.u32 %v2322, %v2338
        %v2341 = vor.u32 %v2339, %v2340
        %v2342 = vsub.s32 4294967266, %v2337
        %v2343 = vadd.s32 %v2342, 127
        %v2344 = vshll.u32 %v2343, 23
        %v2345 = vor.u32 4788187, %v2344
        %v2346 = vand.u32 2147483647, %v2345
        %v2348 = vcvt.s32.f32 %v2341
        %v2349 = vmul.f32 %v2348, %v2346
        %v2350 = vxor.u32 %v2349, 2147483648
        %v2351 = vsel %vm2268, %v2350, %v2349
        %v2352 = vsub.s32 4, %v2328
        %v2353 = vsel %vm2268, %v2352, %v2328
        %v2354 = vsel %vm2267, %v2228, %v2351
        %v2355 = vsel %vm2267, 0, %v2353
        %v2356 = vcosq.f32.pop %v2354
        %v2357 = vsinq.f32.pop %v2354
        %vm2358 = vweird.f32 %v2228
        %v2359 = vadd.s32 %v2355, 3
        %v2360 = vand.u32 %v2359, 3
        %vm2361 = vcmp.lt.s32.totalorder %v2360, 2
        %vm2362 = vcmp.eq.s32.totalorder %v2360, 0
        %v2363 = vxor.u32 %v2357, 2147483648
        %v2364 = vsel %vm2362, %v2356, %v2363
        %vm2365 = vcmp.eq.s32.totalorder %v2360, 2
        %v2366 = vxor.u32 %v2356, 2147483648
        %v2367 = vsel %vm2365, %v2366, %v2357
        %v2368 = vsel %vm2361, %v2364, %v2367
        %v2369 = vsel %vm2358, nan, %v2368
        %v2370 = vand.u32 2147483647, %v2233
        %vm2371 = vcmp.le.f32.partialorder %v2370, 0.7853982
        %vm2372 = vcmp.lt.s32.totalorder %v2233, 0
        %v2373 = vand.u32 %v2233, 2139095040
        %v2374 = vshrl.u32 %v2373, 23
        %v2375 = vsub.s32 %v2374, 127
        %v2376 = vand.u32 2147483647, %v2233
        %v2377 = vand.u32 %v2376, 8388607
        %v2378 = vor.u32 %v2377, 8388608
        %v2379 = vsub.s32 0, %v2378
        %v2380 = vadd.s32 %v2375, 1
        %vm2381 = vcmp.gt.s32.totalorder %v2380, 0
        %v2382 = vsel %vm2381, %v2380, 0
        %v2383 = vshrl.u32 %v2382, 5
        %v2384 = vand.u32 %v2382, 31
        %v2385 = vsub.s32 32, %v2384
        %v2386 = vshrl.u32 683565275, %v2385
        %v2387 = vshll.u32 683565275, %v2384
        %v2388 = vshrl.u32 2475754826, %v2385
        %v2389 = vor.u32 %v2387, %v2388
        %v2390 = vshll.u32 2475754826, %v2384
        %v2391 = vshrl.u32 2131351028, %v2385
        %v2392 = vor.u32 %v2390, %v2391
        %v2393 = vshll.u32 2131351028, %v2384
        %v2394 = vshrl.u32 2102212464, %v2385
        %v2395 = vor.u32 %v2393, %v2394
        %v2396 = vshll.u32 2102212464, %v2384
        %v2397 = vshrl.u32 920167782, %v2385
        %v2398 = vor.u32 %v2396, %v2397
        %v2399 = vshll.u32 920167782, %v2384
        %v2400 = vshrl.u32 1326507024, %v2385
        %v2401 = vor.u32 %v2399, %v2400
        %vm2402 = vcmp.lt.s32.totalorder %v2383, 1
        %vm2403 = vcmp.lt.s32.totalorder %v2383, 2
        %vm2404 = vcmp.lt.s32.totalorder %v2383, 3
        %vm2405 = vcmp.lt.s32.totalorder %v2383, 4
        %v2406 = vsel %vm2402, %v2386, %v2389
        %v2407 = vsel %vm2405, %v2395, 2102212464
        %v2408 = vsel %vm2404, %v2392, %v2407
        %v2409 = vsel %vm2403, %v2406, %v2408
        %v2410 = vsel %vm2402, %v2389, %v2392
        %v2411 = vsel %vm2405, %v2398, 920167782
        %v2412 = vsel %vm2404, %v2395, %v2411
        %v2413 = vsel %vm2403, %v2410, %v2412
        %v2414 = vsel %vm2402, %v2392, %v2395
        %v2415 = vsel %vm2405, %v2401, 1326507024
        %v2416 = vsel %vm2404, %v2398, %v2415
        %v2417 = vsel %vm2403, %v2414, %v2416
        %v2418 = vshll.u32 %v2378, 8
        %v2419 = vmul.u32.u64.compose %v2418, %v2417
        %v2420 = vextract.low.u32 %v2419
        %v2421 = vextract.high.u32 %v2419
        %v2422 = vmul.u32.u64.compose %v2418, %v2413
        %v2423 = vextract.low.u32 %v2422
        %v2424 = vextract.high.u32 %v2422
        %v2425 = vmul.u32 %v2418, %v2409
        %v2426 = vadd.s32 %v2421, %v2423
        %vm2427 = vc.u32 %v2421, %v2423
        %v2428 = vadd.s32 %v2424, 1
        %v2429 = vsel %vm2427, %v2428, %v2424
        %v2430 = vadd.s32 %v2425, %v2429
        %v2431 = vadd.s32 %v2430, 536870912
        %v2432 = vshrl.u32 %v2431, 30
        %v2433 = vshll.u32 %v2432, 30
        %v2434 = vsub.s32 %v2430, %v2433
        %vm2435 = vcmp.lt.s32.totalorder %v2434, 0
        %v2436 = vsub.s32 0, %v2434
        %v2437 = vsel %vm2435, %v2436, %v2434
        %v2438 = vclz %v2437
        %v2439 = vsub.s32 %v2438, 2
        %vm2440 = vcmp.gt.s32.totalorder 0, %v2439
        %v2441 = vsel %vm2440, 0, %v2439
        %v2442 = vsub.s32 32, %v2441
        %v2443 = vshll.u32 %v2434, %v2441
        %v2444 = vshrl.u32 %v2426, %v2442
        %v2445 = vor.u32 %v2443, %v2444
        %v2446 = vsub.s32 4294967266, %v2441
        %v2447 = vadd.s32 %v2446, 127
        %v2448 = vshll.u32 %v2447, 23
        %v2449 = vor.u32 4788187, %v2448
        %v2450 = vand.u32 2147483647, %v2449
        %v2452 = vcvt.s32.f32 %v2445
        %v2453 = vmul.f32 %v2452, %v2450
        %v2454 = vxor.u32 %v2453, 2147483648
        %v2455 = vsel %vm2372, %v2454, %v2453
        %v2456 = vsub.s32 4, %v2432
        %v2457 = vsel %vm2372, %v2456, %v2432
        %v2458 = vsel %vm2371, %v2233, %v2455
        %v2459 = vsel %vm2371, 0, %v2457
        %v2460 = vcosq.f32.pop %v2458
        %v2461 = vsinq.f32.pop %v2458
        %vm2462 = vweird.f32 %v2233
        %v2463 = vadd.s32 %v2459, 3
        %v2464 = vand.u32 %v2463, 3
        %vm2465 = vcmp.lt.s32.totalorder %v2464, 2
        %vm2466 = vcmp.eq.s32.totalorder %v2464, 0
        %v2467 = vxor.u32 %v2461, 2147483648
        %v2468 = vsel %vm2466, %v2460, %v2467
        %vm2469 = vcmp.eq.s32.totalorder %v2464, 2
        %v2470 = vxor.u32 %v2460, 2147483648
        %v2471 = vsel %vm2469, %v2470, %v2461
        %v2472 = vsel %vm2465, %v2468, %v2471
        %v2473 = vsel %vm2462, nan, %v2472
        %v2474 = vand.u32 2147483647, %v2238
        %vm2475 = vcmp.le.f32.partialorder %v2474, 0.7853982
        %vm2476 = vcmp.lt.s32.totalorder %v2238, 0
        %v2477 = vand.u32 %v2238, 2139095040
        %v2478 = vshrl.u32 %v2477, 23
        %v2479 = vsub.s32 %v2478, 127
        %v2480 = vand.u32 2147483647, %v2238
        %v2481 = vand.u32 %v2480, 8388607
        %v2482 = vor.u32 %v2481, 8388608
        %v2483 = vsub.s32 0, %v2482
        %v2484 = vadd.s32 %v2479, 1
        %vm2485 = vcmp.gt.s32.totalorder %v2484, 0
        %v2486 = vsel %vm2485, %v2484, 0
        %v2487 = vshrl.u32 %v2486, 5
        %v2488 = vand.u32 %v2486, 31
        %v2489 = vsub.s32 32, %v2488
        %v2490 = vshrl.u32 683565275, %v2489
        %v2491 = vshll.u32 683565275, %v2488
        %v2492 = vshrl.u32 2475754826, %v2489
        %v2493 = vor.u32 %v2491, %v2492
        %v2494 = vshll.u32 2475754826, %v2488
        %v2495 = vshrl.u32 2131351028, %v2489
        %v2496 = vor.u32 %v2494, %v2495
        %v2497 = vshll.u32 2131351028, %v2488
        %v2498 = vshrl.u32 2102212464, %v2489
        %v2499 = vor.u32 %v2497, %v2498
        %v2500 = vshll.u32 2102212464, %v2488
        %v2501 = vshrl.u32 920167782, %v2489
        %v2502 = vor.u32 %v2500, %v2501
        %v2503 = vshll.u32 920167782, %v2488
        %v2504 = vshrl.u32 1326507024, %v2489
        %v2505 = vor.u32 %v2503, %v2504
        %vm2506 = vcmp.lt.s32.totalorder %v2487, 1
        %vm2507 = vcmp.lt.s32.totalorder %v2487, 2
        %vm2508 = vcmp.lt.s32.totalorder %v2487, 3
        %vm2509 = vcmp.lt.s32.totalorder %v2487, 4
        %v2510 = vsel %vm2506, %v2490, %v2493
        %v2511 = vsel %vm2509, %v2499, 2102212464
        %v2512 = vsel %vm2508, %v2496, %v2511
        %v2513 = vsel %vm2507, %v2510, %v2512
        %v2514 = vsel %vm2506, %v2493, %v2496
        %v2515 = vsel %vm2509, %v2502, 920167782
        %v2516 = vsel %vm2508, %v2499, %v2515
        %v2517 = vsel %vm2507, %v2514, %v2516
        %v2518 = vsel %vm2506, %v2496, %v2499
        %v2519 = vsel %vm2509, %v2505, 1326507024
        %v2520 = vsel %vm2508, %v2502, %v2519
        %v2521 = vsel %vm2507, %v2518, %v2520
        %v2522 = vshll.u32 %v2482, 8
        %v2523 = vmul.u32.u64.compose %v2522, %v2521
        %v2524 = vextract.low.u32 %v2523
        %v2525 = vextract.high.u32 %v2523
        %v2526 = vmul.u32.u64.compose %v2522, %v2517
        %v2527 = vextract.low.u32 %v2526
        %v2528 = vextract.high.u32 %v2526
        %v2529 = vmul.u32 %v2522, %v2513
        %v2530 = vadd.s32 %v2525, %v2527
        %vm2531 = vc.u32 %v2525, %v2527
        %v2532 = vadd.s32 %v2528, 1
        %v2533 = vsel %vm2531, %v2532, %v2528
        %v2534 = vadd.s32 %v2529, %v2533
        %v2535 = vadd.s32 %v2534, 536870912
        %v2536 = vshrl.u32 %v2535, 30
        %v2537 = vshll.u32 %v2536, 30
        %v2538 = vsub.s32 %v2534, %v2537
        %vm2539 = vcmp.lt.s32.totalorder %v2538, 0
        %v2540 = vsub.s32 0, %v2538
        %v2541 = vsel %vm2539, %v2540, %v2538
        %v2542 = vclz %v2541
        %v2543 = vsub.s32 %v2542, 2
        %vm2544 = vcmp.gt.s32.totalorder 0, %v2543
        %v2545 = vsel %vm2544, 0, %v2543
        %v2546 = vsub.s32 32, %v2545
        %v2547 = vshll.u32 %v2538, %v2545
        %v2548 = vshrl.u32 %v2530, %v2546
        %v2549 = vor.u32 %v2547, %v2548
        %v2550 = vsub.s32 4294967266, %v2545
        %v2551 = vadd.s32 %v2550, 127
        %v2552 = vshll.u32 %v2551, 23
        %v2553 = vor.u32 4788187, %v2552
        %v2554 = vand.u32 2147483647, %v2553
        %v2556 = vcvt.s32.f32 %v2549
        %v2557 = vmul.f32 %v2556, %v2554
        %v2558 = vxor.u32 %v2557, 2147483648
        %v2559 = vsel %vm2476, %v2558, %v2557
        %v2560 = vsub.s32 4, %v2536
        %v2561 = vsel %vm2476, %v2560, %v2536
        %v2562 = vsel %vm2475, %v2238, %v2559
        %v2563 = vsel %vm2475, 0, %v2561
        %v2564 = vcosq.f32.pop %v2562
        %v2565 = vsinq.f32.pop %v2562
        %vm2566 = vweird.f32 %v2238
        %v2567 = vadd.s32 %v2563, 3
        %v2568 = vand.u32 %v2567, 3
        %vm2569 = vcmp.lt.s32.totalorder %v2568, 2
        %vm2570 = vcmp.eq.s32.totalorder %v2568, 0
        %v2571 = vxor.u32 %v2565, 2147483648
        %v2572 = vsel %vm2570, %v2564, %v2571
        %vm2573 = vcmp.eq.s32.totalorder %v2568, 2
        %v2574 = vxor.u32 %v2564, 2147483648
        %v2575 = vsel %vm2573, %v2574, %v2565
        %v2576 = vsel %vm2569, %v2572, %v2575
        %v2577 = vsel %vm2566, nan, %v2576
        %v2578 = vand.u32 2147483647, %v2243
        %vm2579 = vcmp.le.f32.partialorder %v2578, 0.7853982
        %vm2580 = vcmp.lt.s32.totalorder %v2243, 0
        %v2581 = vand.u32 %v2243, 2139095040
        %v2582 = vshrl.u32 %v2581, 23
        %v2583 = vsub.s32 %v2582, 127
        %v2584 = vand.u32 2147483647, %v2243
        %v2585 = vand.u32 %v2584, 8388607
        %v2586 = vor.u32 %v2585, 8388608
        %v2587 = vsub.s32 0, %v2586
        %v2588 = vadd.s32 %v2583, 1
        %vm2589 = vcmp.gt.s32.totalorder %v2588, 0
        %v2590 = vsel %vm2589, %v2588, 0
        %v2591 = vshrl.u32 %v2590, 5
        %v2592 = vand.u32 %v2590, 31
        %v2593 = vsub.s32 32, %v2592
        %v2594 = vshrl.u32 683565275, %v2593
        %v2595 = vshll.u32 683565275, %v2592
        %v2596 = vshrl.u32 2475754826, %v2593
        %v2597 = vor.u32 %v2595, %v2596
        %v2598 = vshll.u32 2475754826, %v2592
        %v2599 = vshrl.u32 2131351028, %v2593
        %v2600 = vor.u32 %v2598, %v2599
        %v2601 = vshll.u32 2131351028, %v2592
        %v2602 = vshrl.u32 2102212464, %v2593
        %v2603 = vor.u32 %v2601, %v2602
        %v2604 = vshll.u32 2102212464, %v2592
        %v2605 = vshrl.u32 920167782, %v2593
        %v2606 = vor.u32 %v2604, %v2605
        %v2607 = vshll.u32 920167782, %v2592
        %v2608 = vshrl.u32 1326507024, %v2593
        %v2609 = vor.u32 %v2607, %v2608
        %vm2610 = vcmp.lt.s32.totalorder %v2591, 1
        %vm2611 = vcmp.lt.s32.totalorder %v2591, 2
        %vm2612 = vcmp.lt.s32.totalorder %v2591, 3
        %vm2613 = vcmp.lt.s32.totalorder %v2591, 4
        %v2614 = vsel %vm2610, %v2594, %v2597
        %v2615 = vsel %vm2613, %v2603, 2102212464
        %v2616 = vsel %vm2612, %v2600, %v2615
        %v2617 = vsel %vm2611, %v2614, %v2616
        %v2618 = vsel %vm2610, %v2597, %v2600
        %v2619 = vsel %vm2613, %v2606, 920167782
        %v2620 = vsel %vm2612, %v2603, %v2619
        %v2621 = vsel %vm2611, %v2618, %v2620
        %v2622 = vsel %vm2610, %v2600, %v2603
        %v2623 = vsel %vm2613, %v2609, 1326507024
        %v2624 = vsel %vm2612, %v2606, %v2623
        %v2625 = vsel %vm2611, %v2622, %v2624
        %v2626 = vshll.u32 %v2586, 8
        %v2627 = vmul.u32.u64.compose %v2626, %v2625
        %v2628 = vextract.low.u32 %v2627
        %v2629 = vextract.high.u32 %v2627
        %v2630 = vmul.u32.u64.compose %v2626, %v2621
        %v2631 = vextract.low.u32 %v2630
        %v2632 = vextract.high.u32 %v2630
        %v2633 = vmul.u32 %v2626, %v2617
        %v2634 = vadd.s32 %v2629, %v2631
        %vm2635 = vc.u32 %v2629, %v2631
        %v2636 = vadd.s32 %v2632, 1
        %v2637 = vsel %vm2635, %v2636, %v2632
        %v2638 = vadd.s32 %v2633, %v2637
        %v2639 = vadd.s32 %v2638, 536870912
        %v2640 = vshrl.u32 %v2639, 30
        %v2641 = vshll.u32 %v2640, 30
        %v2642 = vsub.s32 %v2638, %v2641
        %vm2643 = vcmp.lt.s32.totalorder %v2642, 0
        %v2644 = vsub.s32 0, %v2642
        %v2645 = vsel %vm2643, %v2644, %v2642
        %v2646 = vclz %v2645
        %v2647 = vsub.s32 %v2646, 2
        %vm2648 = vcmp.gt.s32.totalorder 0, %v2647
        %v2649 = vsel %vm2648, 0, %v2647
        %v2650 = vsub.s32 32, %v2649
        %v2651 = vshll.u32 %v2642, %v2649
        %v2652 = vshrl.u32 %v2634, %v2650
        %v2653 = vor.u32 %v2651, %v2652
        %v2654 = vsub.s32 4294967266, %v2649
        %v2655 = vadd.s32 %v2654, 127
        %v2656 = vshll.u32 %v2655, 23
        %v2657 = vor.u32 4788187, %v2656
        %v2658 = vand.u32 2147483647, %v2657
        %v2660 = vcvt.s32.f32 %v2653
        %v2661 = vmul.f32 %v2660, %v2658
        %v2662 = vxor.u32 %v2661, 2147483648
        %v2663 = vsel %vm2580, %v2662, %v2661
        %v2664 = vsub.s32 4, %v2640
        %v2665 = vsel %vm2580, %v2664, %v2640
        %v2666 = vsel %vm2579, %v2243, %v2663
        %v2667 = vsel %vm2579, 0, %v2665
        %v2668 = vcosq.f32.pop %v2666
        %v2669 = vsinq.f32.pop %v2666
        %vm2670 = vweird.f32 %v2243
        %v2671 = vadd.s32 %v2667, 3
        %v2672 = vand.u32 %v2671, 3
        %vm2673 = vcmp.lt.s32.totalorder %v2672, 2
        %vm2674 = vcmp.eq.s32.totalorder %v2672, 0
        %v2675 = vxor.u32 %v2669, 2147483648
        %v2676 = vsel %vm2674, %v2668, %v2675
        %vm2677 = vcmp.eq.s32.totalorder %v2672, 2
        %v2678 = vxor.u32 %v2668, 2147483648
        %v2679 = vsel %vm2677, %v2678, %v2669
        %v2680 = vsel %vm2673, %v2676, %v2679
        %v2681 = vsel %vm2670, nan, %v2680
        %v2682 = vand.u32 2147483647, %v2248
        %vm2683 = vcmp.le.f32.partialorder %v2682, 0.7853982
        %vm2684 = vcmp.lt.s32.totalorder %v2248, 0
        %v2685 = vand.u32 %v2248, 2139095040
        %v2686 = vshrl.u32 %v2685, 23
        %v2687 = vsub.s32 %v2686, 127
        %v2688 = vand.u32 2147483647, %v2248
        %v2689 = vand.u32 %v2688, 8388607
        %v2690 = vor.u32 %v2689, 8388608
        %v2691 = vsub.s32 0, %v2690
        %v2692 = vadd.s32 %v2687, 1
        %vm2693 = vcmp.gt.s32.totalorder %v2692, 0
        %v2694 = vsel %vm2693, %v2692, 0
        %v2695 = vshrl.u32 %v2694, 5
        %v2696 = vand.u32 %v2694, 31
        %v2697 = vsub.s32 32, %v2696
        %v2698 = vshrl.u32 683565275, %v2697
        %v2699 = vshll.u32 683565275, %v2696
        %v2700 = vshrl.u32 2475754826, %v2697
        %v2701 = vor.u32 %v2699, %v2700
        %v2702 = vshll.u32 2475754826, %v2696
        %v2703 = vshrl.u32 2131351028, %v2697
        %v2704 = vor.u32 %v2702, %v2703
        %v2705 = vshll.u32 2131351028, %v2696
        %v2706 = vshrl.u32 2102212464, %v2697
        %v2707 = vor.u32 %v2705, %v2706
        %v2708 = vshll.u32 2102212464, %v2696
        %v2709 = vshrl.u32 920167782, %v2697
        %v2710 = vor.u32 %v2708, %v2709
        %v2711 = vshll.u32 920167782, %v2696
        %v2712 = vshrl.u32 1326507024, %v2697
        %v2713 = vor.u32 %v2711, %v2712
        %vm2714 = vcmp.lt.s32.totalorder %v2695, 1
        %vm2715 = vcmp.lt.s32.totalorder %v2695, 2
        %vm2716 = vcmp.lt.s32.totalorder %v2695, 3
        %vm2717 = vcmp.lt.s32.totalorder %v2695, 4
        %v2718 = vsel %vm2714, %v2698, %v2701
        %v2719 = vsel %vm2717, %v2707, 2102212464
        %v2720 = vsel %vm2716, %v2704, %v2719
        %v2721 = vsel %vm2715, %v2718, %v2720
        %v2722 = vsel %vm2714, %v2701, %v2704
        %v2723 = vsel %vm2717, %v2710, 920167782
        %v2724 = vsel %vm2716, %v2707, %v2723
        %v2725 = vsel %vm2715, %v2722, %v2724
        %v2726 = vsel %vm2714, %v2704, %v2707
        %v2727 = vsel %vm2717, %v2713, 1326507024
        %v2728 = vsel %vm2716, %v2710, %v2727
        %v2729 = vsel %vm2715, %v2726, %v2728
        %v2730 = vshll.u32 %v2690, 8
        %v2731 = vmul.u32.u64.compose %v2730, %v2729
        %v2732 = vextract.low.u32 %v2731
        %v2733 = vextract.high.u32 %v2731
        %v2734 = vmul.u32.u64.compose %v2730, %v2725
        %v2735 = vextract.low.u32 %v2734
        %v2736 = vextract.high.u32 %v2734
        %v2737 = vmul.u32 %v2730, %v2721
        %v2738 = vadd.s32 %v2733, %v2735
        %vm2739 = vc.u32 %v2733, %v2735
        %v2740 = vadd.s32 %v2736, 1
        %v2741 = vsel %vm2739, %v2740, %v2736
        %v2742 = vadd.s32 %v2737, %v2741
        %v2743 = vadd.s32 %v2742, 536870912
        %v2744 = vshrl.u32 %v2743, 30
        %v2745 = vshll.u32 %v2744, 30
        %v2746 = vsub.s32 %v2742, %v2745
        %vm2747 = vcmp.lt.s32.totalorder %v2746, 0
        %v2748 = vsub.s32 0, %v2746
        %v2749 = vsel %vm2747, %v2748, %v2746
        %v2750 = vclz %v2749
        %v2751 = vsub.s32 %v2750, 2
        %vm2752 = vcmp.gt.s32.totalorder 0, %v2751
        %v2753 = vsel %vm2752, 0, %v2751
        %v2754 = vsub.s32 32, %v2753
        %v2755 = vshll.u32 %v2746, %v2753
        %v2756 = vshrl.u32 %v2738, %v2754
        %v2757 = vor.u32 %v2755, %v2756
        %v2758 = vsub.s32 4294967266, %v2753
        %v2759 = vadd.s32 %v2758, 127
        %v2760 = vshll.u32 %v2759, 23
        %v2761 = vor.u32 4788187, %v2760
        %v2762 = vand.u32 2147483647, %v2761
        %v2764 = vcvt.s32.f32 %v2757
        %v2765 = vmul.f32 %v2764, %v2762
        %v2766 = vxor.u32 %v2765, 2147483648
        %v2767 = vsel %vm2684, %v2766, %v2765
        %v2768 = vsub.s32 4, %v2744
        %v2769 = vsel %vm2684, %v2768, %v2744
        %v2770 = vsel %vm2683, %v2248, %v2767
        %v2771 = vsel %vm2683, 0, %v2769
        %v2772 = vcosq.f32.pop %v2770
        %v2773 = vsinq.f32.pop %v2770
        %vm2774 = vweird.f32 %v2248
        %v2775 = vadd.s32 %v2771, 3
        %v2776 = vand.u32 %v2775, 3
        %vm2777 = vcmp.lt.s32.totalorder %v2776, 2
        %vm2778 = vcmp.eq.s32.totalorder %v2776, 0
        %v2779 = vxor.u32 %v2773, 2147483648
        %v2780 = vsel %vm2778, %v2772, %v2779
        %vm2781 = vcmp.eq.s32.totalorder %v2776, 2
        %v2782 = vxor.u32 %v2772, 2147483648
        %v2783 = vsel %vm2781, %v2782, %v2773
        %v2784 = vsel %vm2777, %v2780, %v2783
        %v2785 = vsel %vm2774, nan, %v2784
        %v2786 = vand.u32 2147483647, %v2253
        %vm2787 = vcmp.le.f32.partialorder %v2786, 0.7853982
        %vm2788 = vcmp.lt.s32.totalorder %v2253, 0
        %v2789 = vand.u32 %v2253, 2139095040
        %v2790 = vshrl.u32 %v2789, 23
        %v2791 = vsub.s32 %v2790, 127
        %v2792 = vand.u32 2147483647, %v2253
        %v2793 = vand.u32 %v2792, 8388607
        %v2794 = vor.u32 %v2793, 8388608
        %v2795 = vsub.s32 0, %v2794
        %v2796 = vadd.s32 %v2791, 1
        %vm2797 = vcmp.gt.s32.totalorder %v2796, 0
        %v2798 = vsel %vm2797, %v2796, 0
        %v2799 = vshrl.u32 %v2798, 5
        %v2800 = vand.u32 %v2798, 31
        %v2801 = vsub.s32 32, %v2800
        %v2802 = vshrl.u32 683565275, %v2801
        %v2803 = vshll.u32 683565275, %v2800
        %v2804 = vshrl.u32 2475754826, %v2801
        %v2805 = vor.u32 %v2803, %v2804
        %v2806 = vshll.u32 2475754826, %v2800
        %v2807 = vshrl.u32 2131351028, %v2801
        %v2808 = vor.u32 %v2806, %v2807
        %v2809 = vshll.u32 2131351028, %v2800
        %v2810 = vshrl.u32 2102212464, %v2801
        %v2811 = vor.u32 %v2809, %v2810
        %v2812 = vshll.u32 2102212464, %v2800
        %v2813 = vshrl.u32 920167782, %v2801
        %v2814 = vor.u32 %v2812, %v2813
        %v2815 = vshll.u32 920167782, %v2800
        %v2816 = vshrl.u32 1326507024, %v2801
        %v2817 = vor.u32 %v2815, %v2816
        %vm2818 = vcmp.lt.s32.totalorder %v2799, 1
        %vm2819 = vcmp.lt.s32.totalorder %v2799, 2
        %vm2820 = vcmp.lt.s32.totalorder %v2799, 3
        %vm2821 = vcmp.lt.s32.totalorder %v2799, 4
        %v2822 = vsel %vm2818, %v2802, %v2805
        %v2823 = vsel %vm2821, %v2811, 2102212464
        %v2824 = vsel %vm2820, %v2808, %v2823
        %v2825 = vsel %vm2819, %v2822, %v2824
        %v2826 = vsel %vm2818, %v2805, %v2808
        %v2827 = vsel %vm2821, %v2814, 920167782
        %v2828 = vsel %vm2820, %v2811, %v2827
        %v2829 = vsel %vm2819, %v2826, %v2828
        %v2830 = vsel %vm2818, %v2808, %v2811
        %v2831 = vsel %vm2821, %v2817, 1326507024
        %v2832 = vsel %vm2820, %v2814, %v2831
        %v2833 = vsel %vm2819, %v2830, %v2832
        %v2834 = vshll.u32 %v2794, 8
        %v2835 = vmul.u32.u64.compose %v2834, %v2833
        %v2836 = vextract.low.u32 %v2835
        %v2837 = vextract.high.u32 %v2835
        %v2838 = vmul.u32.u64.compose %v2834, %v2829
        %v2839 = vextract.low.u32 %v2838
        %v2840 = vextract.high.u32 %v2838
        %v2841 = vmul.u32 %v2834, %v2825
        %v2842 = vadd.s32 %v2837, %v2839
        %vm2843 = vc.u32 %v2837, %v2839
        %v2844 = vadd.s32 %v2840, 1
        %v2845 = vsel %vm2843, %v2844, %v2840
        %v2846 = vadd.s32 %v2841, %v2845
        %v2847 = vadd.s32 %v2846, 536870912
        %v2848 = vshrl.u32 %v2847, 30
        %v2849 = vshll.u32 %v2848, 30
        %v2850 = vsub.s32 %v2846, %v2849
        %vm2851 = vcmp.lt.s32.totalorder %v2850, 0
        %v2852 = vsub.s32 0, %v2850
        %v2853 = vsel %vm2851, %v2852, %v2850
        %v2854 = vclz %v2853
        %v2855 = vsub.s32 %v2854, 2
        %vm2856 = vcmp.gt.s32.totalorder 0, %v2855
        %v2857 = vsel %vm2856, 0, %v2855
        %v2858 = vsub.s32 32, %v2857
        %v2859 = vshll.u32 %v2850, %v2857
        %v2860 = vshrl.u32 %v2842, %v2858
        %v2861 = vor.u32 %v2859, %v2860
        %v2862 = vsub.s32 4294967266, %v2857
        %v2863 = vadd.s32 %v2862, 127
        %v2864 = vshll.u32 %v2863, 23
        %v2865 = vor.u32 4788187, %v2864
        %v2866 = vand.u32 2147483647, %v2865
        %v2868 = vcvt.s32.f32 %v2861
        %v2869 = vmul.f32 %v2868, %v2866
        %v2870 = vxor.u32 %v2869, 2147483648
        %v2871 = vsel %vm2788, %v2870, %v2869
        %v2872 = vsub.s32 4, %v2848
        %v2873 = vsel %vm2788, %v2872, %v2848
        %v2874 = vsel %vm2787, %v2253, %v2871
        %v2875 = vsel %vm2787, 0, %v2873
        %v2876 = vcosq.f32.pop %v2874
        %v2877 = vsinq.f32.pop %v2874
        %vm2878 = vweird.f32 %v2253
        %v2879 = vadd.s32 %v2875, 3
        %v2880 = vand.u32 %v2879, 3
        %vm2881 = vcmp.lt.s32.totalorder %v2880, 2
        %vm2882 = vcmp.eq.s32.totalorder %v2880, 0
        %v2883 = vxor.u32 %v2877, 2147483648
        %v2884 = vsel %vm2882, %v2876, %v2883
        %vm2885 = vcmp.eq.s32.totalorder %v2880, 2
        %v2886 = vxor.u32 %v2876, 2147483648
        %v2887 = vsel %vm2885, %v2886, %v2877
        %v2888 = vsel %vm2881, %v2884, %v2887
        %v2889 = vsel %vm2878, nan, %v2888
        %v2890 = vand.u32 2147483647, %v2258
        %vm2891 = vcmp.le.f32.partialorder %v2890, 0.7853982
        %vm2892 = vcmp.lt.s32.totalorder %v2258, 0
        %v2893 = vand.u32 %v2258, 2139095040
        %v2894 = vshrl.u32 %v2893, 23
        %v2895 = vsub.s32 %v2894, 127
        %v2896 = vand.u32 2147483647, %v2258
        %v2897 = vand.u32 %v2896, 8388607
        %v2898 = vor.u32 %v2897, 8388608
        %v2899 = vsub.s32 0, %v2898
        %v2900 = vadd.s32 %v2895, 1
        %vm2901 = vcmp.gt.s32.totalorder %v2900, 0
        %v2902 = vsel %vm2901, %v2900, 0
        %v2903 = vshrl.u32 %v2902, 5
        %v2904 = vand.u32 %v2902, 31
        %v2905 = vsub.s32 32, %v2904
        %v2906 = vshrl.u32 683565275, %v2905
        %v2907 = vshll.u32 683565275, %v2904
        %v2908 = vshrl.u32 2475754826, %v2905
        %v2909 = vor.u32 %v2907, %v2908
        %v2910 = vshll.u32 2475754826, %v2904
        %v2911 = vshrl.u32 2131351028, %v2905
        %v2912 = vor.u32 %v2910, %v2911
        %v2913 = vshll.u32 2131351028, %v2904
        %v2914 = vshrl.u32 2102212464, %v2905
        %v2915 = vor.u32 %v2913, %v2914
        %v2916 = vshll.u32 2102212464, %v2904
        %v2917 = vshrl.u32 920167782, %v2905
        %v2918 = vor.u32 %v2916, %v2917
        %v2919 = vshll.u32 920167782, %v2904
        %v2920 = vshrl.u32 1326507024, %v2905
        %v2921 = vor.u32 %v2919, %v2920
        %vm2922 = vcmp.lt.s32.totalorder %v2903, 1
        %vm2923 = vcmp.lt.s32.totalorder %v2903, 2
        %vm2924 = vcmp.lt.s32.totalorder %v2903, 3
        %vm2925 = vcmp.lt.s32.totalorder %v2903, 4
        %v2926 = vsel %vm2922, %v2906, %v2909
        %v2927 = vsel %vm2925, %v2915, 2102212464
        %v2928 = vsel %vm2924, %v2912, %v2927
        %v2929 = vsel %vm2923, %v2926, %v2928
        %v2930 = vsel %vm2922, %v2909, %v2912
        %v2931 = vsel %vm2925, %v2918, 920167782
        %v2932 = vsel %vm2924, %v2915, %v2931
        %v2933 = vsel %vm2923, %v2930, %v2932
        %v2934 = vsel %vm2922, %v2912, %v2915
        %v2935 = vsel %vm2925, %v2921, 1326507024
        %v2936 = vsel %vm2924, %v2918, %v2935
        %v2937 = vsel %vm2923, %v2934, %v2936
        %v2938 = vshll.u32 %v2898, 8
        %v2939 = vmul.u32.u64.compose %v2938, %v2937
        %v2940 = vextract.low.u32 %v2939
        %v2941 = vextract.high.u32 %v2939
        %v2942 = vmul.u32.u64.compose %v2938, %v2933
        %v2943 = vextract.low.u32 %v2942
        %v2944 = vextract.high.u32 %v2942
        %v2945 = vmul.u32 %v2938, %v2929
        %v2946 = vadd.s32 %v2941, %v2943
        %vm2947 = vc.u32 %v2941, %v2943
        %v2948 = vadd.s32 %v2944, 1
        %v2949 = vsel %vm2947, %v2948, %v2944
        %v2950 = vadd.s32 %v2945, %v2949
        %v2951 = vadd.s32 %v2950, 536870912
        %v2952 = vshrl.u32 %v2951, 30
        %v2953 = vshll.u32 %v2952, 30
        %v2954 = vsub.s32 %v2950, %v2953
        %vm2955 = vcmp.lt.s32.totalorder %v2954, 0
        %v2956 = vsub.s32 0, %v2954
        %v2957 = vsel %vm2955, %v2956, %v2954
        %v2958 = vclz %v2957
        %v2959 = vsub.s32 %v2958, 2
        %vm2960 = vcmp.gt.s32.totalorder 0, %v2959
        %v2961 = vsel %vm2960, 0, %v2959
        %v2962 = vsub.s32 32, %v2961
        %v2963 = vshll.u32 %v2954, %v2961
        %v2964 = vshrl.u32 %v2946, %v2962
        %v2965 = vor.u32 %v2963, %v2964
        %v2966 = vsub.s32 4294967266, %v2961
        %v2967 = vadd.s32 %v2966, 127
        %v2968 = vshll.u32 %v2967, 23
        %v2969 = vor.u32 4788187, %v2968
        %v2970 = vand.u32 2147483647, %v2969
        %v2972 = vcvt.s32.f32 %v2965
        %v2973 = vmul.f32 %v2972, %v2970
        %v2974 = vxor.u32 %v2973, 2147483648
        %v2975 = vsel %vm2892, %v2974, %v2973
        %v2976 = vsub.s32 4, %v2952
        %v2977 = vsel %vm2892, %v2976, %v2952
        %v2978 = vsel %vm2891, %v2258, %v2975
        %v2979 = vsel %vm2891, 0, %v2977
        %v2980 = vcosq.f32.pop %v2978
        %v2981 = vsinq.f32.pop %v2978
        %vm2982 = vweird.f32 %v2258
        %v2983 = vadd.s32 %v2979, 3
        %v2984 = vand.u32 %v2983, 3
        %vm2985 = vcmp.lt.s32.totalorder %v2984, 2
        %vm2986 = vcmp.eq.s32.totalorder %v2984, 0
        %v2987 = vxor.u32 %v2981, 2147483648
        %v2988 = vsel %vm2986, %v2980, %v2987
        %vm2989 = vcmp.eq.s32.totalorder %v2984, 2
        %v2990 = vxor.u32 %v2980, 2147483648
        %v2991 = vsel %vm2989, %v2990, %v2981
        %v2992 = vsel %vm2985, %v2988, %v2991
        %v2993 = vsel %vm2982, nan, %v2992
        %v2994 = vand.u32 2147483647, %v2263
        %vm2995 = vcmp.le.f32.partialorder %v2994, 0.7853982
        %vm2996 = vcmp.lt.s32.totalorder %v2263, 0
        %v2997 = vand.u32 %v2263, 2139095040
        %v2998 = vshrl.u32 %v2997, 23
        %v2999 = vsub.s32 %v2998, 127
        %v3000 = vand.u32 2147483647, %v2263
        %v3001 = vand.u32 %v3000, 8388607
        %v3002 = vor.u32 %v3001, 8388608
        %v3003 = vsub.s32 0, %v3002
        %v3004 = vadd.s32 %v2999, 1
        %vm3005 = vcmp.gt.s32.totalorder %v3004, 0
        %v3006 = vsel %vm3005, %v3004, 0
        %v3007 = vshrl.u32 %v3006, 5
        %v3008 = vand.u32 %v3006, 31
        %v3009 = vsub.s32 32, %v3008
        %v3010 = vshrl.u32 683565275, %v3009
        %v3011 = vshll.u32 683565275, %v3008
        %v3012 = vshrl.u32 2475754826, %v3009
        %v3013 = vor.u32 %v3011, %v3012
        %v3014 = vshll.u32 2475754826, %v3008
        %v3015 = vshrl.u32 2131351028, %v3009
        %v3016 = vor.u32 %v3014, %v3015
        %v3017 = vshll.u32 2131351028, %v3008
        %v3018 = vshrl.u32 2102212464, %v3009
        %v3019 = vor.u32 %v3017, %v3018
        %v3020 = vshll.u32 2102212464, %v3008
        %v3021 = vshrl.u32 920167782, %v3009
        %v3022 = vor.u32 %v3020, %v3021
        %v3023 = vshll.u32 920167782, %v3008
        %v3024 = vshrl.u32 1326507024, %v3009
        %v3025 = vor.u32 %v3023, %v3024
        %vm3026 = vcmp.lt.s32.totalorder %v3007, 1
        %vm3027 = vcmp.lt.s32.totalorder %v3007, 2
        %vm3028 = vcmp.lt.s32.totalorder %v3007, 3
        %vm3029 = vcmp.lt.s32.totalorder %v3007, 4
        %v3030 = vsel %vm3026, %v3010, %v3013
        %v3031 = vsel %vm3029, %v3019, 2102212464
        %v3032 = vsel %vm3028, %v3016, %v3031
        %v3033 = vsel %vm3027, %v3030, %v3032
        %v3034 = vsel %vm3026, %v3013, %v3016
        %v3035 = vsel %vm3029, %v3022, 920167782
        %v3036 = vsel %vm3028, %v3019, %v3035
        %v3037 = vsel %vm3027, %v3034, %v3036
        %v3038 = vsel %vm3026, %v3016, %v3019
        %v3039 = vsel %vm3029, %v3025, 1326507024
        %v3040 = vsel %vm3028, %v3022, %v3039
        %v3041 = vsel %vm3027, %v3038, %v3040
        %v3042 = vshll.u32 %v3002, 8
        %v3043 = vmul.u32.u64.compose %v3042, %v3041
        %v3044 = vextract.low.u32 %v3043
        %v3045 = vextract.high.u32 %v3043
        %v3046 = vmul.u32.u64.compose %v3042, %v3037
        %v3047 = vextract.low.u32 %v3046
        %v3048 = vextract.high.u32 %v3046
        %v3049 = vmul.u32 %v3042, %v3033
        %v3050 = vadd.s32 %v3045, %v3047
        %vm3051 = vc.u32 %v3045, %v3047
        %v3052 = vadd.s32 %v3048, 1
        %v3053 = vsel %vm3051, %v3052, %v3048
        %v3054 = vadd.s32 %v3049, %v3053
        %v3055 = vadd.s32 %v3054, 536870912
        %v3056 = vshrl.u32 %v3055, 30
        %v3057 = vshll.u32 %v3056, 30
        %v3058 = vsub.s32 %v3054, %v3057
        %vm3059 = vcmp.lt.s32.totalorder %v3058, 0
        %v3060 = vsub.s32 0, %v3058
        %v3061 = vsel %vm3059, %v3060, %v3058
        %v3062 = vclz %v3061
        %v3063 = vsub.s32 %v3062, 2
        %vm3064 = vcmp.gt.s32.totalorder 0, %v3063
        %v3065 = vsel %vm3064, 0, %v3063
        %v3066 = vsub.s32 32, %v3065
        %v3067 = vshll.u32 %v3058, %v3065
        %v3068 = vshrl.u32 %v3050, %v3066
        %v3069 = vor.u32 %v3067, %v3068
        %v3070 = vsub.s32 4294967266, %v3065
        %v3071 = vadd.s32 %v3070, 127
        %v3072 = vshll.u32 %v3071, 23
        %v3073 = vor.u32 4788187, %v3072
        %v3074 = vand.u32 2147483647, %v3073
        %v3076 = vcvt.s32.f32 %v3069
        %v3077 = vmul.f32 %v3076, %v3074
        %v3078 = vxor.u32 %v3077, 2147483648
        %v3079 = vsel %vm2996, %v3078, %v3077
        %v3080 = vsub.s32 4, %v3056
        %v3081 = vsel %vm2996, %v3080, %v3056
        %v3082 = vsel %vm2995, %v2263, %v3079
        %v3083 = vsel %vm2995, 0, %v3081
        %v3084 = vcosq.f32.pop %v3082
        %v3085 = vsinq.f32.pop %v3082
        %vm3086 = vweird.f32 %v2263
        %v3087 = vadd.s32 %v3083, 3
        %v3088 = vand.u32 %v3087, 3
        %vm3089 = vcmp.lt.s32.totalorder %v3088, 2
        %vm3090 = vcmp.eq.s32.totalorder %v3088, 0
        %v3091 = vxor.u32 %v3085, 2147483648
        %v3092 = vsel %vm3090, %v3084, %v3091
        %vm3093 = vcmp.eq.s32.totalorder %v3088, 2
        %v3094 = vxor.u32 %v3084, 2147483648
        %v3095 = vsel %vm3093, %v3094, %v3085
        %v3096 = vsel %vm3089, %v3092, %v3095
        %v3097 = vsel %vm3086, nan, %v3096
        %s3098 = scalar_lea.vmem [#allocation5], 384
        %v3099 = vld [vmem:[%s3098] sm:$0xff]
        %v3100 = vld [vmem:[%s3098 + $0x8] sm:$0xff]
        %v3101 = vld [vmem:[%s3098 + $0x10] sm:$0xff]
        %v3102 = vld [vmem:[%s3098 + $0x18] sm:$0xff]
        %v3103 = vld [vmem:[%s3098 + $0x20] sm:$0xff]
        %v3104 = vld [vmem:[%s3098 + $0x28] sm:$0xff]
        %v3105 = vld [vmem:[%s3098 + $0x30] sm:$0xff]
        %v3106 = vld [vmem:[%s3098 + $0x38] sm:$0xff]
        %v3107 = vld [vmem:[%s3098 + $0x40] sm:$0xff]
        %v3108 = vld [vmem:[%s3098 + $0x48] sm:$0xff]
        %v3109 = vld [vmem:[%s3098 + $0x50] sm:$0xff]
        %v3110 = vld [vmem:[%s3098 + $0x58] sm:$0xff]
        %v3111 = vld [vmem:[%s3098 + $0x60] sm:$0xff]
        %v3112 = vld [vmem:[%s3098 + $0x68] sm:$0xff]
        %v3113 = vld [vmem:[%s3098 + $0x70] sm:$0xff]
        %v3114 = vld [vmem:[%s3098 + $0x78] sm:$0xff]
        %s3115 = scalar_lea.vmem %s2, 3
        %v3116 = vld [vmem:[%s3115] sm:$0x1]
        %v3118 = vlaneseq
        %v3119 = vshrl.u32 %v3118, 7
        %v3120 = vsub.s32 0, %v3119
        %v3121 = vrot.slane %v3116, %v3120
        %3123 = vmatprep.subr.mxu0 0.0
        %3124 = vmatpush1.msra.mxu0 %v3099
        %3125 = vmatprep.subr.mxu0 0.0
        %3126 = vmatpush1.msra.mxu0 %v3100
        %3127 = vmatprep.subr.mxu0 0.0
        %3128 = vmatpush1.msra.mxu0 %v3101
        %3129 = vmatprep.subr.mxu0 0.0
        %3130 = vmatpush1.msra.mxu0 %v3102
        %3131 = vmatprep.subr.mxu0 0.0
        %3132 = vmatpush1.msra.mxu0 %v3103
        %3133 = vmatprep.subr.mxu0 0.0
        %3134 = vmatpush1.msra.mxu0 %v3104
        %3135 = vmatprep.subr.mxu0 0.0
        %3136 = vmatpush1.msra.mxu0 %v3105
        %3137 = vmatprep.subr.mxu0 0.0
        %3138 = vmatpush1.msra.mxu0 %v3106
        %3139 = vmatprep.subr.mxu0 0.0
        %3140 = vmatpush1.msra.mxu0 %v3107
        %3141 = vmatprep.subr.mxu0 0.0
        %3142 = vmatpush1.msra.mxu0 %v3108
        %3143 = vmatprep.subr.mxu0 0.0
        %3144 = vmatpush1.msra.mxu0 %v3109
        %3145 = vmatprep.subr.mxu0 0.0
        %3146 = vmatpush1.msra.mxu0 %v3110
        %3147 = vmatprep.subr.mxu0 0.0
        %3148 = vmatpush1.msra.mxu0 %v3111
        %3149 = vmatprep.subr.mxu0 0.0
        %3150 = vmatpush1.msra.mxu0 %v3112
        %3151 = vmatprep.subr.mxu0 0.0
        %3152 = vmatpush1.msra.mxu0 %v3113
        %3153 = vmatprep.subr.mxu0 0.0
        %3154 = vmatpush1.msra.mxu0 %v3114
        %3155 = vmatprep.subr.mxu0 0.0
        %3156 = vmatpush1.msra.mxu0 0.0
        %3157 = vmatprep.subr.mxu0 0.0
        %3158 = vmatpush1.msra.mxu0 0.0
        %3159 = vmatprep.subr.mxu0 0.0
        %3160 = vmatpush1.msra.mxu0 0.0
        %3161 = vmatprep.subr.mxu0 0.0
        %3162 = vmatpush1.msra.mxu0 0.0
        %3163 = vmatprep.subr.mxu0 0.0
        %3164 = vmatpush1.msra.mxu0 0.0
        %3165 = vmatprep.subr.mxu0 0.0
        %3166 = vmatpush1.msra.mxu0 0.0
        %3167 = vmatprep.subr.mxu0 0.0
        %3168 = vmatpush1.msra.mxu0 0.0
        %3169 = vmatprep.subr.mxu0 0.0
        %3170 = vmatpush1.msra.mxu0 0.0
        %3171 = vmatprep.subr.mxu0 0.0
        %3172 = vmatpush1.msra.mxu0 0.0
        %3173 = vmatprep.subr.mxu0 0.0
        %3174 = vmatpush1.msra.mxu0 0.0
        %3175 = vmatprep.subr.mxu0 0.0
        %3176 = vmatpush1.msra.mxu0 0.0
        %3177 = vmatprep.subr.mxu0 0.0
        %3178 = vmatpush1.msra.mxu0 0.0
        %3179 = vmatprep.subr.mxu0 0.0
        %3180 = vmatpush1.msra.mxu0 0.0
        %3181 = vmatprep.subr.mxu0 0.0
        %3182 = vmatpush1.msra.mxu0 0.0
        %3183 = vmatprep.subr.mxu0 0.0
        %3184 = vmatpush1.msra.mxu0 0.0
        %3185 = vmatprep.subr.mxu0 0.0
        %3186 = vmatpush1.msra.mxu0 0.0
        %3187 = vmatprep.mubr.f32.mxu0 0.0
        %3188 = vmatmul.mubr.f32.gmra.mrb[0].mxu0 %v2369
        %v3189 = vpop.f32.mrb[0].mxu0
        %v3190 = vadd.f32 %v3121, %v3189
        %v3191 = vpop.f32.mrb[0].mxu0
        %3192 = vmatprep.mubr.f32.mxu0 0.0
        %3193 = vmatmul.mubr.f32.gmra.mrb[0].mxu0 %v2473
        %v3194 = vpop.f32.mrb[0].mxu0
        %v3195 = vadd.f32 %v3121, %v3194
        %v3196 = vpop.f32.mrb[0].mxu0
        %3197 = vmatprep.mubr.f32.mxu0 0.0
        %3198 = vmatmul.mubr.f32.gmra.mrb[0].mxu0 %v2577
        %v3199 = vpop.f32.mrb[0].mxu0
        %v3200 = vadd.f32 %v3121, %v3199
        %v3201 = vpop.f32.mrb[0].mxu0
        %3202 = vmatprep.mubr.f32.mxu0 0.0
        %3203 = vmatmul.mubr.f32.gmra.mrb[0].mxu0 %v2681
        %v3204 = vpop.f32.mrb[0].mxu0
        %v3205 = vadd.f32 %v3121, %v3204
        %v3206 = vpop.f32.mrb[0].mxu0
        %3207 = vmatprep.mubr.f32.mxu0 0.0
        %3208 = vmatmul.mubr.f32.gmra.mrb[0].mxu0 %v2785
        %v3209 = vpop.f32.mrb[0].mxu0
        %v3210 = vadd.f32 %v3121, %v3209
        %v3211 = vpop.f32.mrb[0].mxu0
        %3212 = vmatprep.mubr.f32.mxu0 0.0
        %3213 = vmatmul.mubr.f32.gmra.mrb[0].mxu0 %v2889
        %v3214 = vpop.f32.mrb[0].mxu0
        %v3215 = vadd.f32 %v3121, %v3214
        %v3216 = vpop.f32.mrb[0].mxu0
        %3217 = vmatprep.mubr.f32.mxu0 0.0
        %3218 = vmatmul.mubr.f32.gmra.mrb[0].mxu0 %v2993
        %v3219 = vpop.f32.mrb[0].mxu0
        %v3220 = vadd.f32 %v3121, %v3219
        %v3221 = vpop.f32.mrb[0].mxu0
        %3222 = vmatprep.mubr.f32.mxu0 0.0
        %3223 = vmatmul.mubr.f32.gmra.mrb[0].mxu0 %v3097
        %v3224 = vpop.f32.mrb[0].mxu0
        %v3225 = vadd.f32 %v3121, %v3224
        %v3226 = vpop.f32.mrb[0].mxu0
        %3227 = vdwg.mxu0
        %v3228 = vadd.f32 %v3190, %v206
        %v3229 = vadd.f32 %v3195, %v207
        %v3230 = vadd.f32 %v3200, %v208
        %v3231 = vadd.f32 %v3205, %v209
        %v3232 = vadd.f32 %v3210, %v210
        %v3233 = vadd.f32 %v3215, %v211
        %v3234 = vadd.f32 %v3220, %v212
        %v3235 = vadd.f32 %v3225, %v213
        %v3236 = vand.u32 2147483647, %v3228
        %vm3237 = vcmp.le.f32.partialorder %v3236, 0.7853982
        %vm3238 = vcmp.lt.s32.totalorder %v3228, 0
        %v3239 = vand.u32 %v3228, 2139095040
        %v3240 = vshrl.u32 %v3239, 23
        %v3241 = vsub.s32 %v3240, 127
        %v3242 = vand.u32 2147483647, %v3228
        %v3243 = vand.u32 %v3242, 8388607
        %v3244 = vor.u32 %v3243, 8388608
        %v3245 = vsub.s32 0, %v3244
        %v3246 = vadd.s32 %v3241, 1
        %vm3247 = vcmp.gt.s32.totalorder %v3246, 0
        %v3248 = vsel %vm3247, %v3246, 0
        %v3249 = vshrl.u32 %v3248, 5
        %v3250 = vand.u32 %v3248, 31
        %v3251 = vsub.s32 32, %v3250
        %v3252 = vshrl.u32 683565275, %v3251
        %v3253 = vshll.u32 683565275, %v3250
        %v3254 = vshrl.u32 2475754826, %v3251
        %v3255 = vor.u32 %v3253, %v3254
        %v3256 = vshll.u32 2475754826, %v3250
        %v3257 = vshrl.u32 2131351028, %v3251
        %v3258 = vor.u32 %v3256, %v3257
        %v3259 = vshll.u32 2131351028, %v3250
        %v3260 = vshrl.u32 2102212464, %v3251
        %v3261 = vor.u32 %v3259, %v3260
        %v3262 = vshll.u32 2102212464, %v3250
        %v3263 = vshrl.u32 920167782, %v3251
        %v3264 = vor.u32 %v3262, %v3263
        %v3265 = vshll.u32 920167782, %v3250
        %v3266 = vshrl.u32 1326507024, %v3251
        %v3267 = vor.u32 %v3265, %v3266
        %vm3268 = vcmp.lt.s32.totalorder %v3249, 1
        %vm3269 = vcmp.lt.s32.totalorder %v3249, 2
        %vm3270 = vcmp.lt.s32.totalorder %v3249, 3
        %vm3271 = vcmp.lt.s32.totalorder %v3249, 4
        %v3272 = vsel %vm3268, %v3252, %v3255
        %v3273 = vsel %vm3271, %v3261, 2102212464
        %v3274 = vsel %vm3270, %v3258, %v3273
        %v3275 = vsel %vm3269, %v3272, %v3274
        %v3276 = vsel %vm3268, %v3255, %v3258
        %v3277 = vsel %vm3271, %v3264, 920167782
        %v3278 = vsel %vm3270, %v3261, %v3277
        %v3279 = vsel %vm3269, %v3276, %v3278
        %v3280 = vsel %vm3268, %v3258, %v3261
        %v3281 = vsel %vm3271, %v3267, 1326507024
        %v3282 = vsel %vm3270, %v3264, %v3281
        %v3283 = vsel %vm3269, %v3280, %v3282
        %v3284 = vshll.u32 %v3244, 8
        %v3285 = vmul.u32.u64.compose %v3284, %v3283
        %v3286 = vextract.low.u32 %v3285
        %v3287 = vextract.high.u32 %v3285
        %v3288 = vmul.u32.u64.compose %v3284, %v3279
        %v3289 = vextract.low.u32 %v3288
        %v3290 = vextract.high.u32 %v3288
        %v3291 = vmul.u32 %v3284, %v3275
        %v3292 = vadd.s32 %v3287, %v3289
        %vm3293 = vc.u32 %v3287, %v3289
        %v3294 = vadd.s32 %v3290, 1
        %v3295 = vsel %vm3293, %v3294, %v3290
        %v3296 = vadd.s32 %v3291, %v3295
        %v3297 = vadd.s32 %v3296, 536870912
        %v3298 = vshrl.u32 %v3297, 30
        %v3299 = vshll.u32 %v3298, 30
        %v3300 = vsub.s32 %v3296, %v3299
        %vm3301 = vcmp.lt.s32.totalorder %v3300, 0
        %v3302 = vsub.s32 0, %v3300
        %v3303 = vsel %vm3301, %v3302, %v3300
        %v3304 = vclz %v3303
        %v3305 = vsub.s32 %v3304, 2
        %vm3306 = vcmp.gt.s32.totalorder 0, %v3305
        %v3307 = vsel %vm3306, 0, %v3305
        %v3308 = vsub.s32 32, %v3307
        %v3309 = vshll.u32 %v3300, %v3307
        %v3310 = vshrl.u32 %v3292, %v3308
        %v3311 = vor.u32 %v3309, %v3310
        %v3312 = vsub.s32 4294967266, %v3307
        %v3313 = vadd.s32 %v3312, 127
        %v3314 = vshll.u32 %v3313, 23
        %v3315 = vor.u32 4788187, %v3314
        %v3316 = vand.u32 2147483647, %v3315
        %v3318 = vcvt.s32.f32 %v3311
        %v3319 = vmul.f32 %v3318, %v3316
        %v3320 = vxor.u32 %v3319, 2147483648
        %v3321 = vsel %vm3238, %v3320, %v3319
        %v3322 = vsub.s32 4, %v3298
        %v3323 = vsel %vm3238, %v3322, %v3298
        %v3324 = vsel %vm3237, %v3228, %v3321
        %v3325 = vsel %vm3237, 0, %v3323
        %v3326 = vcosq.f32.pop %v3324
        %v3327 = vsinq.f32.pop %v3324
        %vm3328 = vweird.f32 %v3228
        %v3329 = vadd.s32 %v3325, 3
        %v3330 = vand.u32 %v3329, 3
        %vm3331 = vcmp.lt.s32.totalorder %v3330, 2
        %vm3332 = vcmp.eq.s32.totalorder %v3330, 0
        %v3333 = vxor.u32 %v3327, 2147483648
        %v3334 = vsel %vm3332, %v3326, %v3333
        %vm3335 = vcmp.eq.s32.totalorder %v3330, 2
        %v3336 = vxor.u32 %v3326, 2147483648
        %v3337 = vsel %vm3335, %v3336, %v3327
        %v3338 = vsel %vm3331, %v3334, %v3337
        %v3339 = vsel %vm3328, nan, %v3338
        %v3340 = vand.u32 2147483647, %v3229
        %vm3341 = vcmp.le.f32.partialorder %v3340, 0.7853982
        %vm3342 = vcmp.lt.s32.totalorder %v3229, 0
        %v3343 = vand.u32 %v3229, 2139095040
        %v3344 = vshrl.u32 %v3343, 23
        %v3345 = vsub.s32 %v3344, 127
        %v3346 = vand.u32 2147483647, %v3229
        %v3347 = vand.u32 %v3346, 8388607
        %v3348 = vor.u32 %v3347, 8388608
        %v3349 = vsub.s32 0, %v3348
        %v3350 = vadd.s32 %v3345, 1
        %vm3351 = vcmp.gt.s32.totalorder %v3350, 0
        %v3352 = vsel %vm3351, %v3350, 0
        %v3353 = vshrl.u32 %v3352, 5
        %v3354 = vand.u32 %v3352, 31
        %v3355 = vsub.s32 32, %v3354
        %v3356 = vshrl.u32 683565275, %v3355
        %v3357 = vshll.u32 683565275, %v3354
        %v3358 = vshrl.u32 2475754826, %v3355
        %v3359 = vor.u32 %v3357, %v3358
        %v3360 = vshll.u32 2475754826, %v3354
        %v3361 = vshrl.u32 2131351028, %v3355
        %v3362 = vor.u32 %v3360, %v3361
        %v3363 = vshll.u32 2131351028, %v3354
        %v3364 = vshrl.u32 2102212464, %v3355
        %v3365 = vor.u32 %v3363, %v3364
        %v3366 = vshll.u32 2102212464, %v3354
        %v3367 = vshrl.u32 920167782, %v3355
        %v3368 = vor.u32 %v3366, %v3367
        %v3369 = vshll.u32 920167782, %v3354
        %v3370 = vshrl.u32 1326507024, %v3355
        %v3371 = vor.u32 %v3369, %v3370
        %vm3372 = vcmp.lt.s32.totalorder %v3353, 1
        %vm3373 = vcmp.lt.s32.totalorder %v3353, 2
        %vm3374 = vcmp.lt.s32.totalorder %v3353, 3
        %vm3375 = vcmp.lt.s32.totalorder %v3353, 4
        %v3376 = vsel %vm3372, %v3356, %v3359
        %v3377 = vsel %vm3375, %v3365, 2102212464
        %v3378 = vsel %vm3374, %v3362, %v3377
        %v3379 = vsel %vm3373, %v3376, %v3378
        %v3380 = vsel %vm3372, %v3359, %v3362
        %v3381 = vsel %vm3375, %v3368, 920167782
        %v3382 = vsel %vm3374, %v3365, %v3381
        %v3383 = vsel %vm3373, %v3380, %v3382
        %v3384 = vsel %vm3372, %v3362, %v3365
        %v3385 = vsel %vm3375, %v3371, 1326507024
        %v3386 = vsel %vm3374, %v3368, %v3385
        %v3387 = vsel %vm3373, %v3384, %v3386
        %v3388 = vshll.u32 %v3348, 8
        %v3389 = vmul.u32.u64.compose %v3388, %v3387
        %v3390 = vextract.low.u32 %v3389
        %v3391 = vextract.high.u32 %v3389
        %v3392 = vmul.u32.u64.compose %v3388, %v3383
        %v3393 = vextract.low.u32 %v3392
        %v3394 = vextract.high.u32 %v3392
        %v3395 = vmul.u32 %v3388, %v3379
        %v3396 = vadd.s32 %v3391, %v3393
        %vm3397 = vc.u32 %v3391, %v3393
        %v3398 = vadd.s32 %v3394, 1
        %v3399 = vsel %vm3397, %v3398, %v3394
        %v3400 = vadd.s32 %v3395, %v3399
        %v3401 = vadd.s32 %v3400, 536870912
        %v3402 = vshrl.u32 %v3401, 30
        %v3403 = vshll.u32 %v3402, 30
        %v3404 = vsub.s32 %v3400, %v3403
        %vm3405 = vcmp.lt.s32.totalorder %v3404, 0
        %v3406 = vsub.s32 0, %v3404
        %v3407 = vsel %vm3405, %v3406, %v3404
        %v3408 = vclz %v3407
        %v3409 = vsub.s32 %v3408, 2
        %vm3410 = vcmp.gt.s32.totalorder 0, %v3409
        %v3411 = vsel %vm3410, 0, %v3409
        %v3412 = vsub.s32 32, %v3411
        %v3413 = vshll.u32 %v3404, %v3411
        %v3414 = vshrl.u32 %v3396, %v3412
        %v3415 = vor.u32 %v3413, %v3414
        %v3416 = vsub.s32 4294967266, %v3411
        %v3417 = vadd.s32 %v3416, 127
        %v3418 = vshll.u32 %v3417, 23
        %v3419 = vor.u32 4788187, %v3418
        %v3420 = vand.u32 2147483647, %v3419
        %v3422 = vcvt.s32.f32 %v3415
        %v3423 = vmul.f32 %v3422, %v3420
        %v3424 = vxor.u32 %v3423, 2147483648
        %v3425 = vsel %vm3342, %v3424, %v3423
        %v3426 = vsub.s32 4, %v3402
        %v3427 = vsel %vm3342, %v3426, %v3402
        %v3428 = vsel %vm3341, %v3229, %v3425
        %v3429 = vsel %vm3341, 0, %v3427
        %v3430 = vcosq.f32.pop %v3428
        %v3431 = vsinq.f32.pop %v3428
        %vm3432 = vweird.f32 %v3229
        %v3433 = vadd.s32 %v3429, 3
        %v3434 = vand.u32 %v3433, 3
        %vm3435 = vcmp.lt.s32.totalorder %v3434, 2
        %vm3436 = vcmp.eq.s32.totalorder %v3434, 0
        %v3437 = vxor.u32 %v3431, 2147483648
        %v3438 = vsel %vm3436, %v3430, %v3437
        %vm3439 = vcmp.eq.s32.totalorder %v3434, 2
        %v3440 = vxor.u32 %v3430, 2147483648
        %v3441 = vsel %vm3439, %v3440, %v3431
        %v3442 = vsel %vm3435, %v3438, %v3441
        %v3443 = vsel %vm3432, nan, %v3442
        %v3444 = vand.u32 2147483647, %v3230
        %vm3445 = vcmp.le.f32.partialorder %v3444, 0.7853982
        %vm3446 = vcmp.lt.s32.totalorder %v3230, 0
        %v3447 = vand.u32 %v3230, 2139095040
        %v3448 = vshrl.u32 %v3447, 23
        %v3449 = vsub.s32 %v3448, 127
        %v3450 = vand.u32 2147483647, %v3230
        %v3451 = vand.u32 %v3450, 8388607
        %v3452 = vor.u32 %v3451, 8388608
        %v3453 = vsub.s32 0, %v3452
        %v3454 = vadd.s32 %v3449, 1
        %vm3455 = vcmp.gt.s32.totalorder %v3454, 0
        %v3456 = vsel %vm3455, %v3454, 0
        %v3457 = vshrl.u32 %v3456, 5
        %v3458 = vand.u32 %v3456, 31
        %v3459 = vsub.s32 32, %v3458
        %v3460 = vshrl.u32 683565275, %v3459
        %v3461 = vshll.u32 683565275, %v3458
        %v3462 = vshrl.u32 2475754826, %v3459
        %v3463 = vor.u32 %v3461, %v3462
        %v3464 = vshll.u32 2475754826, %v3458
        %v3465 = vshrl.u32 2131351028, %v3459
        %v3466 = vor.u32 %v3464, %v3465
        %v3467 = vshll.u32 2131351028, %v3458
        %v3468 = vshrl.u32 2102212464, %v3459
        %v3469 = vor.u32 %v3467, %v3468
        %v3470 = vshll.u32 2102212464, %v3458
        %v3471 = vshrl.u32 920167782, %v3459
        %v3472 = vor.u32 %v3470, %v3471
        %v3473 = vshll.u32 920167782, %v3458
        %v3474 = vshrl.u32 1326507024, %v3459
        %v3475 = vor.u32 %v3473, %v3474
        %vm3476 = vcmp.lt.s32.totalorder %v3457, 1
        %vm3477 = vcmp.lt.s32.totalorder %v3457, 2
        %vm3478 = vcmp.lt.s32.totalorder %v3457, 3
        %vm3479 = vcmp.lt.s32.totalorder %v3457, 4
        %v3480 = vsel %vm3476, %v3460, %v3463
        %v3481 = vsel %vm3479, %v3469, 2102212464
        %v3482 = vsel %vm3478, %v3466, %v3481
        %v3483 = vsel %vm3477, %v3480, %v3482
        %v3484 = vsel %vm3476, %v3463, %v3466
        %v3485 = vsel %vm3479, %v3472, 920167782
        %v3486 = vsel %vm3478, %v3469, %v3485
        %v3487 = vsel %vm3477, %v3484, %v3486
        %v3488 = vsel %vm3476, %v3466, %v3469
        %v3489 = vsel %vm3479, %v3475, 1326507024
        %v3490 = vsel %vm3478, %v3472, %v3489
        %v3491 = vsel %vm3477, %v3488, %v3490
        %v3492 = vshll.u32 %v3452, 8
        %v3493 = vmul.u32.u64.compose %v3492, %v3491
        %v3494 = vextract.low.u32 %v3493
        %v3495 = vextract.high.u32 %v3493
        %v3496 = vmul.u32.u64.compose %v3492, %v3487
        %v3497 = vextract.low.u32 %v3496
        %v3498 = vextract.high.u32 %v3496
        %v3499 = vmul.u32 %v3492, %v3483
        %v3500 = vadd.s32 %v3495, %v3497
        %vm3501 = vc.u32 %v3495, %v3497
        %v3502 = vadd.s32 %v3498, 1
        %v3503 = vsel %vm3501, %v3502, %v3498
        %v3504 = vadd.s32 %v3499, %v3503
        %v3505 = vadd.s32 %v3504, 536870912
        %v3506 = vshrl.u32 %v3505, 30
        %v3507 = vshll.u32 %v3506, 30
        %v3508 = vsub.s32 %v3504, %v3507
        %vm3509 = vcmp.lt.s32.totalorder %v3508, 0
        %v3510 = vsub.s32 0, %v3508
        %v3511 = vsel %vm3509, %v3510, %v3508
        %v3512 = vclz %v3511
        %v3513 = vsub.s32 %v3512, 2
        %vm3514 = vcmp.gt.s32.totalorder 0, %v3513
        %v3515 = vsel %vm3514, 0, %v3513
        %v3516 = vsub.s32 32, %v3515
        %v3517 = vshll.u32 %v3508, %v3515
        %v3518 = vshrl.u32 %v3500, %v3516
        %v3519 = vor.u32 %v3517, %v3518
        %v3520 = vsub.s32 4294967266, %v3515
        %v3521 = vadd.s32 %v3520, 127
        %v3522 = vshll.u32 %v3521, 23
        %v3523 = vor.u32 4788187, %v3522
        %v3524 = vand.u32 2147483647, %v3523
        %v3526 = vcvt.s32.f32 %v3519
        %v3527 = vmul.f32 %v3526, %v3524
        %v3528 = vxor.u32 %v3527, 2147483648
        %v3529 = vsel %vm3446, %v3528, %v3527
        %v3530 = vsub.s32 4, %v3506
        %v3531 = vsel %vm3446, %v3530, %v3506
        %v3532 = vsel %vm3445, %v3230, %v3529
        %v3533 = vsel %vm3445, 0, %v3531
        %v3534 = vcosq.f32.pop %v3532
        %v3535 = vsinq.f32.pop %v3532
        %vm3536 = vweird.f32 %v3230
        %v3537 = vadd.s32 %v3533, 3
        %v3538 = vand.u32 %v3537, 3
        %vm3539 = vcmp.lt.s32.totalorder %v3538, 2
        %vm3540 = vcmp.eq.s32.totalorder %v3538, 0
        %v3541 = vxor.u32 %v3535, 2147483648
        %v3542 = vsel %vm3540, %v3534, %v3541
        %vm3543 = vcmp.eq.s32.totalorder %v3538, 2
        %v3544 = vxor.u32 %v3534, 2147483648
        %v3545 = vsel %vm3543, %v3544, %v3535
        %v3546 = vsel %vm3539, %v3542, %v3545
        %v3547 = vsel %vm3536, nan, %v3546
        %v3548 = vand.u32 2147483647, %v3231
        %vm3549 = vcmp.le.f32.partialorder %v3548, 0.7853982
        %vm3550 = vcmp.lt.s32.totalorder %v3231, 0
        %v3551 = vand.u32 %v3231, 2139095040
        %v3552 = vshrl.u32 %v3551, 23
        %v3553 = vsub.s32 %v3552, 127
        %v3554 = vand.u32 2147483647, %v3231
        %v3555 = vand.u32 %v3554, 8388607
        %v3556 = vor.u32 %v3555, 8388608
        %v3557 = vsub.s32 0, %v3556
        %v3558 = vadd.s32 %v3553, 1
        %vm3559 = vcmp.gt.s32.totalorder %v3558, 0
        %v3560 = vsel %vm3559, %v3558, 0
        %v3561 = vshrl.u32 %v3560, 5
        %v3562 = vand.u32 %v3560, 31
        %v3563 = vsub.s32 32, %v3562
        %v3564 = vshrl.u32 683565275, %v3563
        %v3565 = vshll.u32 683565275, %v3562
        %v3566 = vshrl.u32 2475754826, %v3563
        %v3567 = vor.u32 %v3565, %v3566
        %v3568 = vshll.u32 2475754826, %v3562
        %v3569 = vshrl.u32 2131351028, %v3563
        %v3570 = vor.u32 %v3568, %v3569
        %v3571 = vshll.u32 2131351028, %v3562
        %v3572 = vshrl.u32 2102212464, %v3563
        %v3573 = vor.u32 %v3571, %v3572
        %v3574 = vshll.u32 2102212464, %v3562
        %v3575 = vshrl.u32 920167782, %v3563
        %v3576 = vor.u32 %v3574, %v3575
        %v3577 = vshll.u32 920167782, %v3562
        %v3578 = vshrl.u32 1326507024, %v3563
        %v3579 = vor.u32 %v3577, %v3578
        %vm3580 = vcmp.lt.s32.totalorder %v3561, 1
        %vm3581 = vcmp.lt.s32.totalorder %v3561, 2
        %vm3582 = vcmp.lt.s32.totalorder %v3561, 3
        %vm3583 = vcmp.lt.s32.totalorder %v3561, 4
        %v3584 = vsel %vm3580, %v3564, %v3567
        %v3585 = vsel %vm3583, %v3573, 2102212464
        %v3586 = vsel %vm3582, %v3570, %v3585
        %v3587 = vsel %vm3581, %v3584, %v3586
        %v3588 = vsel %vm3580, %v3567, %v3570
        %v3589 = vsel %vm3583, %v3576, 920167782
        %v3590 = vsel %vm3582, %v3573, %v3589
        %v3591 = vsel %vm3581, %v3588, %v3590
        %v3592 = vsel %vm3580, %v3570, %v3573
        %v3593 = vsel %vm3583, %v3579, 1326507024
        %v3594 = vsel %vm3582, %v3576, %v3593
        %v3595 = vsel %vm3581, %v3592, %v3594
        %v3596 = vshll.u32 %v3556, 8
        %v3597 = vmul.u32.u64.compose %v3596, %v3595
        %v3598 = vextract.low.u32 %v3597
        %v3599 = vextract.high.u32 %v3597
        %v3600 = vmul.u32.u64.compose %v3596, %v3591
        %v3601 = vextract.low.u32 %v3600
        %v3602 = vextract.high.u32 %v3600
        %v3603 = vmul.u32 %v3596, %v3587
        %v3604 = vadd.s32 %v3599, %v3601
        %vm3605 = vc.u32 %v3599, %v3601
        %v3606 = vadd.s32 %v3602, 1
        %v3607 = vsel %vm3605, %v3606, %v3602
        %v3608 = vadd.s32 %v3603, %v3607
        %v3609 = vadd.s32 %v3608, 536870912
        %v3610 = vshrl.u32 %v3609, 30
        %v3611 = vshll.u32 %v3610, 30
        %v3612 = vsub.s32 %v3608, %v3611
        %vm3613 = vcmp.lt.s32.totalorder %v3612, 0
        %v3614 = vsub.s32 0, %v3612
        %v3615 = vsel %vm3613, %v3614, %v3612
        %v3616 = vclz %v3615
        %v3617 = vsub.s32 %v3616, 2
        %vm3618 = vcmp.gt.s32.totalorder 0, %v3617
        %v3619 = vsel %vm3618, 0, %v3617
        %v3620 = vsub.s32 32, %v3619
        %v3621 = vshll.u32 %v3612, %v3619
        %v3622 = vshrl.u32 %v3604, %v3620
        %v3623 = vor.u32 %v3621, %v3622
        %v3624 = vsub.s32 4294967266, %v3619
        %v3625 = vadd.s32 %v3624, 127
        %v3626 = vshll.u32 %v3625, 23
        %v3627 = vor.u32 4788187, %v3626
        %v3628 = vand.u32 2147483647, %v3627
        %v3630 = vcvt.s32.f32 %v3623
        %v3631 = vmul.f32 %v3630, %v3628
        %v3632 = vxor.u32 %v3631, 2147483648
        %v3633 = vsel %vm3550, %v3632, %v3631
        %v3634 = vsub.s32 4, %v3610
        %v3635 = vsel %vm3550, %v3634, %v3610
        %v3636 = vsel %vm3549, %v3231, %v3633
        %v3637 = vsel %vm3549, 0, %v3635
        %v3638 = vcosq.f32.pop %v3636
        %v3639 = vsinq.f32.pop %v3636
        %vm3640 = vweird.f32 %v3231
        %v3641 = vadd.s32 %v3637, 3
        %v3642 = vand.u32 %v3641, 3
        %vm3643 = vcmp.lt.s32.totalorder %v3642, 2
        %vm3644 = vcmp.eq.s32.totalorder %v3642, 0
        %v3645 = vxor.u32 %v3639, 2147483648
        %v3646 = vsel %vm3644, %v3638, %v3645
        %vm3647 = vcmp.eq.s32.totalorder %v3642, 2
        %v3648 = vxor.u32 %v3638, 2147483648
        %v3649 = vsel %vm3647, %v3648, %v3639
        %v3650 = vsel %vm3643, %v3646, %v3649
        %v3651 = vsel %vm3640, nan, %v3650
        %v3652 = vand.u32 2147483647, %v3232
        %vm3653 = vcmp.le.f32.partialorder %v3652, 0.7853982
        %vm3654 = vcmp.lt.s32.totalorder %v3232, 0
        %v3655 = vand.u32 %v3232, 2139095040
        %v3656 = vshrl.u32 %v3655, 23
        %v3657 = vsub.s32 %v3656, 127
        %v3658 = vand.u32 2147483647, %v3232
        %v3659 = vand.u32 %v3658, 8388607
        %v3660 = vor.u32 %v3659, 8388608
        %v3661 = vsub.s32 0, %v3660
        %v3662 = vadd.s32 %v3657, 1
        %vm3663 = vcmp.gt.s32.totalorder %v3662, 0
        %v3664 = vsel %vm3663, %v3662, 0
        %v3665 = vshrl.u32 %v3664, 5
        %v3666 = vand.u32 %v3664, 31
        %v3667 = vsub.s32 32, %v3666
        %v3668 = vshrl.u32 683565275, %v3667
        %v3669 = vshll.u32 683565275, %v3666
        %v3670 = vshrl.u32 2475754826, %v3667
        %v3671 = vor.u32 %v3669, %v3670
        %v3672 = vshll.u32 2475754826, %v3666
        %v3673 = vshrl.u32 2131351028, %v3667
        %v3674 = vor.u32 %v3672, %v3673
        %v3675 = vshll.u32 2131351028, %v3666
        %v3676 = vshrl.u32 2102212464, %v3667
        %v3677 = vor.u32 %v3675, %v3676
        %v3678 = vshll.u32 2102212464, %v3666
        %v3679 = vshrl.u32 920167782, %v3667
        %v3680 = vor.u32 %v3678, %v3679
        %v3681 = vshll.u32 920167782, %v3666
        %v3682 = vshrl.u32 1326507024, %v3667
        %v3683 = vor.u32 %v3681, %v3682
        %vm3684 = vcmp.lt.s32.totalorder %v3665, 1
        %vm3685 = vcmp.lt.s32.totalorder %v3665, 2
        %vm3686 = vcmp.lt.s32.totalorder %v3665, 3
        %vm3687 = vcmp.lt.s32.totalorder %v3665, 4
        %v3688 = vsel %vm3684, %v3668, %v3671
        %v3689 = vsel %vm3687, %v3677, 2102212464
        %v3690 = vsel %vm3686, %v3674, %v3689
        %v3691 = vsel %vm3685, %v3688, %v3690
        %v3692 = vsel %vm3684, %v3671, %v3674
        %v3693 = vsel %vm3687, %v3680, 920167782
        %v3694 = vsel %vm3686, %v3677, %v3693
        %v3695 = vsel %vm3685, %v3692, %v3694
        %v3696 = vsel %vm3684, %v3674, %v3677
        %v3697 = vsel %vm3687, %v3683, 1326507024
        %v3698 = vsel %vm3686, %v3680, %v3697
        %v3699 = vsel %vm3685, %v3696, %v3698
        %v3700 = vshll.u32 %v3660, 8
        %v3701 = vmul.u32.u64.compose %v3700, %v3699
        %v3702 = vextract.low.u32 %v3701
        %v3703 = vextract.high.u32 %v3701
        %v3704 = vmul.u32.u64.compose %v3700, %v3695
        %v3705 = vextract.low.u32 %v3704
        %v3706 = vextract.high.u32 %v3704
        %v3707 = vmul.u32 %v3700, %v3691
        %v3708 = vadd.s32 %v3703, %v3705
        %vm3709 = vc.u32 %v3703, %v3705
        %v3710 = vadd.s32 %v3706, 1
        %v3711 = vsel %vm3709, %v3710, %v3706
        %v3712 = vadd.s32 %v3707, %v3711
        %v3713 = vadd.s32 %v3712, 536870912
        %v3714 = vshrl.u32 %v3713, 30
        %v3715 = vshll.u32 %v3714, 30
        %v3716 = vsub.s32 %v3712, %v3715
        %vm3717 = vcmp.lt.s32.totalorder %v3716, 0
        %v3718 = vsub.s32 0, %v3716
        %v3719 = vsel %vm3717, %v3718, %v3716
        %v3720 = vclz %v3719
        %v3721 = vsub.s32 %v3720, 2
        %vm3722 = vcmp.gt.s32.totalorder 0, %v3721
        %v3723 = vsel %vm3722, 0, %v3721
        %v3724 = vsub.s32 32, %v3723
        %v3725 = vshll.u32 %v3716, %v3723
        %v3726 = vshrl.u32 %v3708, %v3724
        %v3727 = vor.u32 %v3725, %v3726
        %v3728 = vsub.s32 4294967266, %v3723
        %v3729 = vadd.s32 %v3728, 127
        %v3730 = vshll.u32 %v3729, 23
        %v3731 = vor.u32 4788187, %v3730
        %v3732 = vand.u32 2147483647, %v3731
        %v3734 = vcvt.s32.f32 %v3727
        %v3735 = vmul.f32 %v3734, %v3732
        %v3736 = vxor.u32 %v3735, 2147483648
        %v3737 = vsel %vm3654, %v3736, %v3735
        %v3738 = vsub.s32 4, %v3714
        %v3739 = vsel %vm3654, %v3738, %v3714
        %v3740 = vsel %vm3653, %v3232, %v3737
        %v3741 = vsel %vm3653, 0, %v3739
        %v3742 = vcosq.f32.pop %v3740
        %v3743 = vsinq.f32.pop %v3740
        %vm3744 = vweird.f32 %v3232
        %v3745 = vadd.s32 %v3741, 3
        %v3746 = vand.u32 %v3745, 3
        %vm3747 = vcmp.lt.s32.totalorder %v3746, 2
        %vm3748 = vcmp.eq.s32.totalorder %v3746, 0
        %v3749 = vxor.u32 %v3743, 2147483648
        %v3750 = vsel %vm3748, %v3742, %v3749
        %vm3751 = vcmp.eq.s32.totalorder %v3746, 2
        %v3752 = vxor.u32 %v3742, 2147483648
        %v3753 = vsel %vm3751, %v3752, %v3743
        %v3754 = vsel %vm3747, %v3750, %v3753
        %v3755 = vsel %vm3744, nan, %v3754
        %v3756 = vand.u32 2147483647, %v3233
        %vm3757 = vcmp.le.f32.partialorder %v3756, 0.7853982
        %vm3758 = vcmp.lt.s32.totalorder %v3233, 0
        %v3759 = vand.u32 %v3233, 2139095040
        %v3760 = vshrl.u32 %v3759, 23
        %v3761 = vsub.s32 %v3760, 127
        %v3762 = vand.u32 2147483647, %v3233
        %v3763 = vand.u32 %v3762, 8388607
        %v3764 = vor.u32 %v3763, 8388608
        %v3765 = vsub.s32 0, %v3764
        %v3766 = vadd.s32 %v3761, 1
        %vm3767 = vcmp.gt.s32.totalorder %v3766, 0
        %v3768 = vsel %vm3767, %v3766, 0
        %v3769 = vshrl.u32 %v3768, 5
        %v3770 = vand.u32 %v3768, 31
        %v3771 = vsub.s32 32, %v3770
        %v3772 = vshrl.u32 683565275, %v3771
        %v3773 = vshll.u32 683565275, %v3770
        %v3774 = vshrl.u32 2475754826, %v3771
        %v3775 = vor.u32 %v3773, %v3774
        %v3776 = vshll.u32 2475754826, %v3770
        %v3777 = vshrl.u32 2131351028, %v3771
        %v3778 = vor.u32 %v3776, %v3777
        %v3779 = vshll.u32 2131351028, %v3770
        %v3780 = vshrl.u32 2102212464, %v3771
        %v3781 = vor.u32 %v3779, %v3780
        %v3782 = vshll.u32 2102212464, %v3770
        %v3783 = vshrl.u32 920167782, %v3771
        %v3784 = vor.u32 %v3782, %v3783
        %v3785 = vshll.u32 920167782, %v3770
        %v3786 = vshrl.u32 1326507024, %v3771
        %v3787 = vor.u32 %v3785, %v3786
        %vm3788 = vcmp.lt.s32.totalorder %v3769, 1
        %vm3789 = vcmp.lt.s32.totalorder %v3769, 2
        %vm3790 = vcmp.lt.s32.totalorder %v3769, 3
        %vm3791 = vcmp.lt.s32.totalorder %v3769, 4
        %v3792 = vsel %vm3788, %v3772, %v3775
        %v3793 = vsel %vm3791, %v3781, 2102212464
        %v3794 = vsel %vm3790, %v3778, %v3793
        %v3795 = vsel %vm3789, %v3792, %v3794
        %v3796 = vsel %vm3788, %v3775, %v3778
        %v3797 = vsel %vm3791, %v3784, 920167782
        %v3798 = vsel %vm3790, %v3781, %v3797
        %v3799 = vsel %vm3789, %v3796, %v3798
        %v3800 = vsel %vm3788, %v3778, %v3781
        %v3801 = vsel %vm3791, %v3787, 1326507024
        %v3802 = vsel %vm3790, %v3784, %v3801
        %v3803 = vsel %vm3789, %v3800, %v3802
        %v3804 = vshll.u32 %v3764, 8
        %v3805 = vmul.u32.u64.compose %v3804, %v3803
        %v3806 = vextract.low.u32 %v3805
        %v3807 = vextract.high.u32 %v3805
        %v3808 = vmul.u32.u64.compose %v3804, %v3799
        %v3809 = vextract.low.u32 %v3808
        %v3810 = vextract.high.u32 %v3808
        %v3811 = vmul.u32 %v3804, %v3795
        %v3812 = vadd.s32 %v3807, %v3809
        %vm3813 = vc.u32 %v3807, %v3809
        %v3814 = vadd.s32 %v3810, 1
        %v3815 = vsel %vm3813, %v3814, %v3810
        %v3816 = vadd.s32 %v3811, %v3815
        %v3817 = vadd.s32 %v3816, 536870912
        %v3818 = vshrl.u32 %v3817, 30
        %v3819 = vshll.u32 %v3818, 30
        %v3820 = vsub.s32 %v3816, %v3819
        %vm3821 = vcmp.lt.s32.totalorder %v3820, 0
        %v3822 = vsub.s32 0, %v3820
        %v3823 = vsel %vm3821, %v3822, %v3820
        %v3824 = vclz %v3823
        %v3825 = vsub.s32 %v3824, 2
        %vm3826 = vcmp.gt.s32.totalorder 0, %v3825
        %v3827 = vsel %vm3826, 0, %v3825
        %v3828 = vsub.s32 32, %v3827
        %v3829 = vshll.u32 %v3820, %v3827
        %v3830 = vshrl.u32 %v3812, %v3828
        %v3831 = vor.u32 %v3829, %v3830
        %v3832 = vsub.s32 4294967266, %v3827
        %v3833 = vadd.s32 %v3832, 127
        %v3834 = vshll.u32 %v3833, 23
        %v3835 = vor.u32 4788187, %v3834
        %v3836 = vand.u32 2147483647, %v3835
        %v3838 = vcvt.s32.f32 %v3831
        %v3839 = vmul.f32 %v3838, %v3836
        %v3840 = vxor.u32 %v3839, 2147483648
        %v3841 = vsel %vm3758, %v3840, %v3839
        %v3842 = vsub.s32 4, %v3818
        %v3843 = vsel %vm3758, %v3842, %v3818
        %v3844 = vsel %vm3757, %v3233, %v3841
        %v3845 = vsel %vm3757, 0, %v3843
        %v3846 = vcosq.f32.pop %v3844
        %v3847 = vsinq.f32.pop %v3844
        %vm3848 = vweird.f32 %v3233
        %v3849 = vadd.s32 %v3845, 3
        %v3850 = vand.u32 %v3849, 3
        %vm3851 = vcmp.lt.s32.totalorder %v3850, 2
        %vm3852 = vcmp.eq.s32.totalorder %v3850, 0
        %v3853 = vxor.u32 %v3847, 2147483648
        %v3854 = vsel %vm3852, %v3846, %v3853
        %vm3855 = vcmp.eq.s32.totalorder %v3850, 2
        %v3856 = vxor.u32 %v3846, 2147483648
        %v3857 = vsel %vm3855, %v3856, %v3847
        %v3858 = vsel %vm3851, %v3854, %v3857
        %v3859 = vsel %vm3848, nan, %v3858
        %v3860 = vand.u32 2147483647, %v3234
        %vm3861 = vcmp.le.f32.partialorder %v3860, 0.7853982
        %vm3862 = vcmp.lt.s32.totalorder %v3234, 0
        %v3863 = vand.u32 %v3234, 2139095040
        %v3864 = vshrl.u32 %v3863, 23
        %v3865 = vsub.s32 %v3864, 127
        %v3866 = vand.u32 2147483647, %v3234
        %v3867 = vand.u32 %v3866, 8388607
        %v3868 = vor.u32 %v3867, 8388608
        %v3869 = vsub.s32 0, %v3868
        %v3870 = vadd.s32 %v3865, 1
        %vm3871 = vcmp.gt.s32.totalorder %v3870, 0
        %v3872 = vsel %vm3871, %v3870, 0
        %v3873 = vshrl.u32 %v3872, 5
        %v3874 = vand.u32 %v3872, 31
        %v3875 = vsub.s32 32, %v3874
        %v3876 = vshrl.u32 683565275, %v3875
        %v3877 = vshll.u32 683565275, %v3874
        %v3878 = vshrl.u32 2475754826, %v3875
        %v3879 = vor.u32 %v3877, %v3878
        %v3880 = vshll.u32 2475754826, %v3874
        %v3881 = vshrl.u32 2131351028, %v3875
        %v3882 = vor.u32 %v3880, %v3881
        %v3883 = vshll.u32 2131351028, %v3874
        %v3884 = vshrl.u32 2102212464, %v3875
        %v3885 = vor.u32 %v3883, %v3884
        %v3886 = vshll.u32 2102212464, %v3874
        %v3887 = vshrl.u32 920167782, %v3875
        %v3888 = vor.u32 %v3886, %v3887
        %v3889 = vshll.u32 920167782, %v3874
        %v3890 = vshrl.u32 1326507024, %v3875
        %v3891 = vor.u32 %v3889, %v3890
        %vm3892 = vcmp.lt.s32.totalorder %v3873, 1
        %vm3893 = vcmp.lt.s32.totalorder %v3873, 2
        %vm3894 = vcmp.lt.s32.totalorder %v3873, 3
        %vm3895 = vcmp.lt.s32.totalorder %v3873, 4
        %v3896 = vsel %vm3892, %v3876, %v3879
        %v3897 = vsel %vm3895, %v3885, 2102212464
        %v3898 = vsel %vm3894, %v3882, %v3897
        %v3899 = vsel %vm3893, %v3896, %v3898
        %v3900 = vsel %vm3892, %v3879, %v3882
        %v3901 = vsel %vm3895, %v3888, 920167782
        %v3902 = vsel %vm3894, %v3885, %v3901
        %v3903 = vsel %vm3893, %v3900, %v3902
        %v3904 = vsel %vm3892, %v3882, %v3885
        %v3905 = vsel %vm3895, %v3891, 1326507024
        %v3906 = vsel %vm3894, %v3888, %v3905
        %v3907 = vsel %vm3893, %v3904, %v3906
        %v3908 = vshll.u32 %v3868, 8
        %v3909 = vmul.u32.u64.compose %v3908, %v3907
        %v3910 = vextract.low.u32 %v3909
        %v3911 = vextract.high.u32 %v3909
        %v3912 = vmul.u32.u64.compose %v3908, %v3903
        %v3913 = vextract.low.u32 %v3912
        %v3914 = vextract.high.u32 %v3912
        %v3915 = vmul.u32 %v3908, %v3899
        %v3916 = vadd.s32 %v3911, %v3913
        %vm3917 = vc.u32 %v3911, %v3913
        %v3918 = vadd.s32 %v3914, 1
        %v3919 = vsel %vm3917, %v3918, %v3914
        %v3920 = vadd.s32 %v3915, %v3919
        %v3921 = vadd.s32 %v3920, 536870912
        %v3922 = vshrl.u32 %v3921, 30
        %v3923 = vshll.u32 %v3922, 30
        %v3924 = vsub.s32 %v3920, %v3923
        %vm3925 = vcmp.lt.s32.totalorder %v3924, 0
        %v3926 = vsub.s32 0, %v3924
        %v3927 = vsel %vm3925, %v3926, %v3924
        %v3928 = vclz %v3927
        %v3929 = vsub.s32 %v3928, 2
        %vm3930 = vcmp.gt.s32.totalorder 0, %v3929
        %v3931 = vsel %vm3930, 0, %v3929
        %v3932 = vsub.s32 32, %v3931
        %v3933 = vshll.u32 %v3924, %v3931
        %v3934 = vshrl.u32 %v3916, %v3932
        %v3935 = vor.u32 %v3933, %v3934
        %v3936 = vsub.s32 4294967266, %v3931
        %v3937 = vadd.s32 %v3936, 127
        %v3938 = vshll.u32 %v3937, 23
        %v3939 = vor.u32 4788187, %v3938
        %v3940 = vand.u32 2147483647, %v3939
        %v3942 = vcvt.s32.f32 %v3935
        %v3943 = vmul.f32 %v3942, %v3940
        %v3944 = vxor.u32 %v3943, 2147483648
        %v3945 = vsel %vm3862, %v3944, %v3943
        %v3946 = vsub.s32 4, %v3922
        %v3947 = vsel %vm3862, %v3946, %v3922
        %v3948 = vsel %vm3861, %v3234, %v3945
        %v3949 = vsel %vm3861, 0, %v3947
        %v3950 = vcosq.f32.pop %v3948
        %v3951 = vsinq.f32.pop %v3948
        %vm3952 = vweird.f32 %v3234
        %v3953 = vadd.s32 %v3949, 3
        %v3954 = vand.u32 %v3953, 3
        %vm3955 = vcmp.lt.s32.totalorder %v3954, 2
        %vm3956 = vcmp.eq.s32.totalorder %v3954, 0
        %v3957 = vxor.u32 %v3951, 2147483648
        %v3958 = vsel %vm3956, %v3950, %v3957
        %vm3959 = vcmp.eq.s32.totalorder %v3954, 2
        %v3960 = vxor.u32 %v3950, 2147483648
        %v3961 = vsel %vm3959, %v3960, %v3951
        %v3962 = vsel %vm3955, %v3958, %v3961
        %v3963 = vsel %vm3952, nan, %v3962
        %v3964 = vand.u32 2147483647, %v3235
        %vm3965 = vcmp.le.f32.partialorder %v3964, 0.7853982
        %vm3966 = vcmp.lt.s32.totalorder %v3235, 0
        %v3967 = vand.u32 %v3235, 2139095040
        %v3968 = vshrl.u32 %v3967, 23
        %v3969 = vsub.s32 %v3968, 127
        %v3970 = vand.u32 2147483647, %v3235
        %v3971 = vand.u32 %v3970, 8388607
        %v3972 = vor.u32 %v3971, 8388608
        %v3973 = vsub.s32 0, %v3972
        %v3974 = vadd.s32 %v3969, 1
        %vm3975 = vcmp.gt.s32.totalorder %v3974, 0
        %v3976 = vsel %vm3975, %v3974, 0
        %v3977 = vshrl.u32 %v3976, 5
        %v3978 = vand.u32 %v3976, 31
        %v3979 = vsub.s32 32, %v3978
        %v3980 = vshrl.u32 683565275, %v3979
        %v3981 = vshll.u32 683565275, %v3978
        %v3982 = vshrl.u32 2475754826, %v3979
        %v3983 = vor.u32 %v3981, %v3982
        %v3984 = vshll.u32 2475754826, %v3978
        %v3985 = vshrl.u32 2131351028, %v3979
        %v3986 = vor.u32 %v3984, %v3985
        %v3987 = vshll.u32 2131351028, %v3978
        %v3988 = vshrl.u32 2102212464, %v3979
        %v3989 = vor.u32 %v3987, %v3988
        %v3990 = vshll.u32 2102212464, %v3978
        %v3991 = vshrl.u32 920167782, %v3979
        %v3992 = vor.u32 %v3990, %v3991
        %v3993 = vshll.u32 920167782, %v3978
        %v3994 = vshrl.u32 1326507024, %v3979
        %v3995 = vor.u32 %v3993, %v3994
        %vm3996 = vcmp.lt.s32.totalorder %v3977, 1
        %vm3997 = vcmp.lt.s32.totalorder %v3977, 2
        %vm3998 = vcmp.lt.s32.totalorder %v3977, 3
        %vm3999 = vcmp.lt.s32.totalorder %v3977, 4
        %v4000 = vsel %vm3996, %v3980, %v3983
        %v4001 = vsel %vm3999, %v3989, 2102212464
        %v4002 = vsel %vm3998, %v3986, %v4001
        %v4003 = vsel %vm3997, %v4000, %v4002
        %v4004 = vsel %vm3996, %v3983, %v3986
        %v4005 = vsel %vm3999, %v3992, 920167782
        %v4006 = vsel %vm3998, %v3989, %v4005
        %v4007 = vsel %vm3997, %v4004, %v4006
        %v4008 = vsel %vm3996, %v3986, %v3989
        %v4009 = vsel %vm3999, %v3995, 1326507024
        %v4010 = vsel %vm3998, %v3992, %v4009
        %v4011 = vsel %vm3997, %v4008, %v4010
        %v4012 = vshll.u32 %v3972, 8
        %v4013 = vmul.u32.u64.compose %v4012, %v4011
        %v4014 = vextract.low.u32 %v4013
        %v4015 = vextract.high.u32 %v4013
        %v4016 = vmul.u32.u64.compose %v4012, %v4007
        %v4017 = vextract.low.u32 %v4016
        %v4018 = vextract.high.u32 %v4016
        %v4019 = vmul.u32 %v4012, %v4003
        %v4020 = vadd.s32 %v4015, %v4017
        %vm4021 = vc.u32 %v4015, %v4017
        %v4022 = vadd.s32 %v4018, 1
        %v4023 = vsel %vm4021, %v4022, %v4018
        %v4024 = vadd.s32 %v4019, %v4023
        %v4025 = vadd.s32 %v4024, 536870912
        %v4026 = vshrl.u32 %v4025, 30
        %v4027 = vshll.u32 %v4026, 30
        %v4028 = vsub.s32 %v4024, %v4027
        %vm4029 = vcmp.lt.s32.totalorder %v4028, 0
        %v4030 = vsub.s32 0, %v4028
        %v4031 = vsel %vm4029, %v4030, %v4028
        %v4032 = vclz %v4031
        %v4033 = vsub.s32 %v4032, 2
        %vm4034 = vcmp.gt.s32.totalorder 0, %v4033
        %v4035 = vsel %vm4034, 0, %v4033
        %v4036 = vsub.s32 32, %v4035
        %v4037 = vshll.u32 %v4028, %v4035
        %v4038 = vshrl.u32 %v4020, %v4036
        %v4039 = vor.u32 %v4037, %v4038
        %v4040 = vsub.s32 4294967266, %v4035
        %v4041 = vadd.s32 %v4040, 127
        %v4042 = vshll.u32 %v4041, 23
        %v4043 = vor.u32 4788187, %v4042
        %v4044 = vand.u32 2147483647, %v4043
        %v4046 = vcvt.s32.f32 %v4039
        %v4047 = vmul.f32 %v4046, %v4044
        %v4048 = vxor.u32 %v4047, 2147483648
        %v4049 = vsel %vm3966, %v4048, %v4047
        %v4050 = vsub.s32 4, %v4026
        %v4051 = vsel %vm3966, %v4050, %v4026
        %v4052 = vsel %vm3965, %v3235, %v4049
        %v4053 = vsel %vm3965, 0, %v4051
        %v4054 = vcosq.f32.pop %v4052
        %v4055 = vsinq.f32.pop %v4052
        %vm4056 = vweird.f32 %v3235
        %v4057 = vadd.s32 %v4053, 3
        %v4058 = vand.u32 %v4057, 3
        %vm4059 = vcmp.lt.s32.totalorder %v4058, 2
        %vm4060 = vcmp.eq.s32.totalorder %v4058, 0
        %v4061 = vxor.u32 %v4055, 2147483648
        %v4062 = vsel %vm4060, %v4054, %v4061
        %vm4063 = vcmp.eq.s32.totalorder %v4058, 2
        %v4064 = vxor.u32 %v4054, 2147483648
        %v4065 = vsel %vm4063, %v4064, %v4055
        %v4066 = vsel %vm4059, %v4062, %v4065
        %v4067 = vsel %vm4056, nan, %v4066
        %4068 = vst [vmem:[%s203] sm:$0xff] %v3339
        %4069 = vst [vmem:[%s203 + $0x8] sm:$0xff] %v3443
        %4070 = vst [vmem:[%s203 + $0x10] sm:$0xff] %v3547
        %4071 = vst [vmem:[%s203 + $0x18] sm:$0xff] %v3651
        %4072 = vst [vmem:[%s203 + $0x20] sm:$0xff] %v3755
        %4073 = vst [vmem:[%s203 + $0x28] sm:$0xff] %v3859
        %4074 = vst [vmem:[%s203 + $0x30] sm:$0xff] %v3963
        %4075 = vst [vmem:[%s203 + $0x38] sm:$0xff] %v4067
        %s4076 = sand.u32 %s97, 1
        %s4077 = scalar_lea.sflag [#allocation4], %s4076
        %s4078 = sand.u32 %s97, 1
        %s4079 = smul.addr %s4078, 64
        %s4080 = scalar_lea.vmem [#allocation7], %s4079
        // Predicated region
        $region41: #{tpu_custom_call.1} parent=31 // pred_check
          %p4081 = pneg %p107
        $region42: #{tpu_custom_call.1} parent=31 // pred_check_branch
          %4083 = sbr.rel (%p4081) target = $region44
        $region43: #{tpu_custom_call.1} parent=31 // pred_region
          %s4084 = smul.u32 8, %s21
          %s4086 = ssub.s32 1024, 1024
          %4087 = vsyncadd %s4077, %s4086
          %s4088 = smul.addr %s4084, 128
          %s4089 = scalar_lea.hbm %s3, %s4088
          %s4090 = sshll.u32 %s4080, 4
          %s4091 = int_to_ptr.vmem [resolvable:$true] %s4090
          %4096 = dma.vmem_to_hbm [thread:$0]  %s4091, 1024, %s4089, %s4077, 128, 128, 8
        $region44: #{tpu_custom_call.1} parent=31 // pred_fallthru
          _
      $region32: #{tpu_custom_call.1} parent=5 // pred_fallthru
        _
      %p4097 = scmp.le.s32.totalorder 2, %s16
      // Predicated region
      $region45: #{tpu_custom_call.1} parent=5 // pred_check
        %p4098 = pneg %p4097
      $region46: #{tpu_custom_call.1} parent=5 // pred_check_branch
        %4100 = sbr.rel (%p4098) target = $region48
      $region47: #{tpu_custom_call.1} parent=5 // pred_region
        %s4101 = ssub.s32 %s16, 2
        // Predicated region
        $region49: #{tpu_custom_call.1} parent=47 // pred_check
          %p4102 = pneg %p113
        $region50: #{tpu_custom_call.1} parent=47 // pred_check_branch
          %4104 = sbr.rel (%p4102) target = $region52
        $region51: #{tpu_custom_call.1} parent=47 // pred_region
          %s4105 = sand.u32 %s98, 1
          %s4106 = scalar_lea.sflag [#allocation4], %s4105
          %s4107 = sand.u32 %s98, 1
          %s4108 = smul.addr %s4107, 64
          %s4109 = scalar_lea.vmem [#allocation7], %s4108
          %4110 = dma.done %s4106, 1024
        $region52: #{tpu_custom_call.1} parent=47 // pred_fallthru
          _
      $region48: #{tpu_custom_call.1} parent=5 // pred_fallthru
        _
    $region6: #{tpu_custom_call.1} parent=1 // loop_footer
      %s20 = sadd.s32 1, %s16
    $region7: #{tpu_custom_call.1} parent=1 // loop_footer_branch
      %15 = sbr.rel target = $region3
    $region8: #{tpu_custom_call.1} parent=1 // loop_exit
      _
    %4111 = vsyncpa [#allocation3], 1
    %s4112 = scalar_lea.sflag [#allocation3], 1
    %4113 = vsyncpa %s4112, 1
    %4114 = vsyncpa [#allocation6], 1
    %4115 = vsyncpa [#allocation4], 1
    %s4116 = scalar_lea.sflag [#allocation4], 1
    %4117 = vsyncpa %s4116, 1

</llo_original>
